<compile_context>
chip_gen: v7x
topology: tpu7x:2x2x1
jax: 0.10.0
libtpu: 0.0.40
codegen_flags: <defaults>
</compile_context>

<pallas_src>
import functools

import jax
import jax.numpy as jnp
from jax.experimental import pallas as pl
from jax.experimental.pallas import tpu as pltpu


_MAXK = 256        # target K per MXU dot (matches the 256-wide MXU on v6e/v7x)
_FC1_TK = 16384    # upper bound on the fc1 K tile (~8 MB bf16 per block)


def _gsize(n_taps, piece):
    """Number of taps fused into one MXU dot (K ~= _MAXK per dot)."""
    return min(n_taps, max(1, _MAXK // piece))


def _fc1_tile(F):
    """(TK, F_pad) for the K-tiled fc1 reduction: TK is a multiple of 128, close
    to _FC1_TK, chosen so the zero padding of the weight stream is minimal."""
    kp = pl.cdiv(F, 128)
    nk = max(1, pl.cdiv(kp * 128, _FC1_TK))
    tk = pl.cdiv(kp, nk) * 128
    return tk, nk * tk


# -----------------------------------------------------------------------------
# Kernel 1: conv2d -> relu -> conv1d_1 -> relu -> maxpool(3)
#           -> conv1d_2 -> relu -> conv1d_3 -> relu -> maxpool(3)
# One batch element per grid step ("parallel" -> megacore sharding).
# -----------------------------------------------------------------------------
def _stage(im_s, window, t0, tn, piece, n_rows):
    """Stage taps [t0, t0+tn) side-by-side into the shared bf16 im2col scratch.

    When the tap width divides 128, adjacent taps are concatenated so every
    staging store starts on a 128-lane boundary (one aligned vst instead of
    several masked, lane-rotated ones)."""
    per = 128 // piece if (piece < 128 and 128 % piece == 0) else 1
    j = 0
    while j < tn:
        jn = min(per, tn - j)
        if jn == 1:
            v = window(t0 + j)
        else:
            v = jnp.concatenate([window(t0 + j + q) for q in range(jn)], axis=-1)
        im_s[pl.ds(0, n_rows), pl.ds(j * piece, jn * piece)] = v
        j += jn


def _fused_conv(window, im_s, w_ref, b_ref, write_out, n_taps, piece, n_rows,
                acc=None):
    """relu(im2col @ W + b) with tap-fused MXU dots.

    window(k)  -> (n_rows, piece) bf16 tap window, read straight from VMEM.
    write_out(v) consumes the f32 result (cast + store to the destination ref).
    acc: f32 ref of shape (n_rows, n_out) used for in-place accumulation of the
    group partials (bounds live ranges; no SSA full-slab temporaries)."""
    gsz = _gsize(n_taps, piece)
    rows = pl.ds(0, n_rows)

    if n_taps <= gsz:                         # single fused dot
        _stage(im_s, window, 0, n_taps, piece, n_rows)
        z = jnp.dot(im_s[rows, pl.ds(0, n_taps * piece)], w_ref[...],
                    preferred_element_type=jnp.float32)
        write_out(jnp.maximum(z + b_ref[...], 0.0))
        return

    t0 = 0
    while t0 < n_taps:                        # ref-accumulated group dots
        tn = min(gsz, n_taps - t0)
        _stage(im_s, window, t0, tn, piece, n_rows)
        part = jnp.dot(im_s[rows, pl.ds(0, tn * piece)],
                       w_ref[pl.ds(t0 * piece, tn * piece), :],
                       preferred_element_type=jnp.float32)
        if t0 == 0:
            acc[...] = part
        else:
            acc[...] += part
        t0 += tn
    write_out(jnp.maximum(acc[...] + b_ref[...], 0.0))


def _conv_stack_kernel(x_ref, w0_ref, b0_ref, w1_ref, b1_ref, w2_ref, b2_ref,
                       w3_ref, b3_ref, out_ref,
                       x_s, im_s, acc_s, h0_s, h1_s, p1_s, h2_s, h3_s,
                       *, C5, W0, W1, P1, W2, W3, P2):
    bf16 = jnp.bfloat16

    # One-time bf16 cast of the input window; every conv2d tap is staged from
    # this scratch (removes 12 redundant full-window f32 loads + casts).
    x_s[...] = x_ref[0].astype(bf16)

    # conv2d (5, 12): 12 sequence taps over C*5 features (K = 12*C5 fused).
    def wr_h0(v):
        h0_s[...] = v.astype(bf16)
    acc0 = acc_s if 12 > _gsize(12, C5) else None   # group acc only if needed
    _fused_conv(lambda k: x_s[pl.ds(k, W0), :], im_s, w0_ref, b0_ref, wr_h0,
                12, C5, W0, acc=acc0)

    # conv1d_1 (1, 12), 64 -> 64: 3 groups of K=256, accumulated into h1_s (f32).
    def wr_h1(v):
        h1_s[...] = v
    _fused_conv(lambda k: h0_s[pl.ds(k, W1), :], im_s, w1_ref, b1_ref, wr_h1,
                12, 64, W1, acc=h1_s)

    # MaxPool1d(3): stride-3 sublane reads (kept on the 32-bit slab), bf16 write.
    p1_s[...] = jnp.maximum(
        jnp.maximum(h1_s[pl.ds(0, P1, stride=3), :],
                    h1_s[pl.ds(1, P1, stride=3), :]),
        h1_s[pl.ds(2, P1, stride=3), :]).astype(bf16)

    # conv1d_2 (1, 3), 64 -> 32 (single fused K = 192 dot).
    def wr_h2(v):
        h2_s[...] = v.astype(bf16)
    _fused_conv(lambda k: p1_s[pl.ds(k, W2), :], im_s, w2_ref, b2_ref, wr_h2,
                3, 64, W2)

    # conv1d_3 (1, 3), 32 -> 32 (single fused K = 96 dot).
    def wr_h3(v):
        h3_s[...] = v
    _fused_conv(lambda k: h2_s[pl.ds(k, W3), :], im_s, w3_ref, b3_ref, wr_h3,
                3, 32, W3)

    # MaxPool1d(3) + pooled block write (bf16, position-major).
    out_ref[0] = jnp.maximum(
        jnp.maximum(h3_s[pl.ds(0, P2, stride=3), :],
                    h3_s[pl.ds(1, P2, stride=3), :]),
        h3_s[pl.ds(2, P2, stride=3), :]).astype(out_ref.dtype)


# -----------------------------------------------------------------------------
# Kernel 2: fc1 (K-tiled over the flattened features) -> relu -> fc2 -> relu
#           -> fc3 -> sigmoid.  Accumulator scratch + pl.when init/finalize.
# -----------------------------------------------------------------------------
def _mlp_kernel(x_ref, wf1_ref, bf1_ref, wf2_ref, bf2_ref, wf3_ref, bf3_ref,
                o_ref, acc_ref):
    k = pl.program_id(0)

    @pl.when(k == 0)
    def _():
        acc_ref[...] = jnp.zeros_like(acc_ref)

    # fc1: bf16 weight stream (dominant HBM read), f32 accumulation.
    acc_ref[...] += jnp.dot(x_ref[...], wf1_ref[...],
                            preferred_element_type=jnp.float32)

    @pl.when(k == pl.num_programs(0) - 1)
    def _():
        h = jnp.maximum(acc_ref[...] + bf1_ref[...], 0.0)
        h = jnp.dot(h.astype(jnp.bfloat16), wf2_ref[...],
                    preferred_element_type=jnp.float32) + bf2_ref[...]
        h = jnp.maximum(h, 0.0)
        z = jnp.dot(h.astype(jnp.bfloat16), wf3_ref[...],
                    preferred_element_type=jnp.float32) + bf3_ref[...]
        o_ref[...] = 1.0 / (1.0 + jnp.exp(-z))


# -----------------------------------------------------------------------------
# One-time parameter preprocessing (NOT on the per-call path).
# -----------------------------------------------------------------------------
def prepare_params(params, number_of_loci, seq_len):
    """Re-layout PyTorch-layout parameters into kernel operands.  Call ONCE per
    model: folds the channel-major flatten into fc1's columns, transposes /
    K-pads / bf16-casts the fc weights, and packs the conv kernels tap-major."""
    (w2d, b0, w1c, b1, w2c, b2, w3c, b3,
     wf1, bf1, wf2, bf2, wf3, bf3) = params
    bf16 = jnp.bfloat16
    C5 = number_of_loci * 5
    L = seq_len
    W0 = L - 11
    W1 = W0 - 11
    P1 = W1 // 3
    W2 = P1 - 2
    W3 = W2 - 2
    P2 = W3 // 3
    F = 32 * P2

    w0cat = jnp.transpose(w2d, (3, 1, 2, 0)).reshape(12 * C5, 64).astype(bf16)
    w1cat = jnp.transpose(w1c[:, :, 0, :], (2, 1, 0)).reshape(12 * 64, 64).astype(bf16)
    w2cat = jnp.transpose(w2c[:, :, 0, :], (2, 1, 0)).reshape(3 * 64, 32).astype(bf16)
    w3cat = jnp.transpose(w3c[:, :, 0, :], (2, 1, 0)).reshape(3 * 32, 32).astype(bf16)

    # Conv kernel emits pooled features position-major (B, P2, 32); PyTorch's
    # flatten is channel-major.  Permute fc1's columns once so the runtime
    # flatten is a free row-major reshape; lay fc1 out as (K, N) and zero-pad K
    # to the tile size (padded rows contribute exactly 0).
    TK, F_pad = _fc1_tile(F)
    del TK
    wf1_pm = wf1.reshape(256, 32, P2).transpose(0, 2, 1).reshape(256, F)
    wf1_t = jnp.pad(wf1_pm.T, ((0, F_pad - F), (0, 0))).astype(bf16)

    return (w0cat, b0.reshape(1, 64), w1cat, b1.reshape(1, 64),
            w2cat, b2.reshape(1, 32), w3cat, b3.reshape(1, 32),
            wf1_t, bf1.reshape(1, 256), wf2.T.astype(bf16), bf2.reshape(1, 256),
            wf3.T.astype(bf16), bf3.reshape(1, 1))


# -----------------------------------------------------------------------------
# Wrapper (layout glue + pallas_call plumbing)
# -----------------------------------------------------------------------------
def cnn_forward(x, kparams):
    """Forward pass.  `kparams` must come from `prepare_params` (one-time)."""
    (w0cat, b0, w1cat, b1, w2cat, b2, w3cat, b3,
     wf1_t, bf1, wf2_t, bf2, wf3_t, bf3) = kparams

    B, C, L, _ = x.shape
    C5 = C * 5
    W0 = L - 11
    W1 = W0 - 11
    P1 = W1 // 3
    W2 = P1 - 2
    W3 = W2 - 2
    P2 = W3 // 3
    F = 32 * P2
    bf16 = jnp.bfloat16

    # Per-position feature layout (c-major, matching w0cat's row order).
    x_feat = jnp.transpose(x, (0, 2, 1, 3)).reshape(B, L, C5)

    AK = max(_gsize(12, C5) * C5, _gsize(12, 64) * 64,
             _gsize(3, 64) * 64, _gsize(3, 32) * 32)
    acc_rows = W0 if 12 > _gsize(12, C5) else 8   # conv2d group acc only if needed

    conv_kernel = functools.partial(_conv_stack_kernel, C5=C5, W0=W0, W1=W1,
                                    P1=P1, W2=W2, W3=W3, P2=P2)

    # TODO(synk): on v7x with B == 1, add a halo-tiled row-chunk grid axis marked
    # "parallel" so the second TensorCore is not idle.
    pooled = pl.pallas_call(
        conv_kernel,
        out_shape=jax.ShapeDtypeStruct((B, P2, 32), bf16),
        grid=(B,),
        in_specs=[
            pl.BlockSpec((1, L, C5), lambda b: (b, 0, 0)),
            pl.BlockSpec((12 * C5, 64), lambda b: (0, 0)),
            pl.BlockSpec((1, 64), lambda b: (0, 0)),
            pl.BlockSpec((12 * 64, 64), lambda b: (0, 0)),
            pl.BlockSpec((1, 64), lambda b: (0, 0)),
            pl.BlockSpec((3 * 64, 32), lambda b: (0, 0)),
            pl.BlockSpec((1, 32), lambda b: (0, 0)),
            pl.BlockSpec((3 * 32, 32), lambda b: (0, 0)),
            pl.BlockSpec((1, 32), lambda b: (0, 0)),
        ],
        out_specs=pl.BlockSpec((1, P2, 32), lambda b: (b, 0, 0)),
        scratch_shapes=[
            pltpu.VMEM((L, C5), bf16),                # x_s : bf16 input window
            pltpu.VMEM((W0, AK), bf16),               # im_s: shared im2col staging
            pltpu.VMEM((acc_rows, 64), jnp.float32),  # acc_s: conv2d group acc
            pltpu.VMEM((W0, 64), bf16),               # h0
            pltpu.VMEM((W1, 64), jnp.float32),        # h1 (group acc + pool input)
            pltpu.VMEM((P1, 64), bf16),               # p1
            pltpu.VMEM((W2, 32), bf16),               # h2
            pltpu.VMEM((W3, 32), jnp.float32),        # h3 (pool input)
        ],
        compiler_params=pltpu.CompilerParams(
            dimension_semantics=("parallel",),
            vmem_limit_bytes=32 * 1024 * 1024),
    )(x_feat, w0cat, b0, w1cat, b1, w2cat, b2, w3cat, b3)

    # fc1 K-tiling: large bf16 weight blocks streamed over an accumulator.
    TK, F_pad = _fc1_tile(F)
    assert wf1_t.shape[0] == F_pad, "kparams were prepared for a different seq_len"
    flat = pooled.reshape(B, F)                      # free: already position-major
    if F_pad != F:
        flat = jnp.pad(flat, ((0, 0), (0, F_pad - F)))   # cheap: only B rows
    nk = F_pad // TK

    out = pl.pallas_call(
        _mlp_kernel,
        out_shape=jax.ShapeDtypeStruct((B, 1), jnp.float32),
        grid=(nk,),
        in_specs=[
            pl.BlockSpec((B, TK), lambda k: (0, k)),
            pl.BlockSpec((TK, 256), lambda k: (k, 0)),
            pl.BlockSpec((1, 256), lambda k: (0, 0)),
            pl.BlockSpec((256, 256), lambda k: (0, 0)),
            pl.BlockSpec((1, 256), lambda k: (0, 0)),
            pl.BlockSpec((256, 1), lambda k: (0, 0)),
            pl.BlockSpec((1, 1), lambda k: (0, 0)),
        ],
        out_specs=pl.BlockSpec((B, 1), lambda k: (0, 0)),
        scratch_shapes=[pltpu.VMEM((B, 256), jnp.float32)],
        compiler_params=pltpu.CompilerParams(
            dimension_semantics=("arbitrary",),
            vmem_limit_bytes=32 * 1024 * 1024),
    )(flat, wf1_t, bf1, wf2_t, bf2, wf3_t, bf3)
    return out


# -----------------------------------------------------------------------------
# Pure-JAX reference mirroring the PyTorch forward.  With bf16_ops=True it also
# mirrors the kernels' bf16 operand rounding (accumulation stays f32), so the
# kernel can be checked tightly; with bf16_ops=False it is the exact f32 spec.
# -----------------------------------------------------------------------------
def torch_like_reference(x, params, *, bf16_ops=False):
    if bf16_ops:
        qz = lambda a: a.astype(jnp.bfloat16).astype(jnp.float32)
    else:
        qz = lambda a: a
    hp = jax.lax.Precision.HIGHEST
    (w2d, b0, w1c, b1, w2c, b2, w3c, b3,
     wf1, bf1, wf2, bf2, wf3, bf3) = params

    xp = jnp.transpose(x, (0, 1, 3, 2))                 # permute((0,1,3,2))
    B, C, _, L = xp.shape
    W0 = L - 11
    xq = qz(xp)
    h = jnp.zeros((B, 64, W0), jnp.float32)
    for kh in range(5):
        for kw in range(12):
            h = h + jnp.einsum('bcl,oc->bol', xq[:, :, kh, kw:kw + W0],
                               qz(w2d[:, :, kh, kw]), precision=hp)
    h = jnp.maximum(h + b0[None, :, None], 0.0)

    def conv1(h, W, b, kn):
        hq = qz(h)
        Bb, Ci, Wd = h.shape
        Wo = Wd - kn + 1
        out = jnp.zeros((Bb, W.shape[0], Wo), jnp.float32)
        for k in range(kn):
            out = out + jnp.einsum('bcl,oc->bol', hq[:, :, k:k + Wo],
                                   qz(W[:, :, 0, k]), precision=hp)
        return jnp.maximum(out + b[None, :, None], 0.0)

    def maxpool3(h):
        Bb, Cc, Wd = h.shape
        P = Wd // 3
        return jnp.max(h[:, :, :3 * P].reshape(Bb, Cc, P, 3), axis=-1)

    h = conv1(h, w1c, b1, 12)
    h = maxpool3(h)
    h = conv1(h, w2c, b2, 3)
    h = conv1(h, w3c, b3, 3)
    h = qz(maxpool3(h))
    flat = h.reshape(B, -1)                             # channel-major flatten
    z = qz(jnp.maximum(jnp.einsum('bf,of->bo', flat, qz(wf1), precision=hp) + bf1, 0.0))
    z = qz(jnp.maximum(jnp.einsum('bf,of->bo', z, qz(wf2), precision=hp) + bf2, 0.0))
    z = jnp.einsum('bf,of->bo', z, qz(wf3), precision=hp) + bf3
    return 1.0 / (1.0 + jnp.exp(-z))


# -----------------------------------------------------------------------------
# Deterministic parameter construction + run
# -----------------------------------------------------------------------------
def make_params(key, number_of_loci, F):
    ks = jax.random.split(key, 14)

    def u(k, shape, fan_in):
        s = 1.0 / (float(fan_in) ** 0.5)
        return jax.random.uniform(k, shape, jnp.float32, -s, s)

    C = number_of_loci
    w2d = u(ks[0], (64, C, 5, 12), C * 5 * 12)
    b0 = u(ks[1], (64,), C * 5 * 12)
    w1c = u(ks[2], (64, 64, 1, 12), 64 * 12)
    b1 = u(ks[3], (64,), 64 * 12)
    w2c = u(ks[4], (32, 64, 1, 3), 64 * 3)
    b2 = u(ks[5], (32,), 64 * 3)
    w3c = u(ks[6], (32, 32, 1, 3), 32 * 3)
    b3 = u(ks[7], (32,), 32 * 3)
    wf1 = u(ks[8], (256, F), F)
    bf1 = u(ks[9], (256,), F)
    wf2 = u(ks[10], (256, 256), 256)
    bf2 = u(ks[11], (256,), 256)
    wf3 = u(ks[12], (1, 256), 256)
    bf3 = u(ks[13], (1,), 256)
    return (w2d, b0, w1c, b1, w2c, b2, w3c, b3,
            wf1, bf1, wf2, bf2, wf3, bf3)


if __name__ == "__main__":
    # Small shapes consistent with the module (the real model hard-codes fc1
    # in_features = 26720, i.e. L ~ 7553; same formula evaluated at L = 64).
    B, number_of_loci, L = 2, 4, 64
    P2 = (((L - 22) // 3) - 4) // 3
    F = 32 * P2

    root = jax.random.PRNGKey(0)
    k_x, k_p = jax.random.split(root)
    # module input: (batch, number_of_loci, seq_len, 5) one-hot-like features
    x = jax.random.uniform(k_x, (B, number_of_loci, L, 5), jnp.float32)
    params = make_params(k_p, number_of_loci, F)

    # One-time parameter re-layout (outside the per-call path).
    kparams = prepare_params(params, number_of_loci, L)

    fwd = jax.jit(cnn_forward)
    y = fwd(x, kparams)
    jax.block_until_ready(y)
    assert y.shape == (B, 1)

    # Tight check against a reference that mirrors the kernels' bf16 operand
    # rounding (all accumulation is f32 in both).
    y_mp = torch_like_reference(x, params, bf16_ops=True)
    assert jnp.allclose(y, y_mp, atol=2e-3, rtol=2e-3), (y, y_mp)
    # Sanity check against the pure-f32 PyTorch forward (bf16 operands =>
    # slightly looser tolerance).
    y_f32 = torch_like_reference(x, params, bf16_ops=False)
    assert jnp.allclose(y, y_f32, atol=5e-2, rtol=0.0), (y, y_f32)

    print("KERNEL_OK")
</pallas_src>

<mosaic_0001>
module attributes {stable_mosaic.version = 11 : i64} {
  func.func @_conv_stack_kernel(%arg0: i32, %arg1: memref<1x64x20xf32, #tpu.memory_space<vmem>>, %arg2: memref<240x64xbf16, #tpu.memory_space<vmem>>, %arg3: memref<1x64xf32, #tpu.memory_space<vmem>>, %arg4: memref<768x64xbf16, #tpu.memory_space<vmem>>, %arg5: memref<1x64xf32, #tpu.memory_space<vmem>>, %arg6: memref<192x32xbf16, #tpu.memory_space<vmem>>, %arg7: memref<1x32xf32, #tpu.memory_space<vmem>>, %arg8: memref<96x32xbf16, #tpu.memory_space<vmem>>, %arg9: memref<1x32xf32, #tpu.memory_space<vmem>>, %arg10: memref<1x3x32xbf16, #tpu.memory_space<vmem>>, %arg11: memref<64x20xbf16, #tpu.memory_space<vmem>>, %arg12: memref<53x256xbf16, #tpu.memory_space<vmem>>, %arg13: memref<8x64xf32, #tpu.memory_space<vmem>>, %arg14: memref<53x64xbf16, #tpu.memory_space<vmem>>, %arg15: memref<42x64xf32, #tpu.memory_space<vmem>>, %arg16: memref<14x64xbf16, #tpu.memory_space<vmem>>, %arg17: memref<12x32xbf16, #tpu.memory_space<vmem>>, %arg18: memref<10x32xf32, #tpu.memory_space<vmem>>) attributes {dimension_semantics = [#tpu.dimension_semantics<parallel>], iteration_bounds = array<i64: 2>, scalar_prefetch = 0 : i64, scratch_operands = 8 : i64, tpu.core_type = #tpu.core_type<tc>, window_params = [{transform_indices = @transform_0, window_bounds = array<i64: 1, 64, 20>}, {pipeline_mode = #tpu.pipeline_mode<synchronous>, transform_indices = @transform_1, window_bounds = array<i64: 240, 64>}, {pipeline_mode = #tpu.pipeline_mode<synchronous>, transform_indices = @transform_2, window_bounds = array<i64: 1, 64>}, {pipeline_mode = #tpu.pipeline_mode<synchronous>, transform_indices = @transform_3, window_bounds = array<i64: 768, 64>}, {pipeline_mode = #tpu.pipeline_mode<synchronous>, transform_indices = @transform_4, window_bounds = array<i64: 1, 64>}, {pipeline_mode = #tpu.pipeline_mode<synchronous>, transform_indices = @transform_5, window_bounds = array<i64: 192, 32>}, {pipeline_mode = #tpu.pipeline_mode<synchronous>, transform_indices = @transform_6, window_bounds = array<i64: 1, 32>}, {pipeline_mode = #tpu.pipeline_mode<synchronous>, transform_indices = @transform_7, window_bounds = array<i64: 96, 32>}, {pipeline_mode = #tpu.pipeline_mode<synchronous>, transform_indices = @transform_8, window_bounds = array<i64: 1, 32>}, {transform_indices = @transform_9, window_bounds = array<i64: 1, 3, 32>}]} {
    %c0 = arith.constant 0 : index
    %c0_0 = arith.constant 0 : index
    %c0_1 = arith.constant 0 : index
    %0 = vector.load %arg1[%c0, %c0_0, %c0_1] : memref<1x64x20xf32, #tpu.memory_space<vmem>>, vector<1x64x20xf32>
    %1 = vector.shape_cast %0 : vector<1x64x20xf32> to vector<64x20xf32>
    %2 = arith.truncf %1 : vector<64x20xf32> to vector<64x20xbf16>
    %c0_2 = arith.constant 0 : index
    %c0_3 = arith.constant 0 : index
    %3 = vector.load %arg11[%c0_2, %c0_3] : memref<64x20xbf16, #tpu.memory_space<vmem>>, vector<64x20xbf16>
    tpu.vector_store %arg11[%c0_2, %c0_3], %2 {strides = array<i32>} : memref<64x20xbf16, #tpu.memory_space<vmem>>, vector<64x20xbf16>,
    %c0_4 = arith.constant 0 : index
    %c0_5 = arith.constant 0 : index
    %4 = vector.load %arg11[%c0_4, %c0_5] : memref<64x20xbf16, #tpu.memory_space<vmem>>, vector<53x20xbf16>
    %c0_6 = arith.constant 0 : index
    %c0_7 = arith.constant 0 : index
    %5 = vector.load %arg12[%c0_6, %c0_7] : memref<53x256xbf16, #tpu.memory_space<vmem>>, vector<53x20xbf16>
    tpu.vector_store %arg12[%c0_6, %c0_7], %4 {strides = array<i32>} : memref<53x256xbf16, #tpu.memory_space<vmem>>, vector<53x20xbf16>,
    %c1 = arith.constant 1 : index
    %c0_8 = arith.constant 0 : index
    %6 = vector.load %arg11[%c1, %c0_8] : memref<64x20xbf16, #tpu.memory_space<vmem>>, vector<53x20xbf16>
    %c0_9 = arith.constant 0 : index
    %c20 = arith.constant 20 : index
    %7 = vector.load %arg12[%c0_9, %c20] : memref<53x256xbf16, #tpu.memory_space<vmem>>, vector<53x20xbf16>
    tpu.vector_store %arg12[%c0_9, %c20], %6 {strides = array<i32>} : memref<53x256xbf16, #tpu.memory_space<vmem>>, vector<53x20xbf16>,
    %c2 = arith.constant 2 : index
    %c0_10 = arith.constant 0 : index
    %8 = vector.load %arg11[%c2, %c0_10] : memref<64x20xbf16, #tpu.memory_space<vmem>>, vector<53x20xbf16>
    %c0_11 = arith.constant 0 : index
    %c40 = arith.constant 40 : index
    %9 = vector.load %arg12[%c0_11, %c40] : memref<53x256xbf16, #tpu.memory_space<vmem>>, vector<53x20xbf16>
    tpu.vector_store %arg12[%c0_11, %c40], %8 {strides = array<i32>} : memref<53x256xbf16, #tpu.memory_space<vmem>>, vector<53x20xbf16>,
    %c3 = arith.constant 3 : index
    %c0_12 = arith.constant 0 : index
    %10 = vector.load %arg11[%c3, %c0_12] : memref<64x20xbf16, #tpu.memory_space<vmem>>, vector<53x20xbf16>
    %c0_13 = arith.constant 0 : index
    %c60 = arith.constant 60 : index
    %11 = vector.load %arg12[%c0_13, %c60] : memref<53x256xbf16, #tpu.memory_space<vmem>>, vector<53x20xbf16>
    tpu.vector_store %arg12[%c0_13, %c60], %10 {strides = array<i32>} : memref<53x256xbf16, #tpu.memory_space<vmem>>, vector<53x20xbf16>,
    %c4 = arith.constant 4 : index
    %c0_14 = arith.constant 0 : index
    %12 = vector.load %arg11[%c4, %c0_14] : memref<64x20xbf16, #tpu.memory_space<vmem>>, vector<53x20xbf16>
    %c0_15 = arith.constant 0 : index
    %c80 = arith.constant 80 : index
    %13 = vector.load %arg12[%c0_15, %c80] : memref<53x256xbf16, #tpu.memory_space<vmem>>, vector<53x20xbf16>
    tpu.vector_store %arg12[%c0_15, %c80], %12 {strides = array<i32>} : memref<53x256xbf16, #tpu.memory_space<vmem>>, vector<53x20xbf16>,
    %c5 = arith.constant 5 : index
    %c0_16 = arith.constant 0 : index
    %14 = vector.load %arg11[%c5, %c0_16] : memref<64x20xbf16, #tpu.memory_space<vmem>>, vector<53x20xbf16>
    %c0_17 = arith.constant 0 : index
    %c100 = arith.constant 100 : index
    %15 = vector.load %arg12[%c0_17, %c100] : memref<53x256xbf16, #tpu.memory_space<vmem>>, vector<53x20xbf16>
    tpu.vector_store %arg12[%c0_17, %c100], %14 {strides = array<i32>} : memref<53x256xbf16, #tpu.memory_space<vmem>>, vector<53x20xbf16>,
    %c6 = arith.constant 6 : index
    %c0_18 = arith.constant 0 : index
    %16 = vector.load %arg11[%c6, %c0_18] : memref<64x20xbf16, #tpu.memory_space<vmem>>, vector<53x20xbf16>
    %c0_19 = arith.constant 0 : index
    %c120 = arith.constant 120 : index
    %17 = vector.load %arg12[%c0_19, %c120] : memref<53x256xbf16, #tpu.memory_space<vmem>>, vector<53x20xbf16>
    tpu.vector_store %arg12[%c0_19, %c120], %16 {strides = array<i32>} : memref<53x256xbf16, #tpu.memory_space<vmem>>, vector<53x20xbf16>,
    %c7 = arith.constant 7 : index
    %c0_20 = arith.constant 0 : index
    %18 = vector.load %arg11[%c7, %c0_20] : memref<64x20xbf16, #tpu.memory_space<vmem>>, vector<53x20xbf16>
    %c0_21 = arith.constant 0 : index
    %c140 = arith.constant 140 : index
    %19 = vector.load %arg12[%c0_21, %c140] : memref<53x256xbf16, #tpu.memory_space<vmem>>, vector<53x20xbf16>
    tpu.vector_store %arg12[%c0_21, %c140], %18 {strides = array<i32>} : memref<53x256xbf16, #tpu.memory_space<vmem>>, vector<53x20xbf16>,
    %c8 = arith.constant 8 : index
    %c0_22 = arith.constant 0 : index
    %20 = vector.load %arg11[%c8, %c0_22] : memref<64x20xbf16, #tpu.memory_space<vmem>>, vector<53x20xbf16>
    %c0_23 = arith.constant 0 : index
    %c160 = arith.constant 160 : index
    %21 = vector.load %arg12[%c0_23, %c160] : memref<53x256xbf16, #tpu.memory_space<vmem>>, vector<53x20xbf16>
    tpu.vector_store %arg12[%c0_23, %c160], %20 {strides = array<i32>} : memref<53x256xbf16, #tpu.memory_space<vmem>>, vector<53x20xbf16>,
    %c9 = arith.constant 9 : index
    %c0_24 = arith.constant 0 : index
    %22 = vector.load %arg11[%c9, %c0_24] : memref<64x20xbf16, #tpu.memory_space<vmem>>, vector<53x20xbf16>
    %c0_25 = arith.constant 0 : index
    %c180 = arith.constant 180 : index
    %23 = vector.load %arg12[%c0_25, %c180] : memref<53x256xbf16, #tpu.memory_space<vmem>>, vector<53x20xbf16>
    tpu.vector_store %arg12[%c0_25, %c180], %22 {strides = array<i32>} : memref<53x256xbf16, #tpu.memory_space<vmem>>, vector<53x20xbf16>,
    %c10 = arith.constant 10 : index
    %c0_26 = arith.constant 0 : index
    %24 = vector.load %arg11[%c10, %c0_26] : memref<64x20xbf16, #tpu.memory_space<vmem>>, vector<53x20xbf16>
    %c0_27 = arith.constant 0 : index
    %c200 = arith.constant 200 : index
    %25 = vector.load %arg12[%c0_27, %c200] : memref<53x256xbf16, #tpu.memory_space<vmem>>, vector<53x20xbf16>
    tpu.vector_store %arg12[%c0_27, %c200], %24 {strides = array<i32>} : memref<53x256xbf16, #tpu.memory_space<vmem>>, vector<53x20xbf16>,
    %c11 = arith.constant 11 : index
    %c0_28 = arith.constant 0 : index
    %26 = vector.load %arg11[%c11, %c0_28] : memref<64x20xbf16, #tpu.memory_space<vmem>>, vector<53x20xbf16>
    %c0_29 = arith.constant 0 : index
    %c220 = arith.constant 220 : index
    %27 = vector.load %arg12[%c0_29, %c220] : memref<53x256xbf16, #tpu.memory_space<vmem>>, vector<53x20xbf16>
    tpu.vector_store %arg12[%c0_29, %c220], %26 {strides = array<i32>} : memref<53x256xbf16, #tpu.memory_space<vmem>>, vector<53x20xbf16>,
    %c0_30 = arith.constant 0 : index
    %c0_31 = arith.constant 0 : index
    %28 = vector.load %arg12[%c0_30, %c0_31] : memref<53x256xbf16, #tpu.memory_space<vmem>>, vector<53x240xbf16>
    %c0_32 = arith.constant 0 : index
    %c0_33 = arith.constant 0 : index
    %29 = vector.load %arg2[%c0_32, %c0_33] : memref<240x64xbf16, #tpu.memory_space<vmem>>, vector<240x64xbf16>
    %cst = arith.constant dense<0.000000e+00> : vector<53x64xf32>
    %30 = tpu.matmul %28, %29, %cst {dimension_numbers = #tpu.dot_dimension_numbers<[1], [0], [0], [1], [0, 0, 1, 1], [], []>} : vector<53x240xbf16>, vector<240x64xbf16>, vector<53x64xf32> -> vector<53x64xf32>
    %c0_34 = arith.constant 0 : index
    %c0_35 = arith.constant 0 : index
    %31 = vector.load %arg3[%c0_34, %c0_35] : memref<1x64xf32, #tpu.memory_space<vmem>>, vector<1x64xf32>
    %32 = vector.broadcast %31 : vector<1x64xf32> to vector<53x64xf32>
    %33 = arith.addf %30, %32 : vector<53x64xf32>
    %cst_36 = arith.constant 0.000000e+00 : f32
    %34 = vector.broadcast %cst_36 : f32 to vector<53x64xf32>
    %35 = arith.maximumf %33, %34 : vector<53x64xf32>
    %36 = arith.truncf %35 : vector<53x64xf32> to vector<53x64xbf16>
    %c0_37 = arith.constant 0 : index
    %c0_38 = arith.constant 0 : index
    %37 = vector.load %arg14[%c0_37, %c0_38] : memref<53x64xbf16, #tpu.memory_space<vmem>>, vector<53x64xbf16>
    tpu.vector_store %arg14[%c0_37, %c0_38], %36 {strides = array<i32>} : memref<53x64xbf16, #tpu.memory_space<vmem>>, vector<53x64xbf16>,
    %c0_39 = arith.constant 0 : index
    %c0_40 = arith.constant 0 : index
    %38 = vector.load %arg14[%c0_39, %c0_40] : memref<53x64xbf16, #tpu.memory_space<vmem>>, vector<42x64xbf16>
    %c1_41 = arith.constant 1 : index
    %c0_42 = arith.constant 0 : index
    %39 = vector.load %arg14[%c1_41, %c0_42] : memref<53x64xbf16, #tpu.memory_space<vmem>>, vector<42x64xbf16>
    %40 = tpu.concatenate %38, %39 in 1 : vector<42x64xbf16>, vector<42x64xbf16> -> vector<42x128xbf16>
    %c0_43 = arith.constant 0 : index
    %c0_44 = arith.constant 0 : index
    %41 = vector.load %arg12[%c0_43, %c0_44] : memref<53x256xbf16, #tpu.memory_space<vmem>>, vector<42x128xbf16>
    tpu.vector_store %arg12[%c0_43, %c0_44], %40 {strides = array<i32>} : memref<53x256xbf16, #tpu.memory_space<vmem>>, vector<42x128xbf16>,
    %c2_45 = arith.constant 2 : index
    %c0_46 = arith.constant 0 : index
    %42 = vector.load %arg14[%c2_45, %c0_46] : memref<53x64xbf16, #tpu.memory_space<vmem>>, vector<42x64xbf16>
    %c3_47 = arith.constant 3 : index
    %c0_48 = arith.constant 0 : index
    %43 = vector.load %arg14[%c3_47, %c0_48] : memref<53x64xbf16, #tpu.memory_space<vmem>>, vector<42x64xbf16>
    %44 = tpu.concatenate %42, %43 in 1 : vector<42x64xbf16>, vector<42x64xbf16> -> vector<42x128xbf16>
    %c0_49 = arith.constant 0 : index
    %c128 = arith.constant 128 : index
    %45 = vector.load %arg12[%c0_49, %c128] : memref<53x256xbf16, #tpu.memory_space<vmem>>, vector<42x128xbf16>
    tpu.vector_store %arg12[%c0_49, %c128], %44 {strides = array<i32>} : memref<53x256xbf16, #tpu.memory_space<vmem>>, vector<42x128xbf16>,
    %c0_50 = arith.constant 0 : index
    %c0_51 = arith.constant 0 : index
    %46 = vector.load %arg12[%c0_50, %c0_51] : memref<53x256xbf16, #tpu.memory_space<vmem>>, vector<42x256xbf16>
    %c0_52 = arith.constant 0 : index
    %c0_53 = arith.constant 0 : index
    %47 = vector.load %arg4[%c0_52, %c0_53] : memref<768x64xbf16, #tpu.memory_space<vmem>>, vector<256x64xbf16>
    %cst_54 = arith.constant dense<0.000000e+00> : vector<42x64xf32>
    %48 = tpu.matmul %46, %47, %cst_54 {dimension_numbers = #tpu.dot_dimension_numbers<[1], [0], [0], [1], [0, 0, 1, 1], [], []>} : vector<42x256xbf16>, vector<256x64xbf16>, vector<42x64xf32> -> vector<42x64xf32>
    %c0_55 = arith.constant 0 : index
    %c0_56 = arith.constant 0 : index
    %49 = vector.load %arg15[%c0_55, %c0_56] : memref<42x64xf32, #tpu.memory_space<vmem>>, vector<42x64xf32>
    tpu.vector_store %arg15[%c0_55, %c0_56], %48 {strides = array<i32>} : memref<42x64xf32, #tpu.memory_space<vmem>>, vector<42x64xf32>,
    %c4_57 = arith.constant 4 : index
    %c0_58 = arith.constant 0 : index
    %50 = vector.load %arg14[%c4_57, %c0_58] : memref<53x64xbf16, #tpu.memory_space<vmem>>, vector<42x64xbf16>
    %c5_59 = arith.constant 5 : index
    %c0_60 = arith.constant 0 : index
    %51 = vector.load %arg14[%c5_59, %c0_60] : memref<53x64xbf16, #tpu.memory_space<vmem>>, vector<42x64xbf16>
    %52 = tpu.concatenate %50, %51 in 1 : vector<42x64xbf16>, vector<42x64xbf16> -> vector<42x128xbf16>
    %c0_61 = arith.constant 0 : index
    %c0_62 = arith.constant 0 : index
    %53 = vector.load %arg12[%c0_61, %c0_62] : memref<53x256xbf16, #tpu.memory_space<vmem>>, vector<42x128xbf16>
    tpu.vector_store %arg12[%c0_61, %c0_62], %52 {strides = array<i32>} : memref<53x256xbf16, #tpu.memory_space<vmem>>, vector<42x128xbf16>,
    %c6_63 = arith.constant 6 : index
    %c0_64 = arith.constant 0 : index
    %54 = vector.load %arg14[%c6_63, %c0_64] : memref<53x64xbf16, #tpu.memory_space<vmem>>, vector<42x64xbf16>
    %c7_65 = arith.constant 7 : index
    %c0_66 = arith.constant 0 : index
    %55 = vector.load %arg14[%c7_65, %c0_66] : memref<53x64xbf16, #tpu.memory_space<vmem>>, vector<42x64xbf16>
    %56 = tpu.concatenate %54, %55 in 1 : vector<42x64xbf16>, vector<42x64xbf16> -> vector<42x128xbf16>
    %c0_67 = arith.constant 0 : index
    %c128_68 = arith.constant 128 : index
    %57 = vector.load %arg12[%c0_67, %c128_68] : memref<53x256xbf16, #tpu.memory_space<vmem>>, vector<42x128xbf16>
    tpu.vector_store %arg12[%c0_67, %c128_68], %56 {strides = array<i32>} : memref<53x256xbf16, #tpu.memory_space<vmem>>, vector<42x128xbf16>,
    %c0_69 = arith.constant 0 : index
    %c0_70 = arith.constant 0 : index
    %58 = vector.load %arg12[%c0_69, %c0_70] : memref<53x256xbf16, #tpu.memory_space<vmem>>, vector<42x256xbf16>
    %c256 = arith.constant 256 : index
    %c0_71 = arith.constant 0 : index
    %59 = vector.load %arg4[%c256, %c0_71] : memref<768x64xbf16, #tpu.memory_space<vmem>>, vector<256x64xbf16>
    %cst_72 = arith.constant dense<0.000000e+00> : vector<42x64xf32>
    %60 = tpu.matmul %58, %59, %cst_72 {dimension_numbers = #tpu.dot_dimension_numbers<[1], [0], [0], [1], [0, 0, 1, 1], [], []>} : vector<42x256xbf16>, vector<256x64xbf16>, vector<42x64xf32> -> vector<42x64xf32>
    %c0_73 = arith.constant 0 : index
    %c0_74 = arith.constant 0 : index
    %61 = vector.load %arg15[%c0_73, %c0_74] : memref<42x64xf32, #tpu.memory_space<vmem>>, vector<42x64xf32>
    %62 = arith.addf %61, %60 : vector<42x64xf32>
    %c0_75 = arith.constant 0 : index
    %c0_76 = arith.constant 0 : index
    %63 = vector.load %arg15[%c0_75, %c0_76] : memref<42x64xf32, #tpu.memory_space<vmem>>, vector<42x64xf32>
    tpu.vector_store %arg15[%c0_75, %c0_76], %62 {strides = array<i32>} : memref<42x64xf32, #tpu.memory_space<vmem>>, vector<42x64xf32>,
    %c8_77 = arith.constant 8 : index
    %c0_78 = arith.constant 0 : index
    %64 = vector.load %arg14[%c8_77, %c0_78] : memref<53x64xbf16, #tpu.memory_space<vmem>>, vector<42x64xbf16>
    %c9_79 = arith.constant 9 : index
    %c0_80 = arith.constant 0 : index
    %65 = vector.load %arg14[%c9_79, %c0_80] : memref<53x64xbf16, #tpu.memory_space<vmem>>, vector<42x64xbf16>
    %66 = tpu.concatenate %64, %65 in 1 : vector<42x64xbf16>, vector<42x64xbf16> -> vector<42x128xbf16>
    %c0_81 = arith.constant 0 : index
    %c0_82 = arith.constant 0 : index
    %67 = vector.load %arg12[%c0_81, %c0_82] : memref<53x256xbf16, #tpu.memory_space<vmem>>, vector<42x128xbf16>
    tpu.vector_store %arg12[%c0_81, %c0_82], %66 {strides = array<i32>} : memref<53x256xbf16, #tpu.memory_space<vmem>>, vector<42x128xbf16>,
    %c10_83 = arith.constant 10 : index
    %c0_84 = arith.constant 0 : index
    %68 = vector.load %arg14[%c10_83, %c0_84] : memref<53x64xbf16, #tpu.memory_space<vmem>>, vector<42x64xbf16>
    %c11_85 = arith.constant 11 : index
    %c0_86 = arith.constant 0 : index
    %69 = vector.load %arg14[%c11_85, %c0_86] : memref<53x64xbf16, #tpu.memory_space<vmem>>, vector<42x64xbf16>
    %70 = tpu.concatenate %68, %69 in 1 : vector<42x64xbf16>, vector<42x64xbf16> -> vector<42x128xbf16>
    %c0_87 = arith.constant 0 : index
    %c128_88 = arith.constant 128 : index
    %71 = vector.load %arg12[%c0_87, %c128_88] : memref<53x256xbf16, #tpu.memory_space<vmem>>, vector<42x128xbf16>
    tpu.vector_store %arg12[%c0_87, %c128_88], %70 {strides = array<i32>} : memref<53x256xbf16, #tpu.memory_space<vmem>>, vector<42x128xbf16>,
    %c0_89 = arith.constant 0 : index
    %c0_90 = arith.constant 0 : index
    %72 = vector.load %arg12[%c0_89, %c0_90] : memref<53x256xbf16, #tpu.memory_space<vmem>>, vector<42x256xbf16>
    %c512 = arith.constant 512 : index
    %c0_91 = arith.constant 0 : index
    %73 = vector.load %arg4[%c512, %c0_91] : memref<768x64xbf16, #tpu.memory_space<vmem>>, vector<256x64xbf16>
    %cst_92 = arith.constant dense<0.000000e+00> : vector<42x64xf32>
    %74 = tpu.matmul %72, %73, %cst_92 {dimension_numbers = #tpu.dot_dimension_numbers<[1], [0], [0], [1], [0, 0, 1, 1], [], []>} : vector<42x256xbf16>, vector<256x64xbf16>, vector<42x64xf32> -> vector<42x64xf32>
    %c0_93 = arith.constant 0 : index
    %c0_94 = arith.constant 0 : index
    %75 = vector.load %arg15[%c0_93, %c0_94] : memref<42x64xf32, #tpu.memory_space<vmem>>, vector<42x64xf32>
    %76 = arith.addf %75, %74 : vector<42x64xf32>
    %c0_95 = arith.constant 0 : index
    %c0_96 = arith.constant 0 : index
    %77 = vector.load %arg15[%c0_95, %c0_96] : memref<42x64xf32, #tpu.memory_space<vmem>>, vector<42x64xf32>
    tpu.vector_store %arg15[%c0_95, %c0_96], %76 {strides = array<i32>} : memref<42x64xf32, #tpu.memory_space<vmem>>, vector<42x64xf32>,
    %c0_97 = arith.constant 0 : index
    %c0_98 = arith.constant 0 : index
    %78 = vector.load %arg15[%c0_97, %c0_98] : memref<42x64xf32, #tpu.memory_space<vmem>>, vector<42x64xf32>
    %c0_99 = arith.constant 0 : index
    %c0_100 = arith.constant 0 : index
    %79 = vector.load %arg5[%c0_99, %c0_100] : memref<1x64xf32, #tpu.memory_space<vmem>>, vector<1x64xf32>
    %80 = vector.broadcast %79 : vector<1x64xf32> to vector<42x64xf32>
    %81 = arith.addf %78, %80 : vector<42x64xf32>
    %cst_101 = arith.constant 0.000000e+00 : f32
    %82 = vector.broadcast %cst_101 : f32 to vector<42x64xf32>
    %83 = arith.maximumf %81, %82 : vector<42x64xf32>
    %c0_102 = arith.constant 0 : index
    %c0_103 = arith.constant 0 : index
    %84 = vector.load %arg15[%c0_102, %c0_103] : memref<42x64xf32, #tpu.memory_space<vmem>>, vector<42x64xf32>
    tpu.vector_store %arg15[%c0_102, %c0_103], %83 {strides = array<i32>} : memref<42x64xf32, #tpu.memory_space<vmem>>, vector<42x64xf32>,
    %c0_104 = arith.constant 0 : index
    %c0_105 = arith.constant 0 : index
    %85 = tpu.strided_load %arg15[%c0_104, %c0_105] {strides = array<i32: 3, 1>} : memref<42x64xf32, #tpu.memory_space<vmem>>, vector<14x64xf32>
    %c1_106 = arith.constant 1 : index
    %c0_107 = arith.constant 0 : index
    %86 = tpu.strided_load %arg15[%c1_106, %c0_107] {strides = array<i32: 3, 1>} : memref<42x64xf32, #tpu.memory_space<vmem>>, vector<14x64xf32>
    %87 = arith.maximumf %85, %86 : vector<14x64xf32>
    %c2_108 = arith.constant 2 : index
    %c0_109 = arith.constant 0 : index
    %88 = tpu.strided_load %arg15[%c2_108, %c0_109] {strides = array<i32: 3, 1>} : memref<42x64xf32, #tpu.memory_space<vmem>>, vector<14x64xf32>
    %89 = arith.maximumf %87, %88 : vector<14x64xf32>
    %90 = arith.truncf %89 : vector<14x64xf32> to vector<14x64xbf16>
    %c0_110 = arith.constant 0 : index
    %c0_111 = arith.constant 0 : index
    %91 = vector.load %arg16[%c0_110, %c0_111] : memref<14x64xbf16, #tpu.memory_space<vmem>>, vector<14x64xbf16>
    tpu.vector_store %arg16[%c0_110, %c0_111], %90 {strides = array<i32>} : memref<14x64xbf16, #tpu.memory_space<vmem>>, vector<14x64xbf16>,
    %c0_112 = arith.constant 0 : index
    %c0_113 = arith.constant 0 : index
    %92 = vector.load %arg16[%c0_112, %c0_113] : memref<14x64xbf16, #tpu.memory_space<vmem>>, vector<12x64xbf16>
    %c1_114 = arith.constant 1 : index
    %c0_115 = arith.constant 0 : index
    %93 = vector.load %arg16[%c1_114, %c0_115] : memref<14x64xbf16, #tpu.memory_space<vmem>>, vector<12x64xbf16>
    %94 = tpu.concatenate %92, %93 in 1 : vector<12x64xbf16>, vector<12x64xbf16> -> vector<12x128xbf16>
    %c0_116 = arith.constant 0 : index
    %c0_117 = arith.constant 0 : index
    %95 = vector.load %arg12[%c0_116, %c0_117] : memref<53x256xbf16, #tpu.memory_space<vmem>>, vector<12x128xbf16>
    tpu.vector_store %arg12[%c0_116, %c0_117], %94 {strides = array<i32>} : memref<53x256xbf16, #tpu.memory_space<vmem>>, vector<12x128xbf16>,
    %c2_118 = arith.constant 2 : index
    %c0_119 = arith.constant 0 : index
    %96 = vector.load %arg16[%c2_118, %c0_119] : memref<14x64xbf16, #tpu.memory_space<vmem>>, vector<12x64xbf16>
    %c0_120 = arith.constant 0 : index
    %c128_121 = arith.constant 128 : index
    %97 = vector.load %arg12[%c0_120, %c128_121] : memref<53x256xbf16, #tpu.memory_space<vmem>>, vector<12x64xbf16>
    tpu.vector_store %arg12[%c0_120, %c128_121], %96 {strides = array<i32>} : memref<53x256xbf16, #tpu.memory_space<vmem>>, vector<12x64xbf16>,
    %c0_122 = arith.constant 0 : index
    %c0_123 = arith.constant 0 : index
    %98 = vector.load %arg12[%c0_122, %c0_123] : memref<53x256xbf16, #tpu.memory_space<vmem>>, vector<12x192xbf16>
    %c0_124 = arith.constant 0 : index
    %c0_125 = arith.constant 0 : index
    %99 = vector.load %arg6[%c0_124, %c0_125] : memref<192x32xbf16, #tpu.memory_space<vmem>>, vector<192x32xbf16>
    %cst_126 = arith.constant dense<0.000000e+00> : vector<12x32xf32>
    %100 = tpu.matmul %98, %99, %cst_126 {dimension_numbers = #tpu.dot_dimension_numbers<[1], [0], [0], [1], [0, 0, 1, 1], [], []>} : vector<12x192xbf16>, vector<192x32xbf16>, vector<12x32xf32> -> vector<12x32xf32>
    %c0_127 = arith.constant 0 : index
    %c0_128 = arith.constant 0 : index
    %101 = vector.load %arg7[%c0_127, %c0_128] : memref<1x32xf32, #tpu.memory_space<vmem>>, vector<1x32xf32>
    %102 = vector.broadcast %101 : vector<1x32xf32> to vector<12x32xf32>
    %103 = arith.addf %100, %102 : vector<12x32xf32>
    %cst_129 = arith.constant 0.000000e+00 : f32
    %104 = vector.broadcast %cst_129 : f32 to vector<12x32xf32>
    %105 = arith.maximumf %103, %104 : vector<12x32xf32>
    %106 = arith.truncf %105 : vector<12x32xf32> to vector<12x32xbf16>
    %c0_130 = arith.constant 0 : index
    %c0_131 = arith.constant 0 : index
    %107 = vector.load %arg17[%c0_130, %c0_131] : memref<12x32xbf16, #tpu.memory_space<vmem>>, vector<12x32xbf16>
    tpu.vector_store %arg17[%c0_130, %c0_131], %106 {strides = array<i32>} : memref<12x32xbf16, #tpu.memory_space<vmem>>, vector<12x32xbf16>,
    %c0_132 = arith.constant 0 : index
    %c0_133 = arith.constant 0 : index
    %108 = vector.load %arg17[%c0_132, %c0_133] : memref<12x32xbf16, #tpu.memory_space<vmem>>, vector<10x32xbf16>
    %c1_134 = arith.constant 1 : index
    %c0_135 = arith.constant 0 : index
    %109 = vector.load %arg17[%c1_134, %c0_135] : memref<12x32xbf16, #tpu.memory_space<vmem>>, vector<10x32xbf16>
    %c2_136 = arith.constant 2 : index
    %c0_137 = arith.constant 0 : index
    %110 = vector.load %arg17[%c2_136, %c0_137] : memref<12x32xbf16, #tpu.memory_space<vmem>>, vector<10x32xbf16>
    %111 = tpu.concatenate %108, %109, %110 in 1 : vector<10x32xbf16>, vector<10x32xbf16>, vector<10x32xbf16> -> vector<10x96xbf16>
    %c0_138 = arith.constant 0 : index
    %c0_139 = arith.constant 0 : index
    %112 = vector.load %arg12[%c0_138, %c0_139] : memref<53x256xbf16, #tpu.memory_space<vmem>>, vector<10x96xbf16>
    tpu.vector_store %arg12[%c0_138, %c0_139], %111 {strides = array<i32>} : memref<53x256xbf16, #tpu.memory_space<vmem>>, vector<10x96xbf16>,
    %c0_140 = arith.constant 0 : index
    %c0_141 = arith.constant 0 : index
    %113 = vector.load %arg12[%c0_140, %c0_141] : memref<53x256xbf16, #tpu.memory_space<vmem>>, vector<10x96xbf16>
    %c0_142 = arith.constant 0 : index
    %c0_143 = arith.constant 0 : index
    %114 = vector.load %arg8[%c0_142, %c0_143] : memref<96x32xbf16, #tpu.memory_space<vmem>>, vector<96x32xbf16>
    %cst_144 = arith.constant dense<0.000000e+00> : vector<10x32xf32>
    %115 = tpu.matmul %113, %114, %cst_144 {dimension_numbers = #tpu.dot_dimension_numbers<[1], [0], [0], [1], [0, 0, 1, 1], [], []>} : vector<10x96xbf16>, vector<96x32xbf16>, vector<10x32xf32> -> vector<10x32xf32>
    %c0_145 = arith.constant 0 : index
    %c0_146 = arith.constant 0 : index
    %116 = vector.load %arg9[%c0_145, %c0_146] : memref<1x32xf32, #tpu.memory_space<vmem>>, vector<1x32xf32>
    %117 = vector.broadcast %116 : vector<1x32xf32> to vector<10x32xf32>
    %118 = arith.addf %115, %117 : vector<10x32xf32>
    %cst_147 = arith.constant 0.000000e+00 : f32
    %119 = vector.broadcast %cst_147 : f32 to vector<10x32xf32>
    %120 = arith.maximumf %118, %119 : vector<10x32xf32>
    %c0_148 = arith.constant 0 : index
    %c0_149 = arith.constant 0 : index
    %121 = vector.load %arg18[%c0_148, %c0_149] : memref<10x32xf32, #tpu.memory_space<vmem>>, vector<10x32xf32>
    tpu.vector_store %arg18[%c0_148, %c0_149], %120 {strides = array<i32>} : memref<10x32xf32, #tpu.memory_space<vmem>>, vector<10x32xf32>,
    %c0_150 = arith.constant 0 : index
    %c0_151 = arith.constant 0 : index
    %122 = tpu.strided_load %arg18[%c0_150, %c0_151] {strides = array<i32: 3, 1>} : memref<10x32xf32, #tpu.memory_space<vmem>>, vector<3x32xf32>
    %c1_152 = arith.constant 1 : index
    %c0_153 = arith.constant 0 : index
    %123 = tpu.strided_load %arg18[%c1_152, %c0_153] {strides = array<i32: 3, 1>} : memref<10x32xf32, #tpu.memory_space<vmem>>, vector<3x32xf32>
    %124 = arith.maximumf %122, %123 : vector<3x32xf32>
    %c2_154 = arith.constant 2 : index
    %c0_155 = arith.constant 0 : index
    %125 = tpu.strided_load %arg18[%c2_154, %c0_155] {strides = array<i32: 3, 1>} : memref<10x32xf32, #tpu.memory_space<vmem>>, vector<3x32xf32>
    %126 = arith.maximumf %124, %125 : vector<3x32xf32>
    %127 = arith.truncf %126 : vector<3x32xf32> to vector<3x32xbf16>
    %c0_156 = arith.constant 0 : index
    %c0_157 = arith.constant 0 : index
    %c0_158 = arith.constant 0 : index
    %128 = vector.load %arg10[%c0_156, %c0_157, %c0_158] : memref<1x3x32xbf16, #tpu.memory_space<vmem>>, vector<1x3x32xbf16>
    %129 = vector.shape_cast %128 : vector<1x3x32xbf16> to vector<3x32xbf16>
    %130 = vector.shape_cast %127 : vector<3x32xbf16> to vector<1x3x32xbf16>
    tpu.vector_store %arg10[%c0_156, %c0_157, %c0_158], %130 {strides = array<i32>} : memref<1x3x32xbf16, #tpu.memory_space<vmem>>, vector<1x3x32xbf16>,
    return
  }
  func.func @transform_0(%arg0: i32) -> (i32, i32, i32) {
    %c0_i32 = arith.constant 0 : i32
    %c0_i32_0 = arith.constant 0 : i32
    %c0_i32_1 = arith.constant 0 : i32
    return %arg0, %c0_i32, %c0_i32_0 : i32, i32, i32
  }
  func.func @transform_1(%arg0: i32) -> (i32, i32) {
    %c0_i32 = arith.constant 0 : i32
    %c0_i32_0 = arith.constant 0 : i32
    %c0_i32_1 = arith.constant 0 : i32
    return %c0_i32, %c0_i32_0 : i32, i32
  }
  func.func @transform_2(%arg0: i32) -> (i32, i32) {
    %c0_i32 = arith.constant 0 : i32
    %c0_i32_0 = arith.constant 0 : i32
    %c0_i32_1 = arith.constant 0 : i32
    return %c0_i32, %c0_i32_0 : i32, i32
  }
  func.func @transform_3(%arg0: i32) -> (i32, i32) {
    %c0_i32 = arith.constant 0 : i32
    %c0_i32_0 = arith.constant 0 : i32
    %c0_i32_1 = arith.constant 0 : i32
    return %c0_i32, %c0_i32_0 : i32, i32
  }
  func.func @transform_4(%arg0: i32) -> (i32, i32) {
    %c0_i32 = arith.constant 0 : i32
    %c0_i32_0 = arith.constant 0 : i32
    %c0_i32_1 = arith.constant 0 : i32
    return %c0_i32, %c0_i32_0 : i32, i32
  }
  func.func @transform_5(%arg0: i32) -> (i32, i32) {
    %c0_i32 = arith.constant 0 : i32
    %c0_i32_0 = arith.constant 0 : i32
    %c0_i32_1 = arith.constant 0 : i32
    return %c0_i32, %c0_i32_0 : i32, i32
  }
  func.func @transform_6(%arg0: i32) -> (i32, i32) {
    %c0_i32 = arith.constant 0 : i32
    %c0_i32_0 = arith.constant 0 : i32
    %c0_i32_1 = arith.constant 0 : i32
    return %c0_i32, %c0_i32_0 : i32, i32
  }
  func.func @transform_7(%arg0: i32) -> (i32, i32) {
    %c0_i32 = arith.constant 0 : i32
    %c0_i32_0 = arith.constant 0 : i32
    %c0_i32_1 = arith.constant 0 : i32
    return %c0_i32, %c0_i32_0 : i32, i32
  }
  func.func @transform_8(%arg0: i32) -> (i32, i32) {
    %c0_i32 = arith.constant 0 : i32
    %c0_i32_0 = arith.constant 0 : i32
    %c0_i32_1 = arith.constant 0 : i32
    return %c0_i32, %c0_i32_0 : i32, i32
  }
  func.func @transform_9(%arg0: i32) -> (i32, i32, i32) {
    %c0_i32 = arith.constant 0 : i32
    %c0_i32_0 = arith.constant 0 : i32
    %c0_i32_1 = arith.constant 0 : i32
    return %arg0, %c0_i32, %c0_i32_0 : i32, i32, i32
  }
}

module attributes {stable_mosaic.version = 11 : i64} {
  func.func @_mlp_kernel(%arg0: i32, %arg1: memref<2x128xbf16, #tpu.memory_space<vmem>>, %arg2: memref<128x256xbf16, #tpu.memory_space<vmem>>, %arg3: memref<1x256xf32, #tpu.memory_space<vmem>>, %arg4: memref<256x256xbf16, #tpu.memory_space<vmem>>, %arg5: memref<1x256xf32, #tpu.memory_space<vmem>>, %arg6: memref<256x1xbf16, #tpu.memory_space<vmem>>, %arg7: memref<1x1xf32, #tpu.memory_space<vmem>>, %arg8: memref<2x1xf32, #tpu.memory_space<vmem>>, %arg9: memref<2x256xf32, #tpu.memory_space<vmem>>) attributes {dimension_semantics = [#tpu.dimension_semantics<arbitrary>], iteration_bounds = array<i64: 1>, scalar_prefetch = 0 : i64, scratch_operands = 1 : i64, tpu.core_type = #tpu.core_type<tc>, window_params = [{transform_indices = @transform_0, window_bounds = array<i64: 2, 128>}, {transform_indices = @transform_1, window_bounds = array<i64: 128, 256>}, {pipeline_mode = #tpu.pipeline_mode<synchronous>, transform_indices = @transform_2, window_bounds = array<i64: 1, 256>}, {pipeline_mode = #tpu.pipeline_mode<synchronous>, transform_indices = @transform_3, window_bounds = array<i64: 256, 256>}, {pipeline_mode = #tpu.pipeline_mode<synchronous>, transform_indices = @transform_4, window_bounds = array<i64: 1, 256>}, {pipeline_mode = #tpu.pipeline_mode<synchronous>, transform_indices = @transform_5, window_bounds = array<i64: 256, 1>}, {pipeline_mode = #tpu.pipeline_mode<synchronous>, transform_indices = @transform_6, window_bounds = array<i64: 1, 1>}, {pipeline_mode = #tpu.pipeline_mode<synchronous>, transform_indices = @transform_7, window_bounds = array<i64: 2, 1>}]} {
    %c0_i32 = arith.constant 0 : i32
    %0 = arith.cmpi eq, %arg0, %c0_i32 : i32
    %1 = arith.extui %0 : i1 to i32
    %c0_i32_0 = arith.constant 0 : i32
    %2 = arith.cmpi ne, %1, %c0_i32_0 : i32
    scf.if %2 {
      %cst_10 = arith.constant 0.000000e+00 : f32
      %12 = vector.broadcast %cst_10 : f32 to vector<2x256xf32>
      %c0_11 = arith.constant 0 : index
      %c0_12 = arith.constant 0 : index
      %13 = vector.load %arg9[%c0_11, %c0_12] : memref<2x256xf32, #tpu.memory_space<vmem>>, vector<2x256xf32>
      tpu.vector_store %arg9[%c0_11, %c0_12], %12 {strides = array<i32>} : memref<2x256xf32, #tpu.memory_space<vmem>>, vector<2x256xf32>,
    } else {
    }
    %c0 = arith.constant 0 : index
    %c0_1 = arith.constant 0 : index
    %3 = vector.load %arg9[%c0, %c0_1] : memref<2x256xf32, #tpu.memory_space<vmem>>, vector<2x256xf32>
    %c0_2 = arith.constant 0 : index
    %c0_3 = arith.constant 0 : index
    %4 = vector.load %arg1[%c0_2, %c0_3] : memref<2x128xbf16, #tpu.memory_space<vmem>>, vector<2x128xbf16>
    %c0_4 = arith.constant 0 : index
    %c0_5 = arith.constant 0 : index
    %5 = vector.load %arg2[%c0_4, %c0_5] : memref<128x256xbf16, #tpu.memory_space<vmem>>, vector<128x256xbf16>
    %cst = arith.constant dense<0.000000e+00> : vector<2x256xf32>
    %6 = tpu.matmul %4, %5, %cst {dimension_numbers = #tpu.dot_dimension_numbers<[1], [0], [0], [1], [0, 0, 1, 1], [], []>} : vector<2x128xbf16>, vector<128x256xbf16>, vector<2x256xf32> -> vector<2x256xf32>
    %7 = arith.addf %3, %6 : vector<2x256xf32>
    %c0_6 = arith.constant 0 : index
    %c0_7 = arith.constant 0 : index
    %8 = vector.load %arg9[%c0_6, %c0_7] : memref<2x256xf32, #tpu.memory_space<vmem>>, vector<2x256xf32>
    tpu.vector_store %arg9[%c0_6, %c0_7], %7 {strides = array<i32>} : memref<2x256xf32, #tpu.memory_space<vmem>>, vector<2x256xf32>,
    %c0_i32_8 = arith.constant 0 : i32
    %9 = arith.cmpi eq, %arg0, %c0_i32_8 : i32
    %10 = arith.extui %9 : i1 to i32
    %c0_i32_9 = arith.constant 0 : i32
    %11 = arith.cmpi ne, %10, %c0_i32_9 : i32
    scf.if %11 {
      %c0_10 = arith.constant 0 : index
      %c0_11 = arith.constant 0 : index
      %12 = vector.load %arg9[%c0_10, %c0_11] : memref<2x256xf32, #tpu.memory_space<vmem>>, vector<2x256xf32>
      %c0_12 = arith.constant 0 : index
      %c0_13 = arith.constant 0 : index
      %13 = vector.load %arg3[%c0_12, %c0_13] : memref<1x256xf32, #tpu.memory_space<vmem>>, vector<1x256xf32>
      %14 = vector.broadcast %13 : vector<1x256xf32> to vector<2x256xf32>
      %15 = arith.addf %12, %14 : vector<2x256xf32>
      %cst_14 = arith.constant 0.000000e+00 : f32
      %16 = vector.broadcast %cst_14 : f32 to vector<2x256xf32>
      %17 = arith.maximumf %15, %16 : vector<2x256xf32>
      %18 = arith.truncf %17 : vector<2x256xf32> to vector<2x256xbf16>
      %c0_15 = arith.constant 0 : index
      %c0_16 = arith.constant 0 : index
      %19 = vector.load %arg4[%c0_15, %c0_16] : memref<256x256xbf16, #tpu.memory_space<vmem>>, vector<256x256xbf16>
      %cst_17 = arith.constant dense<0.000000e+00> : vector<2x256xf32>
      %20 = tpu.matmul %18, %19, %cst_17 {dimension_numbers = #tpu.dot_dimension_numbers<[1], [0], [0], [1], [0, 0, 1, 1], [], []>} : vector<2x256xbf16>, vector<256x256xbf16>, vector<2x256xf32> -> vector<2x256xf32>
      %c0_18 = arith.constant 0 : index
      %c0_19 = arith.constant 0 : index
      %21 = vector.load %arg5[%c0_18, %c0_19] : memref<1x256xf32, #tpu.memory_space<vmem>>, vector<1x256xf32>
      %22 = vector.broadcast %21 : vector<1x256xf32> to vector<2x256xf32>
      %23 = arith.addf %20, %22 : vector<2x256xf32>
      %cst_20 = arith.constant 0.000000e+00 : f32
      %24 = vector.broadcast %cst_20 : f32 to vector<2x256xf32>
      %25 = arith.maximumf %23, %24 : vector<2x256xf32>
      %26 = arith.truncf %25 : vector<2x256xf32> to vector<2x256xbf16>
      %c0_21 = arith.constant 0 : index
      %c0_22 = arith.constant 0 : index
      %27 = vector.load %arg6[%c0_21, %c0_22] : memref<256x1xbf16, #tpu.memory_space<vmem>>, vector<256x1xbf16>
      %cst_23 = arith.constant dense<0.000000e+00> : vector<2x1xf32>
      %28 = tpu.matmul %26, %27, %cst_23 {dimension_numbers = #tpu.dot_dimension_numbers<[1], [0], [0], [1], [0, 0, 1, 1], [], []>} : vector<2x256xbf16>, vector<256x1xbf16>, vector<2x1xf32> -> vector<2x1xf32>
      %c0_24 = arith.constant 0 : index
      %c0_25 = arith.constant 0 : index
      %29 = vector.load %arg7[%c0_24, %c0_25] : memref<1x1xf32, #tpu.memory_space<vmem>>, vector<1x1xf32>
      %30 = vector.broadcast %29 : vector<1x1xf32> to vector<2x1xf32>
      %31 = arith.addf %28, %30 : vector<2x1xf32>
      %cst_26 = arith.constant 0.000000e+00 : f32
      %32 = vector.broadcast %cst_26 : f32 to vector<2x1xf32>
      %33 = arith.subf %32, %31 : vector<2x1xf32>
      %34 = math.exp %33 : vector<2x1xf32>
      %cst_27 = arith.constant 1.000000e+00 : f32
      %35 = vector.broadcast %cst_27 : f32 to vector<2x1xf32>
      %36 = arith.addf %35, %34 : vector<2x1xf32>
      %cst_28 = arith.constant 1.000000e+00 : f32
      %37 = vector.broadcast %cst_28 : f32 to vector<2x1xf32>
      %38 = arith.divf %37, %36 : vector<2x1xf32>
      %c0_29 = arith.constant 0 : index
      %c0_30 = arith.constant 0 : index
      %39 = vector.load %arg8[%c0_29, %c0_30] : memref<2x1xf32, #tpu.memory_space<vmem>>, vector<2x1xf32>
      tpu.vector_store %arg8[%c0_29, %c0_30], %38 {strides = array<i32>} : memref<2x1xf32, #tpu.memory_space<vmem>>, vector<2x1xf32>,
    } else {
    }
    return
  }
  func.func @transform_0(%arg0: i32) -> (i32, i32) {
    %c0_i32 = arith.constant 0 : i32
    %c0_i32_0 = arith.constant 0 : i32
    return %c0_i32, %arg0 : i32, i32
  }
  func.func @transform_1(%arg0: i32) -> (i32, i32) {
    %c0_i32 = arith.constant 0 : i32
    %c0_i32_0 = arith.constant 0 : i32
    return %arg0, %c0_i32 : i32, i32
  }
  func.func @transform_2(%arg0: i32) -> (i32, i32) {
    %c0_i32 = arith.constant 0 : i32
    %c0_i32_0 = arith.constant 0 : i32
    %c0_i32_1 = arith.constant 0 : i32
    return %c0_i32, %c0_i32_0 : i32, i32
  }
  func.func @transform_3(%arg0: i32) -> (i32, i32) {
    %c0_i32 = arith.constant 0 : i32
    %c0_i32_0 = arith.constant 0 : i32
    %c0_i32_1 = arith.constant 0 : i32
    return %c0_i32, %c0_i32_0 : i32, i32
  }
  func.func @transform_4(%arg0: i32) -> (i32, i32) {
    %c0_i32 = arith.constant 0 : i32
    %c0_i32_0 = arith.constant 0 : i32
    %c0_i32_1 = arith.constant 0 : i32
    return %c0_i32, %c0_i32_0 : i32, i32
  }
  func.func @transform_5(%arg0: i32) -> (i32, i32) {
    %c0_i32 = arith.constant 0 : i32
    %c0_i32_0 = arith.constant 0 : i32
    %c0_i32_1 = arith.constant 0 : i32
    return %c0_i32, %c0_i32_0 : i32, i32
  }
  func.func @transform_6(%arg0: i32) -> (i32, i32) {
    %c0_i32 = arith.constant 0 : i32
    %c0_i32_0 = arith.constant 0 : i32
    %c0_i32_1 = arith.constant 0 : i32
    return %c0_i32, %c0_i32_0 : i32, i32
  }
  func.func @transform_7(%arg0: i32) -> (i32, i32) {
    %c0_i32 = arith.constant 0 : i32
    %c0_i32_0 = arith.constant 0 : i32
    %c0_i32_1 = arith.constant 0 : i32
    return %c0_i32, %c0_i32_0 : i32, i32
  }
}

</mosaic_0001>

<llo_original>
// kernel: cnn_forward.3
$region0: #{cnn_forward.3}
  #allocation0 [shape = 'u32[]', space=smem, size = 0x4, offset = 0x4, fixed_abs, tag = 'smem constant byte address 0x4 - core index']
  #allocation1 [shape = 'u32[144,128]{1,0:T(1,128)}', space=vmem, size = 0x12000, scoped, tag = 'internal scratch']
  #allocation2 [shape = 'f32[2,256]{1,0:T(2,128)}', space=vmem, size = 0x800, scoped, tag = 'scratch operand']
  #allocation3 [shape = 'f32[1,1]{1,0:T(1,128)S(1)}', space=vmem, size = 0x200, scoped, tag = 'scoped memory for cnn_forward.3']
  %s0 = inlined_call_operand.vmem [shape: bf16[2,128], index: 0, kind: input, shape index: {}]
  %s1 = inlined_call_operand.vmem [shape: bf16[128,256], index: 1, kind: input, shape index: {}]
  %s2 = inlined_call_operand.vmem [shape: f32[1,256], index: 2, kind: input, shape index: {}]
  %s3 = inlined_call_operand.vmem [shape: bf16[256,256], index: 3, kind: input, shape index: {}]
  %s4 = inlined_call_operand.vmem [shape: f32[1,256], index: 4, kind: input, shape index: {}]
  %s5 = inlined_call_operand.vmem [shape: bf16[256,1], index: 5, kind: input, shape index: {}]
  %s6 = inlined_call_operand.<no memory space> [shape: f32[1,1], index: 6, kind: input, shape index: {}]
  %s7 = inlined_call_operand.vmem [shape: f32[2,1], index: 7, kind: output, shape index: {}]
  %s8 = sld [smem:[#allocation0]]
  $region46: #{cnn_forward.3} parent=0
    _
  %s10 = ssub.s32 1, %s8
  %s11 = scalar_select 0, %s10, %s8
  %v12 = vstv %s6
  %13 = vst [vmem:[#allocation3] sm:$0x1] %v12
  // Predicated region
  $region2: #{cnn_forward.3} parent=0 // pred_check
    _
  $region3: #{cnn_forward.3} parent=0 // pred_check_branch
    %15 = sbr.rel (0) target = $region5
  $region4: #{cnn_forward.3} parent=0 // pred_region
    _
  $region5: #{cnn_forward.3} parent=0 // pred_fallthru
    _
  // Predicated region
  $region6: #{cnn_forward.3} parent=0 // pred_check
    _
  $region7: #{cnn_forward.3} parent=0 // pred_check_branch
    %17 = sbr.rel (0) target = $region9
  $region8: #{cnn_forward.3} parent=0 // pred_region
    _
  $region9: #{cnn_forward.3} parent=0 // pred_fallthru
    _
  // Predicated region
  $region10: #{cnn_forward.3} parent=0 // pred_check
    _
  $region11: #{cnn_forward.3} parent=0 // pred_check_branch
    %19 = sbr.rel (0) target = $region13
  $region12: #{cnn_forward.3} parent=0 // pred_region
    _
  $region13: #{cnn_forward.3} parent=0 // pred_fallthru
    _
  // Predicated region
  $region14: #{cnn_forward.3} parent=0 // pred_check
    _
  $region15: #{cnn_forward.3} parent=0 // pred_check_branch
    %21 = sbr.rel (0) target = $region17
  $region16: #{cnn_forward.3} parent=0 // pred_region
    _
  $region17: #{cnn_forward.3} parent=0 // pred_fallthru
    _
  // Predicated region
  $region18: #{cnn_forward.3} parent=0 // pred_check
    _
  $region19: #{cnn_forward.3} parent=0 // pred_check_branch
    %23 = sbr.rel (0) target = $region21
  $region20: #{cnn_forward.3} parent=0 // pred_region
    _
  $region21: #{cnn_forward.3} parent=0 // pred_fallthru
    _
  // Predicated region
  $region22: #{cnn_forward.3} parent=0 // pred_check
    _
  $region23: #{cnn_forward.3} parent=0 // pred_check_branch
    %25 = sbr.rel (0) target = $region25
  $region24: #{cnn_forward.3} parent=0 // pred_region
    _
  $region25: #{cnn_forward.3} parent=0 // pred_fallthru
    _
  // Predicated region
  $region26: #{cnn_forward.3} parent=0 // pred_check
    _
  $region27: #{cnn_forward.3} parent=0 // pred_check_branch
    %27 = sbr.rel (0) target = $region29
  $region28: #{cnn_forward.3} parent=0 // pred_region
    _
  $region29: #{cnn_forward.3} parent=0 // pred_fallthru
    _
  %p29 = scmp.eq.s32.totalorder 0, 0
  // Predicated region
  $region30: #{cnn_forward.3} parent=0 // pred_check
    %p30 = pneg %p29
  $region31: #{cnn_forward.3} parent=0 // pred_check_branch
    %32 = sbr.rel (%p30) target = $region33
  $region32: #{cnn_forward.3} parent=0 // pred_region
    %33 = vst [vmem:[#allocation2] sm:$0xf] 0.0
  $region33: #{cnn_forward.3} parent=0 // pred_fallthru
    _
  %v34 = vld [vmem:[#allocation2] sm:$0xf]
  %v35 = vld [vmem:[%s0] sm:$0x1]
  %v36 = vld [vmem:[%s1] sm:$0xff]
  %v37 = vld [vmem:[%s1 + $0x8] sm:$0xff]
  %v38 = vld [vmem:[%s1 + $0x10] sm:$0xff]
  %v39 = vld [vmem:[%s1 + $0x18] sm:$0xff]
  %v40 = vld [vmem:[%s1 + $0x20] sm:$0xff]
  %v41 = vld [vmem:[%s1 + $0x28] sm:$0xff]
  %v42 = vld [vmem:[%s1 + $0x30] sm:$0xff]
  %v43 = vld [vmem:[%s1 + $0x38] sm:$0xff]
  %v44 = vld [vmem:[%s1 + $0x40] sm:$0xff]
  %v45 = vld [vmem:[%s1 + $0x48] sm:$0xff]
  %v46 = vld [vmem:[%s1 + $0x50] sm:$0xff]
  %v47 = vld [vmem:[%s1 + $0x58] sm:$0xff]
  %v48 = vld [vmem:[%s1 + $0x60] sm:$0xff]
  %v49 = vld [vmem:[%s1 + $0x68] sm:$0xff]
  %v50 = vld [vmem:[%s1 + $0x70] sm:$0xff]
  %v51 = vld [vmem:[%s1 + $0x78] sm:$0xff]
  %v68 = vunpack.c.l.b16 %v36
  %v69 = vunpack.c.h.b16 %v36
  %v70 = vunpack.c.l.b16 %v37
  %v71 = vunpack.c.h.b16 %v37
  %v72 = vunpack.c.l.b16 %v38
  %v73 = vunpack.c.h.b16 %v38
  %v74 = vunpack.c.l.b16 %v39
  %v75 = vunpack.c.h.b16 %v39
  %v76 = vunpack.c.l.b16 %v40
  %v77 = vunpack.c.h.b16 %v40
  %v78 = vunpack.c.l.b16 %v41
  %v79 = vunpack.c.h.b16 %v41
  %v80 = vunpack.c.l.b16 %v42
  %v81 = vunpack.c.h.b16 %v42
  %v82 = vunpack.c.l.b16 %v43
  %v83 = vunpack.c.h.b16 %v43
  %v84 = vunpack.c.l.b16 %v44
  %v85 = vunpack.c.h.b16 %v44
  %v86 = vunpack.c.l.b16 %v45
  %v87 = vunpack.c.h.b16 %v45
  %v88 = vunpack.c.l.b16 %v46
  %v89 = vunpack.c.h.b16 %v46
  %v90 = vunpack.c.l.b16 %v47
  %v91 = vunpack.c.h.b16 %v47
  %v92 = vunpack.c.l.b16 %v48
  %v93 = vunpack.c.h.b16 %v48
  %v94 = vunpack.c.l.b16 %v49
  %v95 = vunpack.c.h.b16 %v49
  %v96 = vunpack.c.l.b16 %v50
  %v97 = vunpack.c.h.b16 %v50
  %v98 = vunpack.c.l.b16 %v51
  %v99 = vunpack.c.h.b16 %v51
  %v100 = vpack.c.b16 %v70, %v68
  %v101 = vpack.c.b16 %v71, %v69
  %v102 = vpack.c.b16 %v74, %v72
  %v103 = vpack.c.b16 %v75, %v73
  %v104 = vpack.c.b16 %v78, %v76
  %v105 = vpack.c.b16 %v79, %v77
  %v106 = vpack.c.b16 %v82, %v80
  %v107 = vpack.c.b16 %v83, %v81
  %v108 = vpack.c.b16 %v86, %v84
  %v109 = vpack.c.b16 %v87, %v85
  %v110 = vpack.c.b16 %v90, %v88
  %v111 = vpack.c.b16 %v91, %v89
  %v112 = vpack.c.b16 %v94, %v92
  %v113 = vpack.c.b16 %v95, %v93
  %v114 = vpack.c.b16 %v98, %v96
  %v115 = vpack.c.b16 %v99, %v97
  %132 = vmatprep.subr.bf16.mxu0 %v101
  %133 = vmatpush1.bf16.msra.mxu0 %v100
  %134 = vmatprep.subr.bf16.mxu0 %v103
  %135 = vmatpush1.bf16.msra.mxu0 %v102
  %136 = vmatprep.subr.bf16.mxu0 %v105
  %137 = vmatpush1.bf16.msra.mxu0 %v104
  %138 = vmatprep.subr.bf16.mxu0 %v107
  %139 = vmatpush1.bf16.msra.mxu0 %v106
  %140 = vmatprep.subr.bf16.mxu0 %v109
  %141 = vmatpush1.bf16.msra.mxu0 %v108
  %142 = vmatprep.subr.bf16.mxu0 %v111
  %143 = vmatpush1.bf16.msra.mxu0 %v110
  %144 = vmatprep.subr.bf16.mxu0 %v113
  %145 = vmatpush1.bf16.msra.mxu0 %v112
  %146 = vmatprep.subr.bf16.mxu0 %v115
  %147 = vmatpush1.bf16.msra.mxu0 %v114
  %148 = vmatprep.subr.bf16.mxu0 0
  %149 = vmatpush1.bf16.msra.mxu0 0
  %150 = vmatprep.subr.bf16.mxu0 0
  %151 = vmatpush1.bf16.msra.mxu0 0
  %152 = vmatprep.subr.bf16.mxu0 0
  %153 = vmatpush1.bf16.msra.mxu0 0
  %154 = vmatprep.subr.bf16.mxu0 0
  %155 = vmatpush1.bf16.msra.mxu0 0
  %156 = vmatprep.subr.bf16.mxu0 0
  %157 = vmatpush1.bf16.msra.mxu0 0
  %158 = vmatprep.subr.bf16.mxu0 0
  %159 = vmatpush1.bf16.msra.mxu0 0
  %160 = vmatprep.subr.bf16.mxu0 0
  %161 = vmatpush1.bf16.msra.mxu0 0
  %162 = vmatprep.subr.bf16.mxu0 0
  %163 = vmatpush1.bf16.msra.mxu0 0
  %164 = vmatprep.mubr.bf16.mxu0 0
  %165 = vmatmul.mubr.bf16.gmra.mrb[0].mxu0 %v35
  %v166 = vpop.f32.mrb[0].mxu0
  %v167 = vadd.f32 0.0, %v166
  %v168 = vpop.f32.mrb[0].mxu0
  %v169 = vadd.f32 0.0, %v168
  %v170 = vpop.f32.mrb[0].mxu0
  %v171 = vpop.f32.mrb[0].mxu0
  %172 = vdwg.mxu0
  %v175 = vcombine.low %v167, %v169
  %v177 = vunpack.c.l.s4 1983009808
  %v178 = vunpack.c.0.s8 %v177
  %v179 = vlaneseq
  %v180 = vshrl.u32 %v179, 7
  %v181 = vsub.s32 %v178, %v180
  %v182 = vrot.slane %v175, %v181
  %v184 = vadd.f32 %v34, %v182
  %185 = vst [vmem:[#allocation2] sm:$0xf] %v184
  // Predicated region
  $region34: #{cnn_forward.3} parent=0 // pred_check
    %p186 = pneg %p29
  $region35: #{cnn_forward.3} parent=0 // pred_check_branch
    %188 = sbr.rel (%p186) target = $region37
  $region36: #{cnn_forward.3} parent=0 // pred_region
    %v189 = vld [vmem:[#allocation2] sm:$0xf]
    %v190 = vld [vmem:[%s2] sm:$0x3]
    %v192 = vlaneseq
    %v193 = vshrl.u32 %v192, 7
    %v194 = vsub.s32 0, %v193
    %v195 = vrot.slane %v190, %v194
    %v196 = vlaneseq
    %v197 = vshrl.u32 %v196, 7
    %v198 = vsub.s32 1, %v197
    %v199 = vrot.slane %v190, %v198
    %v200 = vcombine.low %v195, %v199
    %v202 = vunpack.c.l.s4 1983009808
    %v203 = vunpack.c.0.s8 %v202
    %v204 = vlaneseq
    %v205 = vshrl.u32 %v204, 7
    %v206 = vsub.s32 %v203, %v205
    %v207 = vrot.slane %v200, %v206
    %v209 = vadd.f32 %v189, %v207
    %v210 = vmax.f32 %v209, 0.0
    %v213 = vunpack.c.l.s4 1983009808
    %v214 = vunpack.c.0.s8 %v213
    %v215 = vlaneseq
    %v216 = vshrl.u32 %v215, 7
    %v217 = vsub.s32 %v214, %v216
    %v218 = vrot.slane %v210, %v217
    %v219 = vcombine.high %v218, %v218
    %v222 = vpack.c.bf16 %v218, %v218
    %v223 = vpack.c.bf16 %v219, %v219
    %v224 = vld [vmem:[%s3] sm:$0xff]
    %v225 = vld [vmem:[%s3 + $0x8] sm:$0xff]
    %v226 = vld [vmem:[%s3 + $0x10] sm:$0xff]
    %v227 = vld [vmem:[%s3 + $0x18] sm:$0xff]
    %v228 = vld [vmem:[%s3 + $0x20] sm:$0xff]
    %v229 = vld [vmem:[%s3 + $0x28] sm:$0xff]
    %v230 = vld [vmem:[%s3 + $0x30] sm:$0xff]
    %v231 = vld [vmem:[%s3 + $0x38] sm:$0xff]
    %v232 = vld [vmem:[%s3 + $0x40] sm:$0xff]
    %v233 = vld [vmem:[%s3 + $0x48] sm:$0xff]
    %v234 = vld [vmem:[%s3 + $0x50] sm:$0xff]
    %v235 = vld [vmem:[%s3 + $0x58] sm:$0xff]
    %v236 = vld [vmem:[%s3 + $0x60] sm:$0xff]
    %v237 = vld [vmem:[%s3 + $0x68] sm:$0xff]
    %v238 = vld [vmem:[%s3 + $0x70] sm:$0xff]
    %v239 = vld [vmem:[%s3 + $0x78] sm:$0xff]
    %v240 = vld [vmem:[%s3 + $0x80] sm:$0xff]
    %v241 = vld [vmem:[%s3 + $0x88] sm:$0xff]
    %v242 = vld [vmem:[%s3 + $0x90] sm:$0xff]
    %v243 = vld [vmem:[%s3 + $0x98] sm:$0xff]
    %v244 = vld [vmem:[%s3 + $0xa0] sm:$0xff]
    %v245 = vld [vmem:[%s3 + $0xa8] sm:$0xff]
    %v246 = vld [vmem:[%s3 + $0xb0] sm:$0xff]
    %v247 = vld [vmem:[%s3 + $0xb8] sm:$0xff]
    %v248 = vld [vmem:[%s3 + $0xc0] sm:$0xff]
    %v249 = vld [vmem:[%s3 + $0xc8] sm:$0xff]
    %v250 = vld [vmem:[%s3 + $0xd0] sm:$0xff]
    %v251 = vld [vmem:[%s3 + $0xd8] sm:$0xff]
    %v252 = vld [vmem:[%s3 + $0xe0] sm:$0xff]
    %v253 = vld [vmem:[%s3 + $0xe8] sm:$0xff]
    %v254 = vld [vmem:[%s3 + $0xf0] sm:$0xff]
    %v255 = vld [vmem:[%s3 + $0xf8] sm:$0xff]
    %v256 = vld [vmem:[%s4] sm:$0x3]
    %v258 = vlaneseq
    %v259 = vshrl.u32 %v258, 7
    %v260 = vsub.s32 0, %v259
    %v261 = vrot.slane %v256, %v260
    %v262 = vlaneseq
    %v263 = vshrl.u32 %v262, 7
    %v264 = vsub.s32 1, %v263
    %v265 = vrot.slane %v256, %v264
    %v300 = vunpack.c.l.b16 %v224
    %v301 = vunpack.c.h.b16 %v224
    %v302 = vunpack.c.l.b16 %v225
    %v303 = vunpack.c.h.b16 %v225
    %v304 = vunpack.c.l.b16 %v226
    %v305 = vunpack.c.h.b16 %v226
    %v306 = vunpack.c.l.b16 %v227
    %v307 = vunpack.c.h.b16 %v227
    %v308 = vunpack.c.l.b16 %v228
    %v309 = vunpack.c.h.b16 %v228
    %v310 = vunpack.c.l.b16 %v229
    %v311 = vunpack.c.h.b16 %v229
    %v312 = vunpack.c.l.b16 %v230
    %v313 = vunpack.c.h.b16 %v230
    %v314 = vunpack.c.l.b16 %v231
    %v315 = vunpack.c.h.b16 %v231
    %v316 = vunpack.c.l.b16 %v232
    %v317 = vunpack.c.h.b16 %v232
    %v318 = vunpack.c.l.b16 %v233
    %v319 = vunpack.c.h.b16 %v233
    %v320 = vunpack.c.l.b16 %v234
    %v321 = vunpack.c.h.b16 %v234
    %v322 = vunpack.c.l.b16 %v235
    %v323 = vunpack.c.h.b16 %v235
    %v324 = vunpack.c.l.b16 %v236
    %v325 = vunpack.c.h.b16 %v236
    %v326 = vunpack.c.l.b16 %v237
    %v327 = vunpack.c.h.b16 %v237
    %v328 = vunpack.c.l.b16 %v238
    %v329 = vunpack.c.h.b16 %v238
    %v330 = vunpack.c.l.b16 %v239
    %v331 = vunpack.c.h.b16 %v239
    %v332 = vunpack.c.l.b16 %v240
    %v333 = vunpack.c.h.b16 %v240
    %v334 = vunpack.c.l.b16 %v241
    %v335 = vunpack.c.h.b16 %v241
    %v336 = vunpack.c.l.b16 %v242
    %v337 = vunpack.c.h.b16 %v242
    %v338 = vunpack.c.l.b16 %v243
    %v339 = vunpack.c.h.b16 %v243
    %v340 = vunpack.c.l.b16 %v244
    %v341 = vunpack.c.h.b16 %v244
    %v342 = vunpack.c.l.b16 %v245
    %v343 = vunpack.c.h.b16 %v245
    %v344 = vunpack.c.l.b16 %v246
    %v345 = vunpack.c.h.b16 %v246
    %v346 = vunpack.c.l.b16 %v247
    %v347 = vunpack.c.h.b16 %v247
    %v348 = vunpack.c.l.b16 %v248
    %v349 = vunpack.c.h.b16 %v248
    %v350 = vunpack.c.l.b16 %v249
    %v351 = vunpack.c.h.b16 %v249
    %v352 = vunpack.c.l.b16 %v250
    %v353 = vunpack.c.h.b16 %v250
    %v354 = vunpack.c.l.b16 %v251
    %v355 = vunpack.c.h.b16 %v251
    %v356 = vunpack.c.l.b16 %v252
    %v357 = vunpack.c.h.b16 %v252
    %v358 = vunpack.c.l.b16 %v253
    %v359 = vunpack.c.h.b16 %v253
    %v360 = vunpack.c.l.b16 %v254
    %v361 = vunpack.c.h.b16 %v254
    %v362 = vunpack.c.l.b16 %v255
    %v363 = vunpack.c.h.b16 %v255
    %v364 = vpack.c.b16 %v302, %v300
    %v365 = vpack.c.b16 %v303, %v301
    %v366 = vpack.c.b16 %v306, %v304
    %v367 = vpack.c.b16 %v307, %v305
    %v368 = vpack.c.b16 %v310, %v308
    %v369 = vpack.c.b16 %v311, %v309
    %v370 = vpack.c.b16 %v314, %v312
    %v371 = vpack.c.b16 %v315, %v313
    %v372 = vpack.c.b16 %v318, %v316
    %v373 = vpack.c.b16 %v319, %v317
    %v374 = vpack.c.b16 %v322, %v320
    %v375 = vpack.c.b16 %v323, %v321
    %v376 = vpack.c.b16 %v326, %v324
    %v377 = vpack.c.b16 %v327, %v325
    %v378 = vpack.c.b16 %v330, %v328
    %v379 = vpack.c.b16 %v331, %v329
    %v380 = vpack.c.b16 %v334, %v332
    %v381 = vpack.c.b16 %v335, %v333
    %v382 = vpack.c.b16 %v338, %v336
    %v383 = vpack.c.b16 %v339, %v337
    %v384 = vpack.c.b16 %v342, %v340
    %v385 = vpack.c.b16 %v343, %v341
    %v386 = vpack.c.b16 %v346, %v344
    %v387 = vpack.c.b16 %v347, %v345
    %v388 = vpack.c.b16 %v350, %v348
    %v389 = vpack.c.b16 %v351, %v349
    %v390 = vpack.c.b16 %v354, %v352
    %v391 = vpack.c.b16 %v355, %v353
    %v392 = vpack.c.b16 %v358, %v356
    %v393 = vpack.c.b16 %v359, %v357
    %v394 = vpack.c.b16 %v362, %v360
    %v395 = vpack.c.b16 %v363, %v361
    %428 = vmatprep.subr.bf16.mxu0 %v365
    %429 = vmatpush1.bf16.msra.mxu0 %v364
    %430 = vmatprep.subr.bf16.mxu0 %v367
    %431 = vmatpush1.bf16.msra.mxu0 %v366
    %432 = vmatprep.subr.bf16.mxu0 %v369
    %433 = vmatpush1.bf16.msra.mxu0 %v368
    %434 = vmatprep.subr.bf16.mxu0 %v371
    %435 = vmatpush1.bf16.msra.mxu0 %v370
    %436 = vmatprep.subr.bf16.mxu0 %v373
    %437 = vmatpush1.bf16.msra.mxu0 %v372
    %438 = vmatprep.subr.bf16.mxu0 %v375
    %439 = vmatpush1.bf16.msra.mxu0 %v374
    %440 = vmatprep.subr.bf16.mxu0 %v377
    %441 = vmatpush1.bf16.msra.mxu0 %v376
    %442 = vmatprep.subr.bf16.mxu0 %v379
    %443 = vmatpush1.bf16.msra.mxu0 %v378
    %444 = vmatprep.subr.bf16.mxu0 %v381
    %445 = vmatpush1.bf16.msra.mxu0 %v380
    %446 = vmatprep.subr.bf16.mxu0 %v383
    %447 = vmatpush1.bf16.msra.mxu0 %v382
    %448 = vmatprep.subr.bf16.mxu0 %v385
    %449 = vmatpush1.bf16.msra.mxu0 %v384
    %450 = vmatprep.subr.bf16.mxu0 %v387
    %451 = vmatpush1.bf16.msra.mxu0 %v386
    %452 = vmatprep.subr.bf16.mxu0 %v389
    %453 = vmatpush1.bf16.msra.mxu0 %v388
    %454 = vmatprep.subr.bf16.mxu0 %v391
    %455 = vmatpush1.bf16.msra.mxu0 %v390
    %456 = vmatprep.subr.bf16.mxu0 %v393
    %457 = vmatpush1.bf16.msra.mxu0 %v392
    %458 = vmatprep.subr.bf16.mxu0 %v395
    %459 = vmatpush1.bf16.msra.mxu0 %v394
    %460 = vmatprep.mubr.bf16.mxu0 %v223
    %461 = vmatmul.mubr.bf16.gmra.mrb[0].mxu0 %v222
    %v462 = vpop.f32.mrb[0].mxu0
    %v463 = vadd.f32 %v261, %v462
    %v464 = vpop.f32.mrb[0].mxu0
    %v465 = vadd.f32 %v265, %v464
    %v466 = vpop.f32.mrb[0].mxu0
    %v467 = vpop.f32.mrb[0].mxu0
    %468 = vdwg.mxu0
    %v469 = vmax.f32 %v463, 0.0
    %v470 = vmax.f32 %v465, 0.0
    %v471 = vpack.c.bf16 %v469, %v469
    %v472 = vpack.c.bf16 %v470, %v470
    %v473 = vld [vmem:[%s5] sm:$0xf]
    %v474 = vld [vmem:[%s5 + $0x4] sm:$0xf]
    %v475 = vld [vmem:[%s5 + $0x8] sm:$0xf]
    %v476 = vld [vmem:[%s5 + $0xc] sm:$0xf]
    %v477 = vld [vmem:[%s5 + $0x10] sm:$0xf]
    %v478 = vld [vmem:[%s5 + $0x14] sm:$0xf]
    %v479 = vld [vmem:[%s5 + $0x18] sm:$0xf]
    %v480 = vld [vmem:[%s5 + $0x1c] sm:$0xf]
    %v481 = vld [vmem:[%s5 + $0x20] sm:$0xf]
    %v482 = vld [vmem:[%s5 + $0x24] sm:$0xf]
    %v483 = vld [vmem:[%s5 + $0x28] sm:$0xf]
    %v484 = vld [vmem:[%s5 + $0x2c] sm:$0xf]
    %v485 = vld [vmem:[%s5 + $0x30] sm:$0xf]
    %v486 = vld [vmem:[%s5 + $0x34] sm:$0xf]
    %v487 = vld [vmem:[%s5 + $0x38] sm:$0xf]
    %v488 = vld [vmem:[%s5 + $0x3c] sm:$0xf]
    %v489 = vld [vmem:[%s5 + $0x40] sm:$0xf]
    %v490 = vld [vmem:[%s5 + $0x44] sm:$0xf]
    %v491 = vld [vmem:[%s5 + $0x48] sm:$0xf]
    %v492 = vld [vmem:[%s5 + $0x4c] sm:$0xf]
    %v493 = vld [vmem:[%s5 + $0x50] sm:$0xf]
    %v494 = vld [vmem:[%s5 + $0x54] sm:$0xf]
    %v495 = vld [vmem:[%s5 + $0x58] sm:$0xf]
    %v496 = vld [vmem:[%s5 + $0x5c] sm:$0xf]
    %v497 = vld [vmem:[%s5 + $0x60] sm:$0xf]
    %v498 = vld [vmem:[%s5 + $0x64] sm:$0xf]
    %v499 = vld [vmem:[%s5 + $0x68] sm:$0xf]
    %v500 = vld [vmem:[%s5 + $0x6c] sm:$0xf]
    %v501 = vld [vmem:[%s5 + $0x70] sm:$0xf]
    %v502 = vld [vmem:[%s5 + $0x74] sm:$0xf]
    %v503 = vld [vmem:[%s5 + $0x78] sm:$0xf]
    %v504 = vld [vmem:[%s5 + $0x7c] sm:$0xf]
    %v505 = vld [vmem:[#allocation3] sm:$0x1]
    %v507 = vlaneseq
    %v508 = vshrl.u32 %v507, 7
    %v509 = vsub.s32 0, %v508
    %v510 = vrot.slane %v505, %v509
    %v544 = vunpack.c.l.b16 %v473
    %v545 = vunpack.c.l.b16 %v474
    %v546 = vunpack.c.l.b16 %v475
    %v547 = vunpack.c.l.b16 %v476
    %v548 = vunpack.c.l.b16 %v477
    %v549 = vunpack.c.l.b16 %v478
    %v550 = vunpack.c.l.b16 %v479
    %v551 = vunpack.c.l.b16 %v480
    %v552 = vunpack.c.l.b16 %v481
    %v553 = vunpack.c.l.b16 %v482
    %v554 = vunpack.c.l.b16 %v483
    %v555 = vunpack.c.l.b16 %v484
    %v556 = vunpack.c.l.b16 %v485
    %v557 = vunpack.c.l.b16 %v486
    %v558 = vunpack.c.l.b16 %v487
    %v559 = vunpack.c.l.b16 %v488
    %v560 = vunpack.c.l.b16 %v489
    %v561 = vunpack.c.l.b16 %v490
    %v562 = vunpack.c.l.b16 %v491
    %v563 = vunpack.c.l.b16 %v492
    %v564 = vunpack.c.l.b16 %v493
    %v565 = vunpack.c.l.b16 %v494
    %v566 = vunpack.c.l.b16 %v495
    %v567 = vunpack.c.l.b16 %v496
    %v568 = vunpack.c.l.b16 %v497
    %v569 = vunpack.c.l.b16 %v498
    %v570 = vunpack.c.l.b16 %v499
    %v571 = vunpack.c.l.b16 %v500
    %v572 = vunpack.c.l.b16 %v501
    %v573 = vunpack.c.l.b16 %v502
    %v574 = vunpack.c.l.b16 %v503
    %v575 = vunpack.c.l.b16 %v504
    %v576 = vpack.c.b16 %v545, %v544
    %v577 = vpack.c.b16 %v547, %v546
    %v578 = vpack.c.b16 %v549, %v548
    %v579 = vpack.c.b16 %v551, %v550
    %v580 = vpack.c.b16 %v553, %v552
    %v581 = vpack.c.b16 %v555, %v554
    %v582 = vpack.c.b16 %v557, %v556
    %v583 = vpack.c.b16 %v559, %v558
    %v584 = vpack.c.b16 %v561, %v560
    %v585 = vpack.c.b16 %v563, %v562
    %v586 = vpack.c.b16 %v565, %v564
    %v587 = vpack.c.b16 %v567, %v566
    %v588 = vpack.c.b16 %v569, %v568
    %v589 = vpack.c.b16 %v571, %v570
    %v590 = vpack.c.b16 %v573, %v572
    %v591 = vpack.c.b16 %v575, %v574
    %608 = vmatprep.subr.bf16.mxu0 0
    %609 = vmatpush1.bf16.msra.mxu0 %v576
    %610 = vmatprep.subr.bf16.mxu0 0
    %611 = vmatpush1.bf16.msra.mxu0 %v577
    %612 = vmatprep.subr.bf16.mxu0 0
    %613 = vmatpush1.bf16.msra.mxu0 %v578
    %614 = vmatprep.subr.bf16.mxu0 0
    %615 = vmatpush1.bf16.msra.mxu0 %v579
    %616 = vmatprep.subr.bf16.mxu0 0
    %617 = vmatpush1.bf16.msra.mxu0 %v580
    %618 = vmatprep.subr.bf16.mxu0 0
    %619 = vmatpush1.bf16.msra.mxu0 %v581
    %620 = vmatprep.subr.bf16.mxu0 0
    %621 = vmatpush1.bf16.msra.mxu0 %v582
    %622 = vmatprep.subr.bf16.mxu0 0
    %623 = vmatpush1.bf16.msra.mxu0 %v583
    %624 = vmatprep.subr.bf16.mxu0 0
    %625 = vmatpush1.bf16.msra.mxu0 %v584
    %626 = vmatprep.subr.bf16.mxu0 0
    %627 = vmatpush1.bf16.msra.mxu0 %v585
    %628 = vmatprep.subr.bf16.mxu0 0
    %629 = vmatpush1.bf16.msra.mxu0 %v586
    %630 = vmatprep.subr.bf16.mxu0 0
    %631 = vmatpush1.bf16.msra.mxu0 %v587
    %632 = vmatprep.subr.bf16.mxu0 0
    %633 = vmatpush1.bf16.msra.mxu0 %v588
    %634 = vmatprep.subr.bf16.mxu0 0
    %635 = vmatpush1.bf16.msra.mxu0 %v589
    %636 = vmatprep.subr.bf16.mxu0 0
    %637 = vmatpush1.bf16.msra.mxu0 %v590
    %638 = vmatprep.subr.bf16.mxu0 0
    %639 = vmatpush1.bf16.msra.mxu0 %v591
    %640 = vmatprep.mubr.bf16.mxu0 %v472
    %641 = vmatmul.mubr.bf16.gmra.mrb[0].mxu0 %v471
    %v642 = vpop.f32.mrb[0].mxu0
    %v643 = vadd.f32 %v510, %v642
    %v644 = vpop.f32.mrb[0].mxu0
    %v645 = vpop.f32.mrb[0].mxu0
    %v646 = vpop.f32.mrb[0].mxu0
    %647 = vdwg.mxu0
    %v648 = vsub.f32 0.0, %v643
    %v649 = vmul.f32 %v648, 1.442695
    %v650 = vpow.pop %v649
    %v651 = vadd.f32 %v650, 1.0
    %v652 = vrcp.pop %v651
    %v653 = vmul.f32 1.0, %v652
    %vm654 = vcmask 1024
    %655 = vst.msk [vmem:[%s7] sm:$0x3] %vm654, %v653
  $region37: #{cnn_forward.3} parent=0 // pred_fallthru
    _
  // Predicated region
  $region38: #{cnn_forward.3} parent=0 // pred_check
    _
  $region39: #{cnn_forward.3} parent=0 // pred_check_branch
    %657 = sbr.rel (0) target = $region41
  $region40: #{cnn_forward.3} parent=0 // pred_region
    _
  $region41: #{cnn_forward.3} parent=0 // pred_fallthru
    _
  // Predicated region
  $region42: #{cnn_forward.3} parent=0 // pred_check
    _
  $region43: #{cnn_forward.3} parent=0 // pred_check_branch
    %659 = sbr.rel (0) target = $region45
  $region44: #{cnn_forward.3} parent=0 // pred_region
    _
  $region45: #{cnn_forward.3} parent=0 // pred_fallthru
    _

// kernel: cnn_forward.2
$region0: #{cnn_forward.2}
  #allocation0 [shape = 'u32[]', space=smem, size = 0x4, offset = 0x4, fixed_abs, tag = 'smem constant byte address 0x4 - core index']
  #allocation1 [shape = 'u32[144,128]{1,0:T(1,128)}', space=vmem, size = 0x12000, scoped, tag = 'internal scratch']
  #allocation2 [shape = 'bf16[64,20]{1,0:T(16,128)(2,1)}', space=vmem, size = 0x4000, scoped, tag = 'scratch operand']
  #allocation3 [shape = 'bf16[53,256]{1,0:T(8,128)(2,1)}', space=vmem, size = 0x7000, scoped, tag = 'scratch operand']
  #allocation4 [shape = 'f32[8,64]{1,0:T(8,128)}', space=vmem, size = 0x1000, scoped, tag = 'scratch operand']
  #allocation5 [shape = 'bf16[53,64]{1,0:T(8,128)(2,1)}', space=vmem, size = 0x3800, scoped, tag = 'scratch operand']
  #allocation6 [shape = 'f32[42,64]{1,0:T(8,128)}', space=vmem, size = 0x6000, scoped, tag = 'scratch operand']
  #allocation7 [shape = 'bf16[14,64]{1,0:T(8,128)(2,1)}', space=vmem, size = 0x1000, scoped, tag = 'scratch operand']
  #allocation8 [shape = 'bf16[12,32]{1,0:T(8,128)(2,1)}', space=vmem, size = 0x1000, scoped, tag = 'scratch operand']
  #allocation9 [shape = 'f32[10,32]{1,0:T(8,128)}', space=vmem, size = 0x2000, scoped, tag = 'scratch operand']
  %s0 = inlined_call_operand.vmem [shape: f32[2,64,20], index: 0, kind: input, shape index: {}]
  %s1 = inlined_call_operand.vmem [shape: bf16[240,64], index: 1, kind: input, shape index: {}]
  %s2 = inlined_call_operand.vmem [shape: f32[1,64], index: 2, kind: input, shape index: {}]
  %s3 = inlined_call_operand.vmem [shape: bf16[768,64], index: 3, kind: input, shape index: {}]
  %s4 = inlined_call_operand.vmem [shape: f32[1,64], index: 4, kind: input, shape index: {}]
  %s5 = inlined_call_operand.vmem [shape: bf16[192,32], index: 5, kind: input, shape index: {}]
  %s6 = inlined_call_operand.vmem [shape: f32[1,32], index: 6, kind: input, shape index: {}]
  %s7 = inlined_call_operand.vmem [shape: bf16[96,32], index: 7, kind: input, shape index: {}]
  %s8 = inlined_call_operand.vmem [shape: f32[1,32], index: 8, kind: input, shape index: {}]
  %s9 = inlined_call_operand.vmem [shape: bf16[2,3,32], index: 9, kind: output, shape index: {}]
  %s10 = sld [smem:[#allocation0]]
  $region69: #{cnn_forward.2} parent=0
    _
  %s12 = ssub.s32 1, %s10
  %s13 = scalar_select 0, %s12, %s10
  loop: start=0, step=1, limit=4
  $region2: #{cnn_forward.2} parent=0 // loop_pre_header
    _
  $region3: #{cnn_forward.2} parent=0 // loop_header
    %s15 = sphi 0, %s19
    %p16 = scmp.ge.s32.totalorder %s15, 4
    %s25 = sphi 0, %s27
    %s28 = sphi 0, %s25
    %s29 = sphi 0, %s28
    %s45 = sphi 0, %s29
    %s49 = sphi 0, %s49
    %s51 = sphi 0, %s49
    %s52 = sphi 0, %s51
    %s66 = sphi 0, %s52
    %s70 = sphi 0, %s70
    %s72 = sphi 0, %s70
    %s73 = sphi 0, %s72
    %s87 = sphi 0, %s73
    %s91 = sphi 0, %s91
    %s93 = sphi 0, %s91
    %s94 = sphi 0, %s93
    %s108 = sphi 0, %s94
    %s112 = sphi 0, %s112
    %s114 = sphi 0, %s112
    %s115 = sphi 0, %s114
    %s129 = sphi 0, %s115
    %s133 = sphi 0, %s133
    %s135 = sphi 0, %s133
    %s136 = sphi 0, %s135
    %s150 = sphi 0, %s136
    %s154 = sphi 0, %s154
    %s156 = sphi 0, %s154
    %s157 = sphi 0, %s156
    %s171 = sphi 0, %s157
    %s175 = sphi 0, %s175
    %s177 = sphi 0, %s175
    %s178 = sphi 0, %s177
    %s192 = sphi 0, %s178
    %s196 = sphi 0, %s196
    %s198 = sphi 0, %s196
    %s199 = sphi 0, %s198
    %s213 = sphi 0, %s199
    %s219 = sphi 0, %s221
    %s222 = sphi 0, %s219
    %s223 = sphi 0, %s222
    %s239 = sphi 0, %s223
  $region4: #{cnn_forward.2} parent=0 // loop_header_branch
    %18 = sbr.rel (%p16) target = $region8
  $region5: #{cnn_forward.2} parent=0 // loop_body
    %s20 = ssub.s32 %s15, 1
    %s21 = ssub.s32 %s15, 2
    %s22 = sadd.s32 %s15, 1
    %s23 = ssub.s32 %s15, %s22
    %p24 = scmp.eq.s32.totalorder %s23, 0
    %s26 = sadd.s32 %s25, 1
    %s27 = scalar_select %p24, %s25, %s26
    %p30 = pneg %p24
    %p31 = scmp.eq.s32.totalorder %s15, 1
    %p32 = por %p30, %p31
    %p33 = scmp.ne.s32.totalorder %s25, %s28
    %p34 = scmp.eq.s32.totalorder %s15, 0
    %p35 = por %p33, %p34
    %p36 = scmp.ne.s32.totalorder %s25, %s28
    %p37 = scmp.eq.s32.totalorder %s20, 1
    %p38 = por %p36, %p37
    %p39 = scmp.ne.s32.totalorder %s28, %s29
    %p40 = scmp.eq.s32.totalorder %s20, 0
    %p41 = por %p39, %p40
    %p42 = scmp.ne.s32.totalorder %s28, %s29
    %p43 = scmp.eq.s32.totalorder %s21, 1
    %p44 = por %p42, %p43
    %p46 = scmp.ne.s32.totalorder %s29, %s45
    %p47 = scmp.eq.s32.totalorder %s21, 0
    %p48 = por %p46, %p47
    %s50 = sadd.s32 %s49, 1
    %p53 = scmp.eq.s32.totalorder %s15, 1
    %p54 = scmp.ne.s32.totalorder %s49, %s51
    %p55 = scmp.eq.s32.totalorder %s15, 0
    %p56 = por %p54, %p55
    %p57 = scmp.ne.s32.totalorder %s49, %s51
    %p58 = scmp.eq.s32.totalorder %s20, 1
    %p59 = por %p57, %p58
    %p60 = scmp.ne.s32.totalorder %s51, %s52
    %p61 = scmp.eq.s32.totalorder %s20, 0
    %p62 = por %p60, %p61
    %p63 = scmp.ne.s32.totalorder %s51, %s52
    %p64 = scmp.eq.s32.totalorder %s21, 1
    %p65 = por %p63, %p64
    %p67 = scmp.ne.s32.totalorder %s52, %s66
    %p68 = scmp.eq.s32.totalorder %s21, 0
    %p69 = por %p67, %p68
    %s71 = sadd.s32 %s70, 1
    %p74 = scmp.eq.s32.totalorder %s15, 1
    %p75 = scmp.ne.s32.totalorder %s70, %s72
    %p76 = scmp.eq.s32.totalorder %s15, 0
    %p77 = por %p75, %p76
    %p78 = scmp.ne.s32.totalorder %s70, %s72
    %p79 = scmp.eq.s32.totalorder %s20, 1
    %p80 = por %p78, %p79
    %p81 = scmp.ne.s32.totalorder %s72, %s73
    %p82 = scmp.eq.s32.totalorder %s20, 0
    %p83 = por %p81, %p82
    %p84 = scmp.ne.s32.totalorder %s72, %s73
    %p85 = scmp.eq.s32.totalorder %s21, 1
    %p86 = por %p84, %p85
    %p88 = scmp.ne.s32.totalorder %s73, %s87
    %p89 = scmp.eq.s32.totalorder %s21, 0
    %p90 = por %p88, %p89
    %s92 = sadd.s32 %s91, 1
    %p95 = scmp.eq.s32.totalorder %s15, 1
    %p96 = scmp.ne.s32.totalorder %s91, %s93
    %p97 = scmp.eq.s32.totalorder %s15, 0
    %p98 = por %p96, %p97
    %p99 = scmp.ne.s32.totalorder %s91, %s93
    %p100 = scmp.eq.s32.totalorder %s20, 1
    %p101 = por %p99, %p100
    %p102 = scmp.ne.s32.totalorder %s93, %s94
    %p103 = scmp.eq.s32.totalorder %s20, 0
    %p104 = por %p102, %p103
    %p105 = scmp.ne.s32.totalorder %s93, %s94
    %p106 = scmp.eq.s32.totalorder %s21, 1
    %p107 = por %p105, %p106
    %p109 = scmp.ne.s32.totalorder %s94, %s108
    %p110 = scmp.eq.s32.totalorder %s21, 0
    %p111 = por %p109, %p110
    %s113 = sadd.s32 %s112, 1
    %p116 = scmp.eq.s32.totalorder %s15, 1
    %p117 = scmp.ne.s32.totalorder %s112, %s114
    %p118 = scmp.eq.s32.totalorder %s15, 0
    %p119 = por %p117, %p118
    %p120 = scmp.ne.s32.totalorder %s112, %s114
    %p121 = scmp.eq.s32.totalorder %s20, 1
    %p122 = por %p120, %p121
    %p123 = scmp.ne.s32.totalorder %s114, %s115
    %p124 = scmp.eq.s32.totalorder %s20, 0
    %p125 = por %p123, %p124
    %p126 = scmp.ne.s32.totalorder %s114, %s115
    %p127 = scmp.eq.s32.totalorder %s21, 1
    %p128 = por %p126, %p127
    %p130 = scmp.ne.s32.totalorder %s115, %s129
    %p131 = scmp.eq.s32.totalorder %s21, 0
    %p132 = por %p130, %p131
    %s134 = sadd.s32 %s133, 1
    %p137 = scmp.eq.s32.totalorder %s15, 1
    %p138 = scmp.ne.s32.totalorder %s133, %s135
    %p139 = scmp.eq.s32.totalorder %s15, 0
    %p140 = por %p138, %p139
    %p141 = scmp.ne.s32.totalorder %s133, %s135
    %p142 = scmp.eq.s32.totalorder %s20, 1
    %p143 = por %p141, %p142
    %p144 = scmp.ne.s32.totalorder %s135, %s136
    %p145 = scmp.eq.s32.totalorder %s20, 0
    %p146 = por %p144, %p145
    %p147 = scmp.ne.s32.totalorder %s135, %s136
    %p148 = scmp.eq.s32.totalorder %s21, 1
    %p149 = por %p147, %p148
    %p151 = scmp.ne.s32.totalorder %s136, %s150
    %p152 = scmp.eq.s32.totalorder %s21, 0
    %p153 = por %p151, %p152
    %s155 = sadd.s32 %s154, 1
    %p158 = scmp.eq.s32.totalorder %s15, 1
    %p159 = scmp.ne.s32.totalorder %s154, %s156
    %p160 = scmp.eq.s32.totalorder %s15, 0
    %p161 = por %p159, %p160
    %p162 = scmp.ne.s32.totalorder %s154, %s156
    %p163 = scmp.eq.s32.totalorder %s20, 1
    %p164 = por %p162, %p163
    %p165 = scmp.ne.s32.totalorder %s156, %s157
    %p166 = scmp.eq.s32.totalorder %s20, 0
    %p167 = por %p165, %p166
    %p168 = scmp.ne.s32.totalorder %s156, %s157
    %p169 = scmp.eq.s32.totalorder %s21, 1
    %p170 = por %p168, %p169
    %p172 = scmp.ne.s32.totalorder %s157, %s171
    %p173 = scmp.eq.s32.totalorder %s21, 0
    %p174 = por %p172, %p173
    %s176 = sadd.s32 %s175, 1
    %p179 = scmp.eq.s32.totalorder %s15, 1
    %p180 = scmp.ne.s32.totalorder %s175, %s177
    %p181 = scmp.eq.s32.totalorder %s15, 0
    %p182 = por %p180, %p181
    %p183 = scmp.ne.s32.totalorder %s175, %s177
    %p184 = scmp.eq.s32.totalorder %s20, 1
    %p185 = por %p183, %p184
    %p186 = scmp.ne.s32.totalorder %s177, %s178
    %p187 = scmp.eq.s32.totalorder %s20, 0
    %p188 = por %p186, %p187
    %p189 = scmp.ne.s32.totalorder %s177, %s178
    %p190 = scmp.eq.s32.totalorder %s21, 1
    %p191 = por %p189, %p190
    %p193 = scmp.ne.s32.totalorder %s178, %s192
    %p194 = scmp.eq.s32.totalorder %s21, 0
    %p195 = por %p193, %p194
    %s197 = sadd.s32 %s196, 1
    %p200 = scmp.eq.s32.totalorder %s15, 1
    %p201 = scmp.ne.s32.totalorder %s196, %s198
    %p202 = scmp.eq.s32.totalorder %s15, 0
    %p203 = por %p201, %p202
    %p204 = scmp.ne.s32.totalorder %s196, %s198
    %p205 = scmp.eq.s32.totalorder %s20, 1
    %p206 = por %p204, %p205
    %p207 = scmp.ne.s32.totalorder %s198, %s199
    %p208 = scmp.eq.s32.totalorder %s20, 0
    %p209 = por %p207, %p208
    %p210 = scmp.ne.s32.totalorder %s198, %s199
    %p211 = scmp.eq.s32.totalorder %s21, 1
    %p212 = por %p210, %p211
    %p214 = scmp.ne.s32.totalorder %s199, %s213
    %p215 = scmp.eq.s32.totalorder %s21, 0
    %p216 = por %p214, %p215
    %s217 = ssub.s32 %s15, %s22
    %p218 = scmp.eq.s32.totalorder %s217, 0
    %s220 = sadd.s32 %s219, 1
    %s221 = scalar_select %p218, %s219, %s220
    %p224 = pneg %p218
    %p225 = scmp.eq.s32.totalorder %s15, 1
    %p226 = por %p224, %p225
    %p227 = scmp.ne.s32.totalorder %s219, %s222
    %p228 = scmp.eq.s32.totalorder %s15, 0
    %p229 = por %p227, %p228
    %p230 = scmp.ne.s32.totalorder %s219, %s222
    %p231 = scmp.eq.s32.totalorder %s20, 1
    %p232 = por %p230, %p231
    %p233 = scmp.ne.s32.totalorder %s222, %s223
    %p234 = scmp.eq.s32.totalorder %s20, 0
    %p235 = por %p233, %p234
    %p236 = scmp.ne.s32.totalorder %s222, %s223
    %p237 = scmp.eq.s32.totalorder %s21, 1
    %p238 = por %p236, %p237
    %p240 = scmp.ne.s32.totalorder %s223, %s239
    %p241 = scmp.eq.s32.totalorder %s21, 0
    %p242 = por %p240, %p241
    %p243 = scmp.le.s32.totalorder 1, %s15
    %p244 = scmp.lt.s32.totalorder %s15, 3
    %p245 = pnand %p243, %p244
    %p246 = pneg %p245
    // Predicated region
    $region9: #{cnn_forward.2} parent=5 // pred_check
      _
    $region10: #{cnn_forward.2} parent=5 // pred_check_branch
      %248 = sbr.rel (%p245) target = $region12
    $region11: #{cnn_forward.2} parent=5 // pred_region
      %s249 = ssub.s32 %s15, 1
      // Predicated region
      $region13: #{cnn_forward.2} parent=11 // pred_check
        %p250 = pneg %p62
      $region14: #{cnn_forward.2} parent=11 // pred_check_branch
        %252 = sbr.rel (%p250) target = $region16
      $region15: #{cnn_forward.2} parent=11 // pred_region
        _
      $region16: #{cnn_forward.2} parent=11 // pred_fallthru
        _
      // Predicated region
      $region17: #{cnn_forward.2} parent=11 // pred_check
        %p253 = pneg %p83
      $region18: #{cnn_forward.2} parent=11 // pred_check_branch
        %255 = sbr.rel (%p253) target = $region20
      $region19: #{cnn_forward.2} parent=11 // pred_region
        _
      $region20: #{cnn_forward.2} parent=11 // pred_fallthru
        _
      // Predicated region
      $region21: #{cnn_forward.2} parent=11 // pred_check
        %p256 = pneg %p104
      $region22: #{cnn_forward.2} parent=11 // pred_check_branch
        %258 = sbr.rel (%p256) target = $region24
      $region23: #{cnn_forward.2} parent=11 // pred_region
        _
      $region24: #{cnn_forward.2} parent=11 // pred_fallthru
        _
      // Predicated region
      $region25: #{cnn_forward.2} parent=11 // pred_check
        %p259 = pneg %p125
      $region26: #{cnn_forward.2} parent=11 // pred_check_branch
        %261 = sbr.rel (%p259) target = $region28
      $region27: #{cnn_forward.2} parent=11 // pred_region
        _
      $region28: #{cnn_forward.2} parent=11 // pred_fallthru
        _
      // Predicated region
      $region29: #{cnn_forward.2} parent=11 // pred_check
        %p262 = pneg %p146
      $region30: #{cnn_forward.2} parent=11 // pred_check_branch
        %264 = sbr.rel (%p262) target = $region32
      $region31: #{cnn_forward.2} parent=11 // pred_region
        _
      $region32: #{cnn_forward.2} parent=11 // pred_fallthru
        _
      // Predicated region
      $region33: #{cnn_forward.2} parent=11 // pred_check
        %p265 = pneg %p167
      $region34: #{cnn_forward.2} parent=11 // pred_check_branch
        %267 = sbr.rel (%p265) target = $region36
      $region35: #{cnn_forward.2} parent=11 // pred_region
        _
      $region36: #{cnn_forward.2} parent=11 // pred_fallthru
        _
      // Predicated region
      $region37: #{cnn_forward.2} parent=11 // pred_check
        %p268 = pneg %p188
      $region38: #{cnn_forward.2} parent=11 // pred_check_branch
        %270 = sbr.rel (%p268) target = $region40
      $region39: #{cnn_forward.2} parent=11 // pred_region
        _
      $region40: #{cnn_forward.2} parent=11 // pred_fallthru
        _
      // Predicated region
      $region41: #{cnn_forward.2} parent=11 // pred_check
        %p271 = pneg %p209
      $region42: #{cnn_forward.2} parent=11 // pred_check_branch
        %273 = sbr.rel (%p271) target = $region44
      $region43: #{cnn_forward.2} parent=11 // pred_region
        _
      $region44: #{cnn_forward.2} parent=11 // pred_fallthru
        _
    $region12: #{cnn_forward.2} parent=5 // pred_fallthru
      _
    %p274 = scmp.lt.s32.totalorder %s15, 2
    // Predicated region
    $region45: #{cnn_forward.2} parent=5 // pred_check
      %p275 = pneg %p274
    $region46: #{cnn_forward.2} parent=5 // pred_check_branch
      %277 = sbr.rel (%p275) target = $region48
    $region47: #{cnn_forward.2} parent=5 // pred_region
      // Predicated region
      $region49: #{cnn_forward.2} parent=47 // pred_check
        %p278 = pneg %p35
      $region50: #{cnn_forward.2} parent=47 // pred_check_branch
        %280 = sbr.rel (%p278) target = $region52
      $region51: #{cnn_forward.2} parent=47 // pred_region
        %p281 = scmp.lt.s32.totalorder %s15, 1
        %s282 = scalar_select %p281, %s15, 1
        %s283 = smul.addr %s282, 8
        %s284 = smul.addr %s283, 8
        %s285 = scalar_lea.vmem %s0, %s284
      $region52: #{cnn_forward.2} parent=47 // pred_fallthru
        _
    $region48: #{cnn_forward.2} parent=5 // pred_fallthru
      _
    %p286 = scmp.le.s32.totalorder 1, %s15
    %p287 = scmp.lt.s32.totalorder %s15, 3
    %p288 = pnand %p286, %p287
    %p289 = pneg %p288
    // Predicated region
    $region53: #{cnn_forward.2} parent=5 // pred_check
      _
    $region54: #{cnn_forward.2} parent=5 // pred_check_branch
      %291 = sbr.rel (%p288) target = $region56
    $region55: #{cnn_forward.2} parent=5 // pred_region
      %s292 = ssub.s32 %s15, 1
      %p293 = scmp.lt.s32.totalorder %s20, 1
      %s294 = scalar_select %p293, %s20, 1
      %s295 = smul.addr %s294, 8
      %s296 = smul.addr %s295, 8
      %s297 = scalar_lea.vmem %s0, %s296
      %p298 = pneg %p41
      %p299 = pneg %p38
      %p300 = pneg %p62
      %p301 = pneg %p59
      %p302 = pneg %p83
      %p303 = pneg %p80
      %p304 = pneg %p104
      %p305 = pneg %p101
      %p306 = pneg %p125
      %p307 = pneg %p122
      %p308 = pneg %p146
      %p309 = pneg %p143
      %p310 = pneg %p167
      %p311 = pneg %p164
      %p312 = pneg %p188
      %p313 = pneg %p185
      %p314 = pneg %p209
      %p315 = pneg %p206
      %p316 = pneg %p235
      %p317 = pneg %p232
      %p318 = scmp.lt.s32.totalorder %s20, 1
      %s319 = scalar_select %p318, %s20, 1
      %s320 = smul.addr %s319, 2
      %s321 = scalar_lea.vmem %s9, %s320
      %p322 = scmp.lt.s32.totalorder %s20, 1
      %s323 = scalar_select %p322, %s20, 1
      %s324 = smul.addr %s323, 8
      %s325 = smul.addr %s324, 8
      %s326 = scalar_lea.vmem %s0, %s325
      %p327 = scmp.lt.s32.totalorder %s20, 1
      %s328 = scalar_select %p327, %s20, 1
      %s329 = smul.addr %s328, 2
      %s330 = scalar_lea.vmem %s9, %s329
      %v332 = vld [vmem:[%s326] sm:$0xff]
      %v333 = vld [vmem:[%s326 + $0x8] sm:$0xff]
      %v334 = vld [vmem:[%s326 + $0x10] sm:$0xff]
      %v335 = vld [vmem:[%s326 + $0x18] sm:$0xff]
      %v336 = vld [vmem:[%s326 + $0x20] sm:$0xff]
      %v337 = vld [vmem:[%s326 + $0x28] sm:$0xff]
      %v338 = vld [vmem:[%s326 + $0x30] sm:$0xff]
      %v339 = vld [vmem:[%s326 + $0x38] sm:$0xff]
      %v340 = vpack.c.bf16 %v333, %v332
      %v341 = vpack.c.bf16 %v335, %v334
      %v342 = vpack.c.bf16 %v337, %v336
      %v343 = vpack.c.bf16 %v339, %v338
      %vm344 = vcmask 162816
      %345 = vst.msk [vmem:[#allocation2] sm:$0xff] %vm344, %v340
      %346 = vst.msk [vmem:[#allocation2 + $0x8] sm:$0xff] %vm344, %v341
      %347 = vst.msk [vmem:[#allocation2 + $0x10] sm:$0xff] %vm344, %v342
      %348 = vst.msk [vmem:[#allocation2 + $0x18] sm:$0xff] %vm344, %v343
      %v349 = vld [vmem:[#allocation2] sm:$0xff]
      %v350 = vld [vmem:[#allocation2 + $0x8] sm:$0xff]
      %v351 = vld [vmem:[#allocation2 + $0x10] sm:$0xff]
      %v352 = vld [vmem:[#allocation2 + $0x18] sm:$0x7]
      %v357 = vunpack.c.l.b16 %v349
      %v358 = vunpack.c.h.b16 %v349
      %v359 = vunpack.c.l.b16 %v350
      %v360 = vunpack.c.h.b16 %v350
      %v361 = vunpack.c.l.b16 %v351
      %v362 = vunpack.c.h.b16 %v351
      %v363 = vunpack.c.l.b16 %v352
      %v364 = vpack.c.b16 %v357, %v357
      %v365 = vpack.c.b16 %v358, %v358
      %v366 = vpack.c.b16 %v359, %v359
      %v367 = vpack.c.b16 %v360, %v360
      %v368 = vpack.c.b16 %v361, %v361
      %v369 = vpack.c.b16 %v362, %v362
      %v370 = vpack.c.b16 %v363, %v363
      %vm378 = vcmask 158720
      %379 = vst.msk [vmem:[#allocation3] sm:$0xf] %vm378, %v364
      %380 = vst.msk [vmem:[#allocation3 + $0x8] sm:$0xf] %vm378, %v365
      %381 = vst.msk [vmem:[#allocation3 + $0x10] sm:$0xf] %vm378, %v366
      %382 = vst.msk [vmem:[#allocation3 + $0x18] sm:$0xf] %vm378, %v367
      %383 = vst.msk [vmem:[#allocation3 + $0x20] sm:$0xf] %vm378, %v368
      %384 = vst.msk [vmem:[#allocation3 + $0x28] sm:$0xf] %vm378, %v369
      %vm385 = vcmask 157696
      %vm386 = vsmask.f32 2304
      %vm387 = vmand %vm385, %vm386
      %v388 = vld [vmem:[#allocation3 + $0x30] sm:$0x7]
      %v389 = vsel %vm387, %v370, %v388
      %390 = vst [vmem:[#allocation3 + $0x30] sm:$0x7] %v389
      %v391 = vld [vmem:[#allocation2] sm:$0xff]
      %v392 = vld [vmem:[#allocation2 + $0x8] sm:$0xff]
      %v393 = vld [vmem:[#allocation2 + $0x10] sm:$0xff]
      %v394 = vld [vmem:[#allocation2 + $0x18] sm:$0x7]
      %v399 = vunpack.c.l.b16 %v391
      %v400 = vunpack.c.h.b16 %v391
      %v401 = vunpack.c.l.b16 %v392
      %v402 = vunpack.c.h.b16 %v392
      %v403 = vunpack.c.l.b16 %v393
      %v404 = vunpack.c.h.b16 %v393
      %v405 = vunpack.c.l.b16 %v394
      %v406 = vpack.c.b16 %v399, %v399
      %v407 = vpack.c.b16 %v400, %v400
      %v408 = vpack.c.b16 %v401, %v401
      %v409 = vpack.c.b16 %v402, %v402
      %v410 = vpack.c.b16 %v403, %v403
      %v411 = vpack.c.b16 %v404, %v404
      %v412 = vpack.c.b16 %v405, %v405
      %vm413 = vsmask.f32 3328
      %vm414 = vsmask.f32 7440
      %vm415 = vmor %vm413, %vm414
      %v417 = vshrl.u32 %v406, 16
      %v419 = vrot.slane %v417, 4
      %v420 = vshll.u32 %v406, 16
      %v422 = vrot.slane %v420, 5
      %v423 = vor.u32 %v419, %v422
      %v424 = vrot.slane %v423, 4
      %v426 = vshll.u32 %v407, 16
      %v428 = vrot.slane %v426, 5
      %v429 = vsel %vm415, %v424, %v428
      %v430 = vshrl.u32 %v407, 16
      %v432 = vrot.slane %v430, 4
      %v433 = vor.u32 %v432, %v428
      %v434 = vrot.slane %v433, 4
      %v436 = vshll.u32 %v408, 16
      %v438 = vrot.slane %v436, 5
      %v439 = vsel %vm415, %v434, %v438
      %v440 = vshrl.u32 %v408, 16
      %v442 = vrot.slane %v440, 4
      %v443 = vor.u32 %v442, %v438
      %v444 = vrot.slane %v443, 4
      %v446 = vshll.u32 %v409, 16
      %v448 = vrot.slane %v446, 5
      %v449 = vsel %vm415, %v444, %v448
      %v450 = vshrl.u32 %v409, 16
      %v452 = vrot.slane %v450, 4
      %v453 = vor.u32 %v452, %v448
      %v454 = vrot.slane %v453, 4
      %v456 = vshll.u32 %v410, 16
      %v458 = vrot.slane %v456, 5
      %v459 = vsel %vm415, %v454, %v458
      %v460 = vshrl.u32 %v410, 16
      %v462 = vrot.slane %v460, 4
      %v463 = vor.u32 %v462, %v458
      %v464 = vrot.slane %v463, 4
      %v466 = vshll.u32 %v411, 16
      %v468 = vrot.slane %v466, 5
      %v469 = vsel %vm415, %v464, %v468
      %v470 = vshrl.u32 %v411, 16
      %v472 = vrot.slane %v470, 4
      %v473 = vor.u32 %v472, %v468
      %v474 = vrot.slane %v473, 4
      %v476 = vshll.u32 %v412, 16
      %v478 = vrot.slane %v476, 5
      %v479 = vsel %vm415, %v474, %v478
      %v480 = vshrl.u32 %v412, 16
      %v482 = vrot.slane %v480, 4
      %v483 = vor.u32 %v482, %v478
      %v484 = vrot.slane %v483, 4
      %485 = vrot.lane.b32.xlu0 %v429, 20
      %v486 = vpop.permute.xlu0 %485
      %487 = vrot.lane.b32.xlu0 %v439, 20
      %v488 = vpop.permute.xlu0 %487
      %489 = vrot.lane.b32.xlu0 %v449, 20
      %v490 = vpop.permute.xlu0 %489
      %491 = vrot.lane.b32.xlu0 %v459, 20
      %v492 = vpop.permute.xlu0 %491
      %493 = vrot.lane.b32.xlu0 %v469, 20
      %v494 = vpop.permute.xlu0 %493
      %495 = vrot.lane.b32.xlu0 %v479, 20
      %v496 = vpop.permute.xlu0 %495
      %497 = vrot.lane.b32.xlu0 %v484, 20
      %v498 = vpop.permute.xlu0 %497
      %vm506 = vcmask 322720
      %507 = vst.msk [vmem:[#allocation3] sm:$0xf] %vm506, %v486
      %508 = vst.msk [vmem:[#allocation3 + $0x8] sm:$0xf] %vm506, %v488
      %509 = vst.msk [vmem:[#allocation3 + $0x10] sm:$0xf] %vm506, %v490
      %510 = vst.msk [vmem:[#allocation3 + $0x18] sm:$0xf] %vm506, %v492
      %511 = vst.msk [vmem:[#allocation3 + $0x20] sm:$0xf] %vm506, %v494
      %512 = vst.msk [vmem:[#allocation3 + $0x28] sm:$0xf] %vm506, %v496
      %vm513 = vcmask 321696
      %vm514 = vmand %vm513, %vm386
      %v515 = vld [vmem:[#allocation3 + $0x30] sm:$0x7]
      %v516 = vsel %vm514, %v498, %v515
      %517 = vst [vmem:[#allocation3 + $0x30] sm:$0x7] %v516
      %v518 = vld [vmem:[#allocation2] sm:$0xfe]
      %v519 = vld [vmem:[#allocation2 + $0x8] sm:$0xff]
      %v520 = vld [vmem:[#allocation2 + $0x10] sm:$0xff]
      %v521 = vld [vmem:[#allocation2 + $0x18] sm:$0xf]
      %v526 = vunpack.c.l.b16 %v518
      %v527 = vunpack.c.h.b16 %v518
      %v528 = vunpack.c.l.b16 %v519
      %v529 = vunpack.c.h.b16 %v519
      %v530 = vunpack.c.l.b16 %v520
      %v531 = vunpack.c.h.b16 %v520
      %v532 = vunpack.c.l.b16 %v521
      %v533 = vpack.c.b16 %v526, %v526
      %v534 = vpack.c.b16 %v527, %v527
      %v535 = vpack.c.b16 %v528, %v528
      %v536 = vpack.c.b16 %v529, %v529
      %v537 = vpack.c.b16 %v530, %v530
      %v538 = vpack.c.b16 %v531, %v531
      %v539 = vpack.c.b16 %v532, %v532
      %vm540 = vcmask 1042432
      %vm541 = vcmask 1046532
      %vm542 = vmor %vm540, %vm541
      %v543 = vrot.slane %v533, 5
      %v544 = vrot.slane %v543, 4
      %v545 = vrot.slane %v534, 5
      %v546 = vsel %vm542, %v544, %v545
      %v547 = vrot.slane %v545, 4
      %v548 = vrot.slane %v535, 5
      %v549 = vsel %vm542, %v547, %v548
      %v550 = vrot.slane %v548, 4
      %v551 = vrot.slane %v536, 5
      %v552 = vsel %vm542, %v550, %v551
      %v553 = vrot.slane %v551, 4
      %v554 = vrot.slane %v537, 5
      %v555 = vsel %vm542, %v553, %v554
      %v556 = vrot.slane %v554, 4
      %v557 = vrot.slane %v538, 5
      %v558 = vsel %vm542, %v556, %v557
      %v559 = vrot.slane %v557, 4
      %v560 = vrot.slane %v539, 5
      %v561 = vsel %vm542, %v559, %v560
      %v562 = vrot.slane %v560, 4
      %563 = vrot.lane.b32.xlu0 %v546, 40
      %v564 = vpop.permute.xlu0 %563
      %565 = vrot.lane.b32.xlu0 %v549, 40
      %v566 = vpop.permute.xlu0 %565
      %567 = vrot.lane.b32.xlu0 %v552, 40
      %v568 = vpop.permute.xlu0 %567
      %569 = vrot.lane.b32.xlu0 %v555, 40
      %v570 = vpop.permute.xlu0 %569
      %571 = vrot.lane.b32.xlu0 %v558, 40
      %v572 = vpop.permute.xlu0 %571
      %573 = vrot.lane.b32.xlu0 %v561, 40
      %v574 = vpop.permute.xlu0 %573
      %575 = vrot.lane.b32.xlu0 %v562, 40
      %v576 = vpop.permute.xlu0 %575
      %vm584 = vcmask 486720
      %585 = vst.msk [vmem:[#allocation3] sm:$0xf] %vm584, %v564
      %586 = vst.msk [vmem:[#allocation3 + $0x8] sm:$0xf] %vm584, %v566
      %587 = vst.msk [vmem:[#allocation3 + $0x10] sm:$0xf] %vm584, %v568
      %588 = vst.msk [vmem:[#allocation3 + $0x18] sm:$0xf] %vm584, %v570
      %589 = vst.msk [vmem:[#allocation3 + $0x20] sm:$0xf] %vm584, %v572
      %590 = vst.msk [vmem:[#allocation3 + $0x28] sm:$0xf] %vm584, %v574
      %vm591 = vcmask 485696
      %vm592 = vmand %vm591, %vm386
      %v593 = vld [vmem:[#allocation3 + $0x30] sm:$0x7]
      %v594 = vsel %vm592, %v576, %v593
      %595 = vst [vmem:[#allocation3 + $0x30] sm:$0x7] %v594
      %v596 = vld [vmem:[#allocation2] sm:$0xfe]
      %v597 = vld [vmem:[#allocation2 + $0x8] sm:$0xff]
      %v598 = vld [vmem:[#allocation2 + $0x10] sm:$0xff]
      %v599 = vld [vmem:[#allocation2 + $0x18] sm:$0xf]
      %v604 = vunpack.c.l.b16 %v596
      %v605 = vunpack.c.h.b16 %v596
      %v606 = vunpack.c.l.b16 %v597
      %v607 = vunpack.c.h.b16 %v597
      %v608 = vunpack.c.l.b16 %v598
      %v609 = vunpack.c.h.b16 %v598
      %v610 = vunpack.c.l.b16 %v599
      %v611 = vpack.c.b16 %v604, %v604
      %v612 = vpack.c.b16 %v605, %v605
      %v613 = vpack.c.b16 %v606, %v606
      %v614 = vpack.c.b16 %v607, %v607
      %v615 = vpack.c.b16 %v608, %v608
      %v616 = vpack.c.b16 %v609, %v609
      %v617 = vpack.c.b16 %v610, %v610
      %vm618 = vsmask.f32 6416
      %vm619 = vmor %vm386, %vm618
      %v621 = vshrl.u32 %v611, 16
      %v623 = vrot.slane %v621, 5
      %v624 = vshll.u32 %v611, 16
      %v626 = vrot.slane %v624, 6
      %v627 = vor.u32 %v623, %v626
      %v628 = vrot.slane %v627, 4
      %v630 = vshrl.u32 %v612, 16
      %v632 = vrot.slane %v630, 5
      %v633 = vshll.u32 %v612, 16
      %v635 = vrot.slane %v633, 6
      %v636 = vor.u32 %v632, %v635
      %v637 = vsel %vm619, %v628, %v636
      %v638 = vrot.slane %v636, 4
      %v640 = vshrl.u32 %v613, 16
      %v642 = vrot.slane %v640, 5
      %v643 = vshll.u32 %v613, 16
      %v645 = vrot.slane %v643, 6
      %v646 = vor.u32 %v642, %v645
      %v647 = vsel %vm619, %v638, %v646
      %v648 = vrot.slane %v646, 4
      %v650 = vshrl.u32 %v614, 16
      %v652 = vrot.slane %v650, 5
      %v653 = vshll.u32 %v614, 16
      %v655 = vrot.slane %v653, 6
      %v656 = vor.u32 %v652, %v655
      %v657 = vsel %vm619, %v648, %v656
      %v658 = vrot.slane %v656, 4
      %v660 = vshrl.u32 %v615, 16
      %v662 = vrot.slane %v660, 5
      %v663 = vshll.u32 %v615, 16
      %v665 = vrot.slane %v663, 6
      %v666 = vor.u32 %v662, %v665
      %v667 = vsel %vm619, %v658, %v666
      %v668 = vrot.slane %v666, 4
      %v670 = vshrl.u32 %v616, 16
      %v672 = vrot.slane %v670, 5
      %v673 = vshll.u32 %v616, 16
      %v675 = vrot.slane %v673, 6
      %v676 = vor.u32 %v672, %v675
      %v677 = vsel %vm619, %v668, %v676
      %v678 = vrot.slane %v676, 4
      %v680 = vshrl.u32 %v617, 16
      %v682 = vrot.slane %v680, 5
      %v683 = vshll.u32 %v617, 16
      %v685 = vrot.slane %v683, 6
      %v686 = vor.u32 %v682, %v685
      %v687 = vsel %vm619, %v678, %v686
      %v688 = vrot.slane %v686, 4
      %689 = vrot.lane.b32.xlu0 %v637, 60
      %v690 = vpop.permute.xlu0 %689
      %691 = vrot.lane.b32.xlu0 %v647, 60
      %v692 = vpop.permute.xlu0 %691
      %693 = vrot.lane.b32.xlu0 %v657, 60
      %v694 = vpop.permute.xlu0 %693
      %695 = vrot.lane.b32.xlu0 %v667, 60
      %v696 = vpop.permute.xlu0 %695
      %697 = vrot.lane.b32.xlu0 %v677, 60
      %v698 = vpop.permute.xlu0 %697
      %699 = vrot.lane.b32.xlu0 %v687, 60
      %v700 = vpop.permute.xlu0 %699
      %701 = vrot.lane.b32.xlu0 %v688, 60
      %v702 = vpop.permute.xlu0 %701
      %vm710 = vcmask 650720
      %711 = vst.msk [vmem:[#allocation3] sm:$0xf] %vm710, %v690
      %712 = vst.msk [vmem:[#allocation3 + $0x8] sm:$0xf] %vm710, %v692
      %713 = vst.msk [vmem:[#allocation3 + $0x10] sm:$0xf] %vm710, %v694
      %714 = vst.msk [vmem:[#allocation3 + $0x18] sm:$0xf] %vm710, %v696
      %715 = vst.msk [vmem:[#allocation3 + $0x20] sm:$0xf] %vm710, %v698
      %716 = vst.msk [vmem:[#allocation3 + $0x28] sm:$0xf] %vm710, %v700
      %vm717 = vcmask 649696
      %vm718 = vmand %vm717, %vm386
      %v719 = vld [vmem:[#allocation3 + $0x30] sm:$0x7]
      %v720 = vsel %vm718, %v702, %v719
      %721 = vst [vmem:[#allocation3 + $0x30] sm:$0x7] %v720
      %v722 = vld [vmem:[#allocation2] sm:$0xfc]
      %v723 = vld [vmem:[#allocation2 + $0x8] sm:$0xff]
      %v724 = vld [vmem:[#allocation2 + $0x10] sm:$0xff]
      %v725 = vld [vmem:[#allocation2 + $0x18] sm:$0x1f]
      %v730 = vunpack.c.l.b16 %v722
      %v731 = vunpack.c.h.b16 %v722
      %v732 = vunpack.c.l.b16 %v723
      %v733 = vunpack.c.h.b16 %v723
      %v734 = vunpack.c.l.b16 %v724
      %v735 = vunpack.c.h.b16 %v724
      %v736 = vunpack.c.l.b16 %v725
      %v737 = vunpack.c.h.b16 %v725
      %v738 = vpack.c.b16 %v730, %v730
      %v739 = vpack.c.b16 %v731, %v731
      %v740 = vpack.c.b16 %v732, %v732
      %v741 = vpack.c.b16 %v733, %v733
      %v742 = vpack.c.b16 %v734, %v734
      %v743 = vpack.c.b16 %v735, %v735
      %v744 = vpack.c.b16 %v736, %v736
      %v745 = vpack.c.b16 %v737, %v737
      %vm746 = vcmask 1041408
      %vm747 = vcmask 1045508
      %vm748 = vmor %vm746, %vm747
      %v749 = vrot.slane %v738, 6
      %v750 = vrot.slane %v749, 4
      %v751 = vrot.slane %v739, 6
      %v752 = vsel %vm748, %v750, %v751
      %v753 = vrot.slane %v751, 4
      %v754 = vrot.slane %v740, 6
      %v755 = vsel %vm748, %v753, %v754
      %v756 = vrot.slane %v754, 4
      %v757 = vrot.slane %v741, 6
      %v758 = vsel %vm748, %v756, %v757
      %v759 = vrot.slane %v757, 4
      %v760 = vrot.slane %v742, 6
      %v761 = vsel %vm748, %v759, %v760
      %v762 = vrot.slane %v760, 4
      %v763 = vrot.slane %v743, 6
      %v764 = vsel %vm748, %v762, %v763
      %v765 = vrot.slane %v763, 4
      %v766 = vrot.slane %v744, 6
      %v767 = vsel %vm748, %v765, %v766
      %v768 = vrot.slane %v766, 4
      %v769 = vrot.slane %v745, 6
      %v770 = vsel %vm748, %v768, %v769
      %771 = vrot.lane.b32.xlu0 %v752, 80
      %v772 = vpop.permute.xlu0 %771
      %773 = vrot.lane.b32.xlu0 %v755, 80
      %v774 = vpop.permute.xlu0 %773
      %775 = vrot.lane.b32.xlu0 %v758, 80
      %v776 = vpop.permute.xlu0 %775
      %777 = vrot.lane.b32.xlu0 %v761, 80
      %v778 = vpop.permute.xlu0 %777
      %779 = vrot.lane.b32.xlu0 %v764, 80
      %v780 = vpop.permute.xlu0 %779
      %781 = vrot.lane.b32.xlu0 %v767, 80
      %v782 = vpop.permute.xlu0 %781
      %783 = vrot.lane.b32.xlu0 %v770, 80
      %v784 = vpop.permute.xlu0 %783
      %vm792 = vcmask 814720
      %793 = vst.msk [vmem:[#allocation3] sm:$0xf] %vm792, %v772
      %794 = vst.msk [vmem:[#allocation3 + $0x8] sm:$0xf] %vm792, %v774
      %795 = vst.msk [vmem:[#allocation3 + $0x10] sm:$0xf] %vm792, %v776
      %796 = vst.msk [vmem:[#allocation3 + $0x18] sm:$0xf] %vm792, %v778
      %797 = vst.msk [vmem:[#allocation3 + $0x20] sm:$0xf] %vm792, %v780
      %798 = vst.msk [vmem:[#allocation3 + $0x28] sm:$0xf] %vm792, %v782
      %vm799 = vcmask 813696
      %vm800 = vmand %vm799, %vm386
      %v801 = vld [vmem:[#allocation3 + $0x30] sm:$0x7]
      %v802 = vsel %vm800, %v784, %v801
      %803 = vst [vmem:[#allocation3 + $0x30] sm:$0x7] %v802
      %v804 = vld [vmem:[#allocation2] sm:$0xfc]
      %v805 = vld [vmem:[#allocation2 + $0x8] sm:$0xff]
      %v806 = vld [vmem:[#allocation2 + $0x10] sm:$0xff]
      %v807 = vld [vmem:[#allocation2 + $0x18] sm:$0x1f]
      %v812 = vunpack.c.l.b16 %v804
      %v813 = vunpack.c.h.b16 %v804
      %v814 = vunpack.c.l.b16 %v805
      %v815 = vunpack.c.h.b16 %v805
      %v816 = vunpack.c.l.b16 %v806
      %v817 = vunpack.c.h.b16 %v806
      %v818 = vunpack.c.l.b16 %v807
      %v819 = vunpack.c.h.b16 %v807
      %v820 = vpack.c.b16 %v812, %v812
      %v821 = vpack.c.b16 %v813, %v813
      %v822 = vpack.c.b16 %v814, %v814
      %v823 = vpack.c.b16 %v815, %v815
      %v824 = vpack.c.b16 %v816, %v816
      %v825 = vpack.c.b16 %v817, %v817
      %v826 = vpack.c.b16 %v818, %v818
      %v827 = vpack.c.b16 %v819, %v819
      %vm828 = vsmask.f32 1280
      %vm829 = vsmask.f32 5392
      %vm830 = vmor %vm828, %vm829
      %v832 = vshrl.u32 %v820, 16
      %v834 = vrot.slane %v832, 6
      %v835 = vshll.u32 %v820, 16
      %v837 = vrot.slane %v835, 7
      %v838 = vor.u32 %v834, %v837
      %v839 = vrot.slane %v838, 4
      %v841 = vshrl.u32 %v821, 16
      %v843 = vrot.slane %v841, 6
      %v844 = vshll.u32 %v821, 16
      %v846 = vrot.slane %v844, 7
      %v847 = vor.u32 %v843, %v846
      %v848 = vsel %vm830, %v839, %v847
      %v849 = vrot.slane %v847, 4
      %v851 = vshrl.u32 %v822, 16
      %v853 = vrot.slane %v851, 6
      %v854 = vshll.u32 %v822, 16
      %v856 = vrot.slane %v854, 7
      %v857 = vor.u32 %v853, %v856
      %v858 = vsel %vm830, %v849, %v857
      %v859 = vrot.slane %v857, 4
      %v861 = vshrl.u32 %v823, 16
      %v863 = vrot.slane %v861, 6
      %v864 = vshll.u32 %v823, 16
      %v866 = vrot.slane %v864, 7
      %v867 = vor.u32 %v863, %v866
      %v868 = vsel %vm830, %v859, %v867
      %v869 = vrot.slane %v867, 4
      %v871 = vshrl.u32 %v824, 16
      %v873 = vrot.slane %v871, 6
      %v874 = vshll.u32 %v824, 16
      %v876 = vrot.slane %v874, 7
      %v877 = vor.u32 %v873, %v876
      %v878 = vsel %vm830, %v869, %v877
      %v879 = vrot.slane %v877, 4
      %v881 = vshrl.u32 %v825, 16
      %v883 = vrot.slane %v881, 6
      %v884 = vshll.u32 %v825, 16
      %v886 = vrot.slane %v884, 7
      %v887 = vor.u32 %v883, %v886
      %v888 = vsel %vm830, %v879, %v887
      %v889 = vrot.slane %v887, 4
      %v891 = vshrl.u32 %v826, 16
      %v893 = vrot.slane %v891, 6
      %v894 = vshll.u32 %v826, 16
      %v896 = vrot.slane %v894, 7
      %v897 = vor.u32 %v893, %v896
      %v898 = vsel %vm830, %v889, %v897
      %v899 = vrot.slane %v897, 4
      %v901 = vshrl.u32 %v827, 16
      %v903 = vrot.slane %v901, 6
      %v904 = vshll.u32 %v827, 16
      %v906 = vrot.slane %v904, 7
      %v907 = vor.u32 %v903, %v906
      %v908 = vsel %vm830, %v899, %v907
      %909 = vrot.lane.b32.xlu0 %v848, 100
      %v910 = vpop.permute.xlu0 %909
      %911 = vrot.lane.b32.xlu0 %v858, 100
      %v912 = vpop.permute.xlu0 %911
      %913 = vrot.lane.b32.xlu0 %v868, 100
      %v914 = vpop.permute.xlu0 %913
      %915 = vrot.lane.b32.xlu0 %v878, 100
      %v916 = vpop.permute.xlu0 %915
      %917 = vrot.lane.b32.xlu0 %v888, 100
      %v918 = vpop.permute.xlu0 %917
      %919 = vrot.lane.b32.xlu0 %v898, 100
      %v920 = vpop.permute.xlu0 %919
      %921 = vrot.lane.b32.xlu0 %v908, 100
      %v922 = vpop.permute.xlu0 %921
      %vm930 = vcmask 978720
      %931 = vst.msk [vmem:[#allocation3] sm:$0xf] %vm930, %v910
      %932 = vst.msk [vmem:[#allocation3 + $0x8] sm:$0xf] %vm930, %v912
      %933 = vst.msk [vmem:[#allocation3 + $0x10] sm:$0xf] %vm930, %v914
      %934 = vst.msk [vmem:[#allocation3 + $0x18] sm:$0xf] %vm930, %v916
      %935 = vst.msk [vmem:[#allocation3 + $0x20] sm:$0xf] %vm930, %v918
      %936 = vst.msk [vmem:[#allocation3 + $0x28] sm:$0xf] %vm930, %v920
      %vm937 = vcmask 977696
      %vm938 = vmand %vm937, %vm386
      %v939 = vld [vmem:[#allocation3 + $0x30] sm:$0x7]
      %v940 = vsel %vm938, %v922, %v939
      %941 = vst [vmem:[#allocation3 + $0x30] sm:$0x7] %v940
      %v942 = vld [vmem:[#allocation2] sm:$0xf8]
      %v943 = vld [vmem:[#allocation2 + $0x8] sm:$0xff]
      %v944 = vld [vmem:[#allocation2 + $0x10] sm:$0xff]
      %v945 = vld [vmem:[#allocation2 + $0x18] sm:$0x3f]
      %v950 = vunpack.c.l.b16 %v942
      %v951 = vunpack.c.h.b16 %v942
      %v952 = vunpack.c.l.b16 %v943
      %v953 = vunpack.c.h.b16 %v943
      %v954 = vunpack.c.l.b16 %v944
      %v955 = vunpack.c.h.b16 %v944
      %v956 = vunpack.c.l.b16 %v945
      %v957 = vunpack.c.h.b16 %v945
      %v958 = vpack.c.b16 %v950, %v950
      %v959 = vpack.c.b16 %v951, %v951
      %v960 = vpack.c.b16 %v952, %v952
      %v961 = vpack.c.b16 %v953, %v953
      %v962 = vpack.c.b16 %v954, %v954
      %v963 = vpack.c.b16 %v955, %v955
      %v964 = vpack.c.b16 %v956, %v956
      %v965 = vpack.c.b16 %v957, %v957
      %vm966 = vcmask 1040384
      %vm967 = vcmask 1044484
      %vm968 = vmor %vm966, %vm967
      %v969 = vrot.slane %v958, 7
      %v970 = vrot.slane %v969, 4
      %v971 = vrot.slane %v959, 7
      %v972 = vsel %vm968, %v970, %v971
      %v973 = vrot.slane %v971, 4
      %v974 = vrot.slane %v960, 7
      %v975 = vsel %vm968, %v973, %v974
      %v976 = vrot.slane %v974, 4
      %v977 = vrot.slane %v961, 7
      %v978 = vsel %vm968, %v976, %v977
      %v979 = vrot.slane %v977, 4
      %v980 = vrot.slane %v962, 7
      %v981 = vsel %vm968, %v979, %v980
      %v982 = vrot.slane %v980, 4
      %v983 = vrot.slane %v963, 7
      %v984 = vsel %vm968, %v982, %v983
      %v985 = vrot.slane %v983, 4
      %v986 = vrot.slane %v964, 7
      %v987 = vsel %vm968, %v985, %v986
      %v988 = vrot.slane %v986, 4
      %v989 = vrot.slane %v965, 7
      %v990 = vsel %vm968, %v988, %v989
      %991 = vrot.lane.b32.xlu0 %v972, 120
      %v992 = vpop.permute.xlu0 %991
      %993 = vrot.lane.b32.xlu0 %v975, 120
      %v994 = vpop.permute.xlu0 %993
      %995 = vrot.lane.b32.xlu0 %v978, 120
      %v996 = vpop.permute.xlu0 %995
      %997 = vrot.lane.b32.xlu0 %v981, 120
      %v998 = vpop.permute.xlu0 %997
      %999 = vrot.lane.b32.xlu0 %v984, 120
      %v1000 = vpop.permute.xlu0 %999
      %1001 = vrot.lane.b32.xlu0 %v987, 120
      %v1002 = vpop.permute.xlu0 %1001
      %1003 = vrot.lane.b32.xlu0 %v990, 120
      %v1004 = vpop.permute.xlu0 %1003
      %v1005 = vrot.slane %v992, 4
      %v1006 = vrot.slane %v994, 4
      %v1007 = vrot.slane %v996, 4
      %v1008 = vrot.slane %v998, 4
      %v1009 = vrot.slane %v1000, 4
      %v1010 = vrot.slane %v1002, 4
      %v1011 = vrot.slane %v1004, 4
      %vm1012 = vcmask 982016
      %v1013 = vsel %vm1012, %v1005, %v992
      %v1014 = vsel %vm1012, %v1006, %v994
      %v1015 = vsel %vm1012, %v1007, %v996
      %v1016 = vsel %vm1012, %v1008, %v998
      %v1017 = vsel %vm1012, %v1009, %v1000
      %v1018 = vsel %vm1012, %v1010, %v1002
      %v1019 = vsel %vm1012, %v1011, %v1004
      %vm1027 = vcmask 1044416
      %vm1028 = vcmask 97284
      %vm1029 = vmor %vm1028, %vm1027
      %1030 = vst.msk [vmem:[#allocation3] sm:$0xff] %vm1029, %v1013
      %1031 = vst.msk [vmem:[#allocation3 + $0x8] sm:$0xff] %vm1029, %v1014
      %1032 = vst.msk [vmem:[#allocation3 + $0x10] sm:$0xff] %vm1029, %v1015
      %1033 = vst.msk [vmem:[#allocation3 + $0x18] sm:$0xff] %vm1029, %v1016
      %1034 = vst.msk [vmem:[#allocation3 + $0x20] sm:$0xff] %vm1029, %v1017
      %1035 = vst.msk [vmem:[#allocation3 + $0x28] sm:$0xff] %vm1029, %v1018
      %vm1036 = vcmask 1043392
      %vm1037 = vmand %vm1036, %vm386
      %vm1038 = vcmask 96260
      %vm1039 = vsmask.f32 6400
      %vm1040 = vmand %vm1038, %vm1039
      %vm1041 = vmor %vm1040, %vm1037
      %v1042 = vld [vmem:[#allocation3 + $0x30] sm:$0x77]
      %v1043 = vsel %vm1041, %v1019, %v1042
      %1044 = vst [vmem:[#allocation3 + $0x30] sm:$0x77] %v1043
      %v1045 = vld [vmem:[#allocation2] sm:$0xf8]
      %v1046 = vld [vmem:[#allocation2 + $0x8] sm:$0xff]
      %v1047 = vld [vmem:[#allocation2 + $0x10] sm:$0xff]
      %v1048 = vld [vmem:[#allocation2 + $0x18] sm:$0x3f]
      %v1053 = vunpack.c.l.b16 %v1045
      %v1054 = vunpack.c.h.b16 %v1045
      %v1055 = vunpack.c.l.b16 %v1046
      %v1056 = vunpack.c.h.b16 %v1046
      %v1057 = vunpack.c.l.b16 %v1047
      %v1058 = vunpack.c.h.b16 %v1047
      %v1059 = vunpack.c.l.b16 %v1048
      %v1060 = vunpack.c.h.b16 %v1048
      %v1061 = vpack.c.b16 %v1053, %v1053
      %v1062 = vpack.c.b16 %v1054, %v1054
      %v1063 = vpack.c.b16 %v1055, %v1055
      %v1064 = vpack.c.b16 %v1056, %v1056
      %v1065 = vpack.c.b16 %v1057, %v1057
      %v1066 = vpack.c.b16 %v1058, %v1058
      %v1067 = vpack.c.b16 %v1059, %v1059
      %v1068 = vpack.c.b16 %v1060, %v1060
      %vm1069 = vsmask.f32 256
      %vm1070 = vsmask.f32 4368
      %vm1071 = vmor %vm1069, %vm1070
      %v1073 = vshrl.u32 %v1061, 16
      %v1075 = vrot.slane %v1073, 7
      %v1076 = vrot.slane %v1075, 4
      %v1078 = vshrl.u32 %v1062, 16
      %v1080 = vrot.slane %v1078, 7
      %v1081 = vshll.u32 %v1062, 16
      %v1083 = vor.u32 %v1080, %v1081
      %v1084 = vsel %vm1071, %v1076, %v1083
      %v1085 = vrot.slane %v1080, 4
      %v1087 = vshrl.u32 %v1063, 16
      %v1089 = vrot.slane %v1087, 7
      %v1090 = vshll.u32 %v1063, 16
      %v1092 = vor.u32 %v1089, %v1090
      %v1093 = vsel %vm1071, %v1085, %v1092
      %v1094 = vrot.slane %v1089, 4
      %v1096 = vshrl.u32 %v1064, 16
      %v1098 = vrot.slane %v1096, 7
      %v1099 = vshll.u32 %v1064, 16
      %v1101 = vor.u32 %v1098, %v1099
      %v1102 = vsel %vm1071, %v1094, %v1101
      %v1103 = vrot.slane %v1098, 4
      %v1105 = vshrl.u32 %v1065, 16
      %v1107 = vrot.slane %v1105, 7
      %v1108 = vshll.u32 %v1065, 16
      %v1110 = vor.u32 %v1107, %v1108
      %v1111 = vsel %vm1071, %v1103, %v1110
      %v1112 = vrot.slane %v1107, 4
      %v1114 = vshrl.u32 %v1066, 16
      %v1116 = vrot.slane %v1114, 7
      %v1117 = vshll.u32 %v1066, 16
      %v1119 = vor.u32 %v1116, %v1117
      %v1120 = vsel %vm1071, %v1112, %v1119
      %v1121 = vrot.slane %v1116, 4
      %v1123 = vshrl.u32 %v1067, 16
      %v1125 = vrot.slane %v1123, 7
      %v1126 = vshll.u32 %v1067, 16
      %v1128 = vor.u32 %v1125, %v1126
      %v1129 = vsel %vm1071, %v1121, %v1128
      %v1130 = vrot.slane %v1125, 4
      %v1132 = vshrl.u32 %v1068, 16
      %v1134 = vrot.slane %v1132, 7
      %v1135 = vshll.u32 %v1068, 16
      %v1137 = vor.u32 %v1134, %v1135
      %v1138 = vsel %vm1071, %v1130, %v1137
      %1139 = vrot.lane.b32.xlu0 %v1084, 12
      %v1140 = vpop.permute.xlu0 %1139
      %1141 = vrot.lane.b32.xlu0 %v1093, 12
      %v1142 = vpop.permute.xlu0 %1141
      %1143 = vrot.lane.b32.xlu0 %v1102, 12
      %v1144 = vpop.permute.xlu0 %1143
      %1145 = vrot.lane.b32.xlu0 %v1111, 12
      %v1146 = vpop.permute.xlu0 %1145
      %1147 = vrot.lane.b32.xlu0 %v1120, 12
      %v1148 = vpop.permute.xlu0 %1147
      %1149 = vrot.lane.b32.xlu0 %v1129, 12
      %v1150 = vpop.permute.xlu0 %1149
      %1151 = vrot.lane.b32.xlu0 %v1138, 12
      %v1152 = vpop.permute.xlu0 %1151
      %vm1160 = vcmask 257120
      %1161 = vst.msk [vmem:[#allocation3 + $0x4] sm:$0xf] %vm1160, %v1140
      %1162 = vst.msk [vmem:[#allocation3 + $0xc] sm:$0xf] %vm1160, %v1142
      %1163 = vst.msk [vmem:[#allocation3 + $0x14] sm:$0xf] %vm1160, %v1144
      %1164 = vst.msk [vmem:[#allocation3 + $0x1c] sm:$0xf] %vm1160, %v1146
      %1165 = vst.msk [vmem:[#allocation3 + $0x24] sm:$0xf] %vm1160, %v1148
      %1166 = vst.msk [vmem:[#allocation3 + $0x2c] sm:$0xf] %vm1160, %v1150
      %vm1167 = vcmask 256096
      %vm1168 = vmand %vm1167, %vm386
      %v1169 = vld [vmem:[#allocation3 + $0x34] sm:$0x7]
      %v1170 = vsel %vm1168, %v1152, %v1169
      %1171 = vst [vmem:[#allocation3 + $0x34] sm:$0x7] %v1170
      %v1172 = vld [vmem:[#allocation2] sm:$0xf0]
      %v1173 = vld [vmem:[#allocation2 + $0x8] sm:$0xff]
      %v1174 = vld [vmem:[#allocation2 + $0x10] sm:$0xff]
      %v1175 = vld [vmem:[#allocation2 + $0x18] sm:$0x7f]
      %v1180 = vunpack.c.h.b16 %v1172
      %v1181 = vunpack.c.l.b16 %v1173
      %v1182 = vunpack.c.h.b16 %v1173
      %v1183 = vunpack.c.l.b16 %v1174
      %v1184 = vunpack.c.h.b16 %v1174
      %v1185 = vunpack.c.l.b16 %v1175
      %v1186 = vunpack.c.h.b16 %v1175
      %v1187 = vpack.c.b16 %v1180, %v1180
      %v1188 = vpack.c.b16 %v1181, %v1181
      %v1189 = vpack.c.b16 %v1182, %v1182
      %v1190 = vpack.c.b16 %v1183, %v1183
      %v1191 = vpack.c.b16 %v1184, %v1184
      %v1192 = vpack.c.b16 %v1185, %v1185
      %v1193 = vpack.c.b16 %v1186, %v1186
      %1194 = vrot.lane.b32.xlu0 %v1187, 32
      %v1195 = vpop.permute.xlu0 %1194
      %1196 = vrot.lane.b32.xlu0 %v1188, 32
      %v1197 = vpop.permute.xlu0 %1196
      %1198 = vrot.lane.b32.xlu0 %v1189, 32
      %v1199 = vpop.permute.xlu0 %1198
      %1200 = vrot.lane.b32.xlu0 %v1190, 32
      %v1201 = vpop.permute.xlu0 %1200
      %1202 = vrot.lane.b32.xlu0 %v1191, 32
      %v1203 = vpop.permute.xlu0 %1202
      %1204 = vrot.lane.b32.xlu0 %v1192, 32
      %v1205 = vpop.permute.xlu0 %1204
      %1206 = vrot.lane.b32.xlu0 %v1193, 32
      %v1207 = vpop.permute.xlu0 %1206
      %vm1215 = vcmask 421120
      %1216 = vst.msk [vmem:[#allocation3 + $0x4] sm:$0xf] %vm1215, %v1195
      %1217 = vst.msk [vmem:[#allocation3 + $0xc] sm:$0xf] %vm1215, %v1197
      %1218 = vst.msk [vmem:[#allocation3 + $0x14] sm:$0xf] %vm1215, %v1199
      %1219 = vst.msk [vmem:[#allocation3 + $0x1c] sm:$0xf] %vm1215, %v1201
      %1220 = vst.msk [vmem:[#allocation3 + $0x24] sm:$0xf] %vm1215, %v1203
      %1221 = vst.msk [vmem:[#allocation3 + $0x2c] sm:$0xf] %vm1215, %v1205
      %vm1222 = vcmask 420096
      %vm1223 = vmand %vm1222, %vm386
      %v1224 = vld [vmem:[#allocation3 + $0x34] sm:$0x7]
      %v1225 = vsel %vm1223, %v1207, %v1224
      %1226 = vst [vmem:[#allocation3 + $0x34] sm:$0x7] %v1225
      %v1227 = vld [vmem:[#allocation2] sm:$0xf0]
      %v1228 = vld [vmem:[#allocation2 + $0x8] sm:$0xff]
      %v1229 = vld [vmem:[#allocation2 + $0x10] sm:$0xff]
      %v1230 = vld [vmem:[#allocation2 + $0x18] sm:$0x7f]
      %v1235 = vunpack.c.h.b16 %v1227
      %v1236 = vunpack.c.l.b16 %v1228
      %v1237 = vunpack.c.h.b16 %v1228
      %v1238 = vunpack.c.l.b16 %v1229
      %v1239 = vunpack.c.h.b16 %v1229
      %v1240 = vunpack.c.l.b16 %v1230
      %v1241 = vunpack.c.h.b16 %v1230
      %v1242 = vpack.c.b16 %v1235, %v1235
      %v1243 = vpack.c.b16 %v1236, %v1236
      %v1244 = vpack.c.b16 %v1237, %v1237
      %v1245 = vpack.c.b16 %v1238, %v1238
      %v1246 = vpack.c.b16 %v1239, %v1239
      %v1247 = vpack.c.b16 %v1240, %v1240
      %v1248 = vpack.c.b16 %v1241, %v1241
      %v1250 = vshrl.u32 %v1242, 16
      %v1252 = vrot.slane %v1250, 4
      %v1253 = vshll.u32 %v1242, 16
      %v1255 = vrot.slane %v1253, 5
      %v1256 = vor.u32 %v1252, %v1255
      %v1257 = vrot.slane %v1256, 4
      %v1259 = vshll.u32 %v1243, 16
      %v1261 = vrot.slane %v1259, 5
      %v1262 = vsel %vm415, %v1257, %v1261
      %v1263 = vshrl.u32 %v1243, 16
      %v1265 = vrot.slane %v1263, 4
      %v1266 = vor.u32 %v1265, %v1261
      %v1267 = vrot.slane %v1266, 4
      %v1269 = vshll.u32 %v1244, 16
      %v1271 = vrot.slane %v1269, 5
      %v1272 = vsel %vm415, %v1267, %v1271
      %v1273 = vshrl.u32 %v1244, 16
      %v1275 = vrot.slane %v1273, 4
      %v1276 = vor.u32 %v1275, %v1271
      %v1277 = vrot.slane %v1276, 4
      %v1279 = vshll.u32 %v1245, 16
      %v1281 = vrot.slane %v1279, 5
      %v1282 = vsel %vm415, %v1277, %v1281
      %v1283 = vshrl.u32 %v1245, 16
      %v1285 = vrot.slane %v1283, 4
      %v1286 = vor.u32 %v1285, %v1281
      %v1287 = vrot.slane %v1286, 4
      %v1289 = vshll.u32 %v1246, 16
      %v1291 = vrot.slane %v1289, 5
      %v1292 = vsel %vm415, %v1287, %v1291
      %v1293 = vshrl.u32 %v1246, 16
      %v1295 = vrot.slane %v1293, 4
      %v1296 = vor.u32 %v1295, %v1291
      %v1297 = vrot.slane %v1296, 4
      %v1299 = vshll.u32 %v1247, 16
      %v1301 = vrot.slane %v1299, 5
      %v1302 = vsel %vm415, %v1297, %v1301
      %v1303 = vshrl.u32 %v1247, 16
      %v1305 = vrot.slane %v1303, 4
      %v1306 = vor.u32 %v1305, %v1301
      %v1307 = vrot.slane %v1306, 4
      %v1309 = vshll.u32 %v1248, 16
      %v1311 = vrot.slane %v1309, 5
      %v1312 = vsel %vm415, %v1307, %v1311
      %v1313 = vshrl.u32 %v1248, 16
      %v1315 = vrot.slane %v1313, 4
      %v1316 = vor.u32 %v1315, %v1311
      %v1317 = vrot.slane %v1316, 4
      %1318 = vrot.lane.b32.xlu0 %v1262, 52
      %v1319 = vpop.permute.xlu0 %1318
      %1320 = vrot.lane.b32.xlu0 %v1272, 52
      %v1321 = vpop.permute.xlu0 %1320
      %1322 = vrot.lane.b32.xlu0 %v1282, 52
      %v1323 = vpop.permute.xlu0 %1322
      %1324 = vrot.lane.b32.xlu0 %v1292, 52
      %v1325 = vpop.permute.xlu0 %1324
      %1326 = vrot.lane.b32.xlu0 %v1302, 52
      %v1327 = vpop.permute.xlu0 %1326
      %1328 = vrot.lane.b32.xlu0 %v1312, 52
      %v1329 = vpop.permute.xlu0 %1328
      %1330 = vrot.lane.b32.xlu0 %v1317, 52
      %v1331 = vpop.permute.xlu0 %1330
      %vm1339 = vcmask 585120
      %1340 = vst.msk [vmem:[#allocation3 + $0x4] sm:$0xf] %vm1339, %v1319
      %1341 = vst.msk [vmem:[#allocation3 + $0xc] sm:$0xf] %vm1339, %v1321
      %1342 = vst.msk [vmem:[#allocation3 + $0x14] sm:$0xf] %vm1339, %v1323
      %1343 = vst.msk [vmem:[#allocation3 + $0x1c] sm:$0xf] %vm1339, %v1325
      %1344 = vst.msk [vmem:[#allocation3 + $0x24] sm:$0xf] %vm1339, %v1327
      %1345 = vst.msk [vmem:[#allocation3 + $0x2c] sm:$0xf] %vm1339, %v1329
      %vm1346 = vcmask 584096
      %vm1347 = vmand %vm1346, %vm386
      %v1348 = vld [vmem:[#allocation3 + $0x34] sm:$0x7]
      %v1349 = vsel %vm1347, %v1331, %v1348
      %1350 = vst [vmem:[#allocation3 + $0x34] sm:$0x7] %v1349
      %v1351 = vld [vmem:[#allocation2] sm:$0xe0]
      %v1352 = vld [vmem:[#allocation2 + $0x8] sm:$0xff]
      %v1353 = vld [vmem:[#allocation2 + $0x10] sm:$0xff]
      %v1354 = vld [vmem:[#allocation2 + $0x18] sm:$0xff]
      %v1359 = vunpack.c.h.b16 %v1351
      %v1360 = vunpack.c.l.b16 %v1352
      %v1361 = vunpack.c.h.b16 %v1352
      %v1362 = vunpack.c.l.b16 %v1353
      %v1363 = vunpack.c.h.b16 %v1353
      %v1364 = vunpack.c.l.b16 %v1354
      %v1365 = vunpack.c.h.b16 %v1354
      %v1366 = vpack.c.b16 %v1359, %v1359
      %v1367 = vpack.c.b16 %v1360, %v1360
      %v1368 = vpack.c.b16 %v1361, %v1361
      %v1369 = vpack.c.b16 %v1362, %v1362
      %v1370 = vpack.c.b16 %v1363, %v1363
      %v1371 = vpack.c.b16 %v1364, %v1364
      %v1372 = vpack.c.b16 %v1365, %v1365
      %v1373 = vrot.slane %v1366, 5
      %v1374 = vrot.slane %v1373, 4
      %v1375 = vrot.slane %v1367, 5
      %v1376 = vsel %vm542, %v1374, %v1375
      %v1377 = vrot.slane %v1375, 4
      %v1378 = vrot.slane %v1368, 5
      %v1379 = vsel %vm542, %v1377, %v1378
      %v1380 = vrot.slane %v1378, 4
      %v1381 = vrot.slane %v1369, 5
      %v1382 = vsel %vm542, %v1380, %v1381
      %v1383 = vrot.slane %v1381, 4
      %v1384 = vrot.slane %v1370, 5
      %v1385 = vsel %vm542, %v1383, %v1384
      %v1386 = vrot.slane %v1384, 4
      %v1387 = vrot.slane %v1371, 5
      %v1388 = vsel %vm542, %v1386, %v1387
      %v1389 = vrot.slane %v1387, 4
      %v1390 = vrot.slane %v1372, 5
      %v1391 = vsel %vm542, %v1389, %v1390
      %v1392 = vrot.slane %v1390, 4
      %1393 = vrot.lane.b32.xlu0 %v1376, 72
      %v1394 = vpop.permute.xlu0 %1393
      %1395 = vrot.lane.b32.xlu0 %v1379, 72
      %v1396 = vpop.permute.xlu0 %1395
      %1397 = vrot.lane.b32.xlu0 %v1382, 72
      %v1398 = vpop.permute.xlu0 %1397
      %1399 = vrot.lane.b32.xlu0 %v1385, 72
      %v1400 = vpop.permute.xlu0 %1399
      %1401 = vrot.lane.b32.xlu0 %v1388, 72
      %v1402 = vpop.permute.xlu0 %1401
      %1403 = vrot.lane.b32.xlu0 %v1391, 72
      %v1404 = vpop.permute.xlu0 %1403
      %1405 = vrot.lane.b32.xlu0 %v1392, 72
      %v1406 = vpop.permute.xlu0 %1405
      %vm1414 = vcmask 749120
      %1415 = vst.msk [vmem:[#allocation3 + $0x4] sm:$0xf] %vm1414, %v1394
      %1416 = vst.msk [vmem:[#allocation3 + $0xc] sm:$0xf] %vm1414, %v1396
      %1417 = vst.msk [vmem:[#allocation3 + $0x14] sm:$0xf] %vm1414, %v1398
      %1418 = vst.msk [vmem:[#allocation3 + $0x1c] sm:$0xf] %vm1414, %v1400
      %1419 = vst.msk [vmem:[#allocation3 + $0x24] sm:$0xf] %vm1414, %v1402
      %1420 = vst.msk [vmem:[#allocation3 + $0x2c] sm:$0xf] %vm1414, %v1404
      %vm1421 = vcmask 748096
      %vm1422 = vmand %vm1421, %vm386
      %v1423 = vld [vmem:[#allocation3 + $0x34] sm:$0x7]
      %v1424 = vsel %vm1422, %v1406, %v1423
      %1425 = vst [vmem:[#allocation3 + $0x34] sm:$0x7] %v1424
      %v1426 = vld [vmem:[#allocation2] sm:$0xe0]
      %v1427 = vld [vmem:[#allocation2 + $0x8] sm:$0xff]
      %v1428 = vld [vmem:[#allocation2 + $0x10] sm:$0xff]
      %v1429 = vld [vmem:[#allocation2 + $0x18] sm:$0xff]
      %v1434 = vunpack.c.h.b16 %v1426
      %v1435 = vunpack.c.l.b16 %v1427
      %v1436 = vunpack.c.h.b16 %v1427
      %v1437 = vunpack.c.l.b16 %v1428
      %v1438 = vunpack.c.h.b16 %v1428
      %v1439 = vunpack.c.l.b16 %v1429
      %v1440 = vunpack.c.h.b16 %v1429
      %v1441 = vpack.c.b16 %v1434, %v1434
      %v1442 = vpack.c.b16 %v1435, %v1435
      %v1443 = vpack.c.b16 %v1436, %v1436
      %v1444 = vpack.c.b16 %v1437, %v1437
      %v1445 = vpack.c.b16 %v1438, %v1438
      %v1446 = vpack.c.b16 %v1439, %v1439
      %v1447 = vpack.c.b16 %v1440, %v1440
      %v1449 = vshrl.u32 %v1441, 16
      %v1451 = vrot.slane %v1449, 5
      %v1452 = vshll.u32 %v1441, 16
      %v1454 = vrot.slane %v1452, 6
      %v1455 = vor.u32 %v1451, %v1454
      %v1456 = vrot.slane %v1455, 4
      %v1458 = vshrl.u32 %v1442, 16
      %v1460 = vrot.slane %v1458, 5
      %v1461 = vshll.u32 %v1442, 16
      %v1463 = vrot.slane %v1461, 6
      %v1464 = vor.u32 %v1460, %v1463
      %v1465 = vsel %vm619, %v1456, %v1464
      %v1466 = vrot.slane %v1464, 4
      %v1468 = vshrl.u32 %v1443, 16
      %v1470 = vrot.slane %v1468, 5
      %v1471 = vshll.u32 %v1443, 16
      %v1473 = vrot.slane %v1471, 6
      %v1474 = vor.u32 %v1470, %v1473
      %v1475 = vsel %vm619, %v1466, %v1474
      %v1476 = vrot.slane %v1474, 4
      %v1478 = vshrl.u32 %v1444, 16
      %v1480 = vrot.slane %v1478, 5
      %v1481 = vshll.u32 %v1444, 16
      %v1483 = vrot.slane %v1481, 6
      %v1484 = vor.u32 %v1480, %v1483
      %v1485 = vsel %vm619, %v1476, %v1484
      %v1486 = vrot.slane %v1484, 4
      %v1488 = vshrl.u32 %v1445, 16
      %v1490 = vrot.slane %v1488, 5
      %v1491 = vshll.u32 %v1445, 16
      %v1493 = vrot.slane %v1491, 6
      %v1494 = vor.u32 %v1490, %v1493
      %v1495 = vsel %vm619, %v1486, %v1494
      %v1496 = vrot.slane %v1494, 4
      %v1498 = vshrl.u32 %v1446, 16
      %v1500 = vrot.slane %v1498, 5
      %v1501 = vshll.u32 %v1446, 16
      %v1503 = vrot.slane %v1501, 6
      %v1504 = vor.u32 %v1500, %v1503
      %v1505 = vsel %vm619, %v1496, %v1504
      %v1506 = vrot.slane %v1504, 4
      %v1508 = vshrl.u32 %v1447, 16
      %v1510 = vrot.slane %v1508, 5
      %v1511 = vshll.u32 %v1447, 16
      %v1513 = vrot.slane %v1511, 6
      %v1514 = vor.u32 %v1510, %v1513
      %v1515 = vsel %vm619, %v1506, %v1514
      %v1516 = vrot.slane %v1514, 4
      %1517 = vrot.lane.b32.xlu0 %v1465, 92
      %v1518 = vpop.permute.xlu0 %1517
      %1519 = vrot.lane.b32.xlu0 %v1475, 92
      %v1520 = vpop.permute.xlu0 %1519
      %1521 = vrot.lane.b32.xlu0 %v1485, 92
      %v1522 = vpop.permute.xlu0 %1521
      %1523 = vrot.lane.b32.xlu0 %v1495, 92
      %v1524 = vpop.permute.xlu0 %1523
      %1525 = vrot.lane.b32.xlu0 %v1505, 92
      %v1526 = vpop.permute.xlu0 %1525
      %1527 = vrot.lane.b32.xlu0 %v1515, 92
      %v1528 = vpop.permute.xlu0 %1527
      %1529 = vrot.lane.b32.xlu0 %v1516, 92
      %v1530 = vpop.permute.xlu0 %1529
      %vm1538 = vcmask 913120
      %1539 = vst.msk [vmem:[#allocation3 + $0x4] sm:$0xf] %vm1538, %v1518
      %1540 = vst.msk [vmem:[#allocation3 + $0xc] sm:$0xf] %vm1538, %v1520
      %1541 = vst.msk [vmem:[#allocation3 + $0x14] sm:$0xf] %vm1538, %v1522
      %1542 = vst.msk [vmem:[#allocation3 + $0x1c] sm:$0xf] %vm1538, %v1524
      %1543 = vst.msk [vmem:[#allocation3 + $0x24] sm:$0xf] %vm1538, %v1526
      %1544 = vst.msk [vmem:[#allocation3 + $0x2c] sm:$0xf] %vm1538, %v1528
      %vm1545 = vcmask 912096
      %vm1546 = vmand %vm1545, %vm386
      %v1547 = vld [vmem:[#allocation3 + $0x34] sm:$0x7]
      %v1548 = vsel %vm1546, %v1530, %v1547
      %1549 = vst [vmem:[#allocation3 + $0x34] sm:$0x7] %v1548
      %v1550 = vld [vmem:[#allocation3] sm:$0xff]
      %v1551 = vld [vmem:[#allocation3 + $0x8] sm:$0xff]
      %v1552 = vld [vmem:[#allocation3 + $0x10] sm:$0xff]
      %v1553 = vld [vmem:[#allocation3 + $0x18] sm:$0xff]
      %v1554 = vld [vmem:[#allocation3 + $0x20] sm:$0xff]
      %v1555 = vld [vmem:[#allocation3 + $0x28] sm:$0xff]
      %v1556 = vld [vmem:[#allocation3 + $0x30] sm:$0x77]
      %v1557 = vld [vmem:[%s1] sm:$0xf]
      %v1558 = vld [vmem:[%s1 + $0x4] sm:$0xf]
      %v1559 = vld [vmem:[%s1 + $0x8] sm:$0xf]
      %v1560 = vld [vmem:[%s1 + $0xc] sm:$0xf]
      %v1561 = vld [vmem:[%s1 + $0x10] sm:$0xf]
      %v1562 = vld [vmem:[%s1 + $0x14] sm:$0xf]
      %v1563 = vld [vmem:[%s1 + $0x18] sm:$0xf]
      %v1564 = vld [vmem:[%s1 + $0x1c] sm:$0xf]
      %v1565 = vld [vmem:[%s1 + $0x20] sm:$0xf]
      %v1566 = vld [vmem:[%s1 + $0x24] sm:$0xf]
      %v1567 = vld [vmem:[%s1 + $0x28] sm:$0xf]
      %v1568 = vld [vmem:[%s1 + $0x2c] sm:$0xf]
      %v1569 = vld [vmem:[%s1 + $0x30] sm:$0xf]
      %v1570 = vld [vmem:[%s1 + $0x34] sm:$0xf]
      %v1571 = vld [vmem:[%s1 + $0x38] sm:$0xf]
      %v1572 = vld [vmem:[%s1 + $0x3c] sm:$0xf]
      %v1573 = vld [vmem:[%s1 + $0x40] sm:$0xf]
      %v1574 = vld [vmem:[%s1 + $0x44] sm:$0xf]
      %v1575 = vld [vmem:[%s1 + $0x48] sm:$0xf]
      %v1576 = vld [vmem:[%s1 + $0x4c] sm:$0xf]
      %v1577 = vld [vmem:[%s1 + $0x50] sm:$0xf]
      %v1578 = vld [vmem:[%s1 + $0x54] sm:$0xf]
      %v1579 = vld [vmem:[%s1 + $0x58] sm:$0xf]
      %v1580 = vld [vmem:[%s1 + $0x5c] sm:$0xf]
      %v1581 = vld [vmem:[%s1 + $0x60] sm:$0xf]
      %v1582 = vld [vmem:[%s1 + $0x64] sm:$0xf]
      %v1583 = vld [vmem:[%s1 + $0x68] sm:$0xf]
      %v1584 = vld [vmem:[%s1 + $0x6c] sm:$0xf]
      %v1585 = vld [vmem:[%s1 + $0x70] sm:$0xf]
      %v1586 = vld [vmem:[%s1 + $0x74] sm:$0xf]
      %v1587 = vld [vmem:[%s2] sm:$0x1]
      %v1589 = vlaneseq
      %v1590 = vshrl.u32 %v1589, 7
      %v1591 = vsub.s32 0, %v1590
      %v1592 = vrot.slane %v1587, %v1591
      %v1601 = vunpack.c.l.b16 %v1550
      %v1602 = vunpack.c.h.b16 %v1550
      %v1603 = vunpack.c.l.b16 %v1551
      %v1604 = vunpack.c.h.b16 %v1551
      %v1605 = vunpack.c.l.b16 %v1552
      %v1606 = vunpack.c.h.b16 %v1552
      %v1607 = vunpack.c.l.b16 %v1553
      %v1608 = vunpack.c.h.b16 %v1553
      %v1609 = vunpack.c.l.b16 %v1554
      %v1610 = vunpack.c.h.b16 %v1554
      %v1611 = vunpack.c.l.b16 %v1555
      %v1612 = vunpack.c.h.b16 %v1555
      %v1613 = vunpack.c.l.b16 %v1556
      %v1614 = vunpack.c.h.b16 %v1556
      %v1615 = vpack.c.b16 %v1603, %v1601
      %v1616 = vpack.c.b16 %v1604, %v1602
      %v1617 = vpack.c.b16 %v1607, %v1605
      %v1618 = vpack.c.b16 %v1608, %v1606
      %v1619 = vpack.c.b16 %v1611, %v1609
      %v1620 = vpack.c.b16 %v1612, %v1610
      %v1621 = vpack.c.b16 %v1613, %v1613
      %v1622 = vpack.c.b16 %v1614, %v1614
      %v1657 = vunpack.c.l.b16 %v1557
      %v1658 = vunpack.c.l.b16 %v1558
      %v1659 = vunpack.c.l.b16 %v1559
      %v1660 = vunpack.c.l.b16 %v1560
      %v1661 = vunpack.c.l.b16 %v1561
      %v1662 = vunpack.c.l.b16 %v1562
      %v1663 = vunpack.c.l.b16 %v1563
      %v1664 = vunpack.c.l.b16 %v1564
      %v1665 = vunpack.c.l.b16 %v1565
      %v1666 = vunpack.c.l.b16 %v1566
      %v1667 = vunpack.c.l.b16 %v1567
      %v1668 = vunpack.c.l.b16 %v1568
      %v1669 = vunpack.c.l.b16 %v1569
      %v1670 = vunpack.c.l.b16 %v1570
      %v1671 = vunpack.c.l.b16 %v1571
      %v1672 = vunpack.c.l.b16 %v1572
      %v1673 = vunpack.c.l.b16 %v1573
      %v1674 = vunpack.c.l.b16 %v1574
      %v1675 = vunpack.c.l.b16 %v1575
      %v1676 = vunpack.c.l.b16 %v1576
      %v1677 = vunpack.c.l.b16 %v1577
      %v1678 = vunpack.c.l.b16 %v1578
      %v1679 = vunpack.c.l.b16 %v1579
      %v1680 = vunpack.c.l.b16 %v1580
      %v1681 = vunpack.c.l.b16 %v1581
      %v1682 = vunpack.c.l.b16 %v1582
      %v1683 = vunpack.c.l.b16 %v1583
      %v1684 = vunpack.c.l.b16 %v1584
      %v1685 = vunpack.c.l.b16 %v1585
      %v1686 = vunpack.c.l.b16 %v1586
      %v1687 = vpack.c.b16 %v1658, %v1657
      %v1688 = vpack.c.b16 %v1660, %v1659
      %v1689 = vpack.c.b16 %v1662, %v1661
      %v1690 = vpack.c.b16 %v1664, %v1663
      %v1691 = vpack.c.b16 %v1666, %v1665
      %v1692 = vpack.c.b16 %v1668, %v1667
      %v1693 = vpack.c.b16 %v1670, %v1669
      %v1694 = vpack.c.b16 %v1672, %v1671
      %v1695 = vpack.c.b16 %v1674, %v1673
      %v1696 = vpack.c.b16 %v1676, %v1675
      %v1697 = vpack.c.b16 %v1678, %v1677
      %v1698 = vpack.c.b16 %v1680, %v1679
      %v1699 = vpack.c.b16 %v1682, %v1681
      %v1700 = vpack.c.b16 %v1684, %v1683
      %v1701 = vpack.c.b16 %v1686, %v1685
      %vm1717 = vcmask 916480
      %v1719 = vsel %vm1717, %v1616, 0
      %v1722 = vsel %vm1717, %v1618, 0
      %v1725 = vsel %vm1717, %v1620, 0
      %v1728 = vsel %vm1717, %v1622, 0
      %1730 = vmatprep.subr.bf16.mxu0 0
      %1731 = vmatpush1.bf16.msra.mxu0 %v1687
      %1732 = vmatprep.subr.bf16.mxu0 0
      %1733 = vmatpush1.bf16.msra.mxu0 %v1688
      %1734 = vmatprep.subr.bf16.mxu0 0
      %1735 = vmatpush1.bf16.msra.mxu0 %v1689
      %1736 = vmatprep.subr.bf16.mxu0 0
      %1737 = vmatpush1.bf16.msra.mxu0 %v1690
      %1738 = vmatprep.subr.bf16.mxu0 0
      %1739 = vmatpush1.bf16.msra.mxu0 %v1691
      %1740 = vmatprep.subr.bf16.mxu0 0
      %1741 = vmatpush1.bf16.msra.mxu0 %v1692
      %1742 = vmatprep.subr.bf16.mxu0 0
      %1743 = vmatpush1.bf16.msra.mxu0 %v1693
      %1744 = vmatprep.subr.bf16.mxu0 0
      %1745 = vmatpush1.bf16.msra.mxu0 %v1694
      %1746 = vmatprep.subr.bf16.mxu0 0
      %1747 = vmatpush1.bf16.msra.mxu0 %v1695
      %1748 = vmatprep.subr.bf16.mxu0 0
      %1749 = vmatpush1.bf16.msra.mxu0 %v1696
      %1750 = vmatprep.subr.bf16.mxu0 0
      %1751 = vmatpush1.bf16.msra.mxu0 %v1697
      %1752 = vmatprep.subr.bf16.mxu0 0
      %1753 = vmatpush1.bf16.msra.mxu0 %v1698
      %1754 = vmatprep.subr.bf16.mxu0 0
      %1755 = vmatpush1.bf16.msra.mxu0 %v1699
      %1756 = vmatprep.subr.bf16.mxu0 0
      %1757 = vmatpush1.bf16.msra.mxu0 %v1700
      %1758 = vmatprep.subr.bf16.mxu0 0
      %1759 = vmatpush1.bf16.msra.mxu0 %v1701
      %1760 = vmatprep.subr.bf16.mxu0 0
      %1761 = vmatpush1.bf16.msra.mxu0 0
      %1762 = vmatprep.mubr.bf16.mxu0 %v1719
      %1763 = vmatmul.mubr.bf16.gmra.mrb[0].mxu0 %v1615
      %v1764 = vpop.f32.mrb[0].mxu0
      %v1765 = vadd.f32 %v1592, %v1764
      %v1766 = vpop.f32.mrb[0].mxu0
      %v1767 = vpop.f32.mrb[0].mxu0
      %v1768 = vadd.f32 %v1592, %v1767
      %v1769 = vpop.f32.mrb[0].mxu0
      %1770 = vmatprep.mubr.bf16.mxu0 %v1722
      %1771 = vmatmul.mubr.bf16.gmra.mrb[0].mxu0 %v1617
      %v1772 = vpop.f32.mrb[0].mxu0
      %v1773 = vadd.f32 %v1592, %v1772
      %v1774 = vpop.f32.mrb[0].mxu0
      %v1775 = vpop.f32.mrb[0].mxu0
      %v1776 = vadd.f32 %v1592, %v1775
      %v1777 = vpop.f32.mrb[0].mxu0
      %1778 = vmatprep.mubr.bf16.mxu0 %v1725
      %1779 = vmatmul.mubr.bf16.gmra.mrb[0].mxu0 %v1619
      %v1780 = vpop.f32.mrb[0].mxu0
      %v1781 = vadd.f32 %v1592, %v1780
      %v1782 = vpop.f32.mrb[0].mxu0
      %v1783 = vpop.f32.mrb[0].mxu0
      %v1784 = vadd.f32 %v1592, %v1783
      %v1785 = vpop.f32.mrb[0].mxu0
      %1786 = vmatprep.mubr.bf16.mxu0 %v1728
      %1787 = vmatmul.mubr.bf16.gmra.mrb[0].mxu0 %v1621
      %v1788 = vpop.f32.mrb[0].mxu0
      %v1789 = vadd.f32 %v1592, %v1788
      %v1790 = vpop.f32.mrb[0].mxu0
      %v1791 = vpop.f32.mrb[0].mxu0
      %v1792 = vpop.f32.mrb[0].mxu0
      %1793 = vdwg.mxu0
      %v1794 = vmax.f32 %v1765, 0.0
      %v1795 = vmax.f32 %v1768, 0.0
      %v1796 = vmax.f32 %v1773, 0.0
      %v1797 = vmax.f32 %v1776, 0.0
      %v1798 = vmax.f32 %v1781, 0.0
      %v1799 = vmax.f32 %v1784, 0.0
      %v1800 = vmax.f32 %v1789, 0.0
      %v1801 = vpack.c.bf16 %v1795, %v1794
      %v1802 = vpack.c.bf16 %v1797, %v1796
      %v1803 = vpack.c.bf16 %v1799, %v1798
      %v1804 = vpack.c.bf16 %v1800, %v1800
      %v1809 = vunpack.c.l.b16 %v1801
      %v1810 = vunpack.c.h.b16 %v1801
      %v1811 = vunpack.c.l.b16 %v1802
      %v1812 = vunpack.c.h.b16 %v1802
      %v1813 = vunpack.c.l.b16 %v1803
      %v1814 = vunpack.c.h.b16 %v1803
      %v1815 = vunpack.c.l.b16 %v1804
      %v1816 = vpack.c.b16 %v1809, %v1809
      %v1817 = vpack.c.b16 %v1810, %v1810
      %v1818 = vpack.c.b16 %v1811, %v1811
      %v1819 = vpack.c.b16 %v1812, %v1812
      %v1820 = vpack.c.b16 %v1813, %v1813
      %v1821 = vpack.c.b16 %v1814, %v1814
      %v1822 = vpack.c.b16 %v1815, %v1815
      %vm1830 = vcmask 519168
      %1831 = vst.msk [vmem:[#allocation5] sm:$0xf] %vm1830, %v1816
      %1832 = vst.msk [vmem:[#allocation5 + $0x4] sm:$0xf] %vm1830, %v1817
      %1833 = vst.msk [vmem:[#allocation5 + $0x8] sm:$0xf] %vm1830, %v1818
      %1834 = vst.msk [vmem:[#allocation5 + $0xc] sm:$0xf] %vm1830, %v1819
      %1835 = vst.msk [vmem:[#allocation5 + $0x10] sm:$0xf] %vm1830, %v1820
      %1836 = vst.msk [vmem:[#allocation5 + $0x14] sm:$0xf] %vm1830, %v1821
      %vm1837 = vcmask 518144
      %vm1838 = vmand %vm1837, %vm386
      %v1839 = vld [vmem:[#allocation5 + $0x18] sm:$0x7]
      %v1840 = vsel %vm1838, %v1822, %v1839
      %1841 = vst [vmem:[#allocation5 + $0x18] sm:$0x7] %v1840
      %v1842 = vld [vmem:[#allocation5] sm:$0xf]
      %v1843 = vld [vmem:[#allocation5 + $0x4] sm:$0xf]
      %v1844 = vld [vmem:[#allocation5 + $0x8] sm:$0xf]
      %v1845 = vld [vmem:[#allocation5 + $0xc] sm:$0xf]
      %v1846 = vld [vmem:[#allocation5 + $0x10] sm:$0xf]
      %v1847 = vld [vmem:[#allocation5 + $0x14] sm:$0x1]
      %v1848 = vld [vmem:[#allocation5 + $0x14] sm:$0x3]
      %v1855 = vunpack.c.l.b16 %v1842
      %v1856 = vunpack.c.l.b16 %v1843
      %v1857 = vunpack.c.l.b16 %v1844
      %v1858 = vunpack.c.l.b16 %v1845
      %v1859 = vunpack.c.l.b16 %v1846
      %v1860 = vunpack.c.l.b16 %v1847
      %v1861 = vpack.c.b16 %v1856, %v1855
      %v1862 = vpack.c.b16 %v1858, %v1857
      %v1863 = vpack.c.b16 %v1860, %v1859
      %v1865 = vunpack.c.l.b16 %v1848
      %v1866 = vpack.c.b16 %v1865, %v1859
      %vm1867 = vsmask.f32 7424
      %v1869 = vshrl.u32 %v1861, 16
      %v1871 = vshll.u32 %v1861, 16
      %v1873 = vrot.slane %v1871, 1
      %v1874 = vor.u32 %v1869, %v1873
      %v1876 = vshll.u32 %v1862, 16
      %v1878 = vrot.slane %v1876, 1
      %v1879 = vsel %vm1867, %v1874, %v1878
      %v1880 = vshrl.u32 %v1862, 16
      %v1882 = vor.u32 %v1880, %v1878
      %v1884 = vshll.u32 %v1866, 16
      %v1886 = vrot.slane %v1884, 1
      %v1887 = vsel %vm1867, %v1882, %v1886
      %v1888 = vshrl.u32 %v1866, 16
      %v1890 = vor.u32 %v1888, %v1886
      %1891 = vrot.lane.b32.xlu0 %v1879, 64
      %v1892 = vpop.permute.xlu0 %1891
      %1893 = vrot.lane.b32.xlu0 %v1887, 64
      %v1894 = vpop.permute.xlu0 %1893
      %1895 = vrot.lane.b32.xlu0 %v1890, 64
      %v1896 = vpop.permute.xlu0 %1895
      %vm1897 = vcmask 523264
      %v1899 = vsel %vm1897, %v1861, %v1892
      %v1901 = vsel %vm1897, %v1862, %v1894
      %v1904 = vsel %vm1897, %v1863, %v1896
      %v1908 = vunpack.c.l.b16 %v1899
      %v1909 = vunpack.c.h.b16 %v1899
      %v1910 = vunpack.c.l.b16 %v1901
      %v1911 = vunpack.c.h.b16 %v1901
      %v1912 = vunpack.c.l.b16 %v1904
      %v1913 = vunpack.c.h.b16 %v1904
      %v1914 = vpack.c.b16 %v1908, %v1908
      %v1915 = vpack.c.b16 %v1909, %v1909
      %v1916 = vpack.c.b16 %v1910, %v1910
      %v1917 = vpack.c.b16 %v1911, %v1911
      %v1918 = vpack.c.b16 %v1912, %v1912
      %v1919 = vpack.c.b16 %v1913, %v1913
      %1926 = vst [vmem:[#allocation3] sm:$0xf] %v1914
      %1927 = vst [vmem:[#allocation3 + $0x8] sm:$0xf] %v1915
      %1928 = vst [vmem:[#allocation3 + $0x10] sm:$0xf] %v1916
      %1929 = vst [vmem:[#allocation3 + $0x18] sm:$0xf] %v1917
      %1930 = vst [vmem:[#allocation3 + $0x20] sm:$0xf] %v1918
      %1931 = vst [vmem:[#allocation3 + $0x28] sm:$0x1] %v1919
      %v1932 = vld [vmem:[#allocation5] sm:$0xe]
      %v1933 = vld [vmem:[#allocation5 + $0x4] sm:$0xf]
      %v1934 = vld [vmem:[#allocation5 + $0x8] sm:$0xf]
      %v1935 = vld [vmem:[#allocation5 + $0xc] sm:$0xf]
      %v1936 = vld [vmem:[#allocation5 + $0x10] sm:$0xf]
      %v1937 = vld [vmem:[#allocation5 + $0x14] sm:$0x3]
      %v1938 = vld [vmem:[#allocation5 + $0x14] sm:$0x7]
      %v1945 = vunpack.c.l.b16 %v1932
      %v1946 = vunpack.c.l.b16 %v1933
      %v1947 = vunpack.c.l.b16 %v1934
      %v1948 = vunpack.c.l.b16 %v1935
      %v1949 = vunpack.c.l.b16 %v1936
      %v1950 = vunpack.c.l.b16 %v1937
      %v1951 = vpack.c.b16 %v1946, %v1945
      %v1952 = vpack.c.b16 %v1948, %v1947
      %v1953 = vpack.c.b16 %v1950, %v1949
      %v1955 = vunpack.c.l.b16 %v1938
      %v1956 = vpack.c.b16 %v1955, %v1949
      %v1958 = vshrl.u32 %v1951, 16
      %v1960 = vshll.u32 %v1951, 16
      %v1962 = vrot.slane %v1960, 1
      %v1963 = vor.u32 %v1958, %v1962
      %v1965 = vshll.u32 %v1952, 16
      %v1967 = vrot.slane %v1965, 1
      %v1968 = vsel %vm1867, %v1963, %v1967
      %v1969 = vshrl.u32 %v1952, 16
      %v1971 = vor.u32 %v1969, %v1967
      %v1973 = vshll.u32 %v1956, 16
      %v1975 = vrot.slane %v1973, 1
      %v1976 = vsel %vm1867, %v1971, %v1975
      %v1977 = vshrl.u32 %v1956, 16
      %v1979 = vor.u32 %v1977, %v1975
      %1980 = vrot.lane.b32.xlu0 %v1968, 64
      %v1981 = vpop.permute.xlu0 %1980
      %1982 = vrot.lane.b32.xlu0 %v1976, 64
      %v1983 = vpop.permute.xlu0 %1982
      %1984 = vrot.lane.b32.xlu0 %v1979, 64
      %v1985 = vpop.permute.xlu0 %1984
      %v1987 = vsel %vm1897, %v1951, %v1981
      %v1989 = vsel %vm1897, %v1952, %v1983
      %v1992 = vsel %vm1897, %v1953, %v1985
      %v1996 = vunpack.c.l.b16 %v1987
      %v1997 = vunpack.c.h.b16 %v1987
      %v1998 = vunpack.c.l.b16 %v1989
      %v1999 = vunpack.c.h.b16 %v1989
      %v2000 = vunpack.c.l.b16 %v1992
      %v2001 = vunpack.c.h.b16 %v1992
      %v2002 = vpack.c.b16 %v1996, %v1996
      %v2003 = vpack.c.b16 %v1997, %v1997
      %v2004 = vpack.c.b16 %v1998, %v1998
      %v2005 = vpack.c.b16 %v1999, %v1999
      %v2006 = vpack.c.b16 %v2000, %v2000
      %v2007 = vpack.c.b16 %v2001, %v2001
      %v2008 = vrot.slane %v2002, 5
      %v2009 = vrot.slane %v2008, 4
      %v2010 = vrot.slane %v2003, 5
      %v2011 = vsel %vm542, %v2009, %v2010
      %v2012 = vrot.slane %v2010, 4
      %v2013 = vrot.slane %v2004, 5
      %v2014 = vsel %vm542, %v2012, %v2013
      %v2015 = vrot.slane %v2013, 4
      %v2016 = vrot.slane %v2005, 5
      %v2017 = vsel %vm542, %v2015, %v2016
      %v2018 = vrot.slane %v2016, 4
      %v2019 = vrot.slane %v2006, 5
      %v2020 = vsel %vm542, %v2018, %v2019
      %v2021 = vrot.slane %v2019, 4
      %v2022 = vrot.slane %v2007, 5
      %v2023 = vsel %vm542, %v2021, %v2022
      %v2024 = vrot.slane %v2022, 4
      %2031 = vst [vmem:[#allocation3 + $0x4] sm:$0xf] %v2011
      %2032 = vst [vmem:[#allocation3 + $0xc] sm:$0xf] %v2014
      %2033 = vst [vmem:[#allocation3 + $0x14] sm:$0xf] %v2017
      %2034 = vst [vmem:[#allocation3 + $0x1c] sm:$0xf] %v2020
      %2035 = vst [vmem:[#allocation3 + $0x24] sm:$0xf] %v2023
      %2036 = vst [vmem:[#allocation3 + $0x2c] sm:$0x1] %v2024
      %v2037 = vld [vmem:[#allocation3] sm:$0xff]
      %v2038 = vld [vmem:[#allocation3 + $0x8] sm:$0xff]
      %v2039 = vld [vmem:[#allocation3 + $0x10] sm:$0xff]
      %v2040 = vld [vmem:[#allocation3 + $0x18] sm:$0xff]
      %v2041 = vld [vmem:[#allocation3 + $0x20] sm:$0xff]
      %v2042 = vld [vmem:[#allocation3 + $0x28] sm:$0x11]
      %v2043 = vld [vmem:[%s3] sm:$0xf]
      %v2044 = vld [vmem:[%s3 + $0x4] sm:$0xf]
      %v2045 = vld [vmem:[%s3 + $0x8] sm:$0xf]
      %v2046 = vld [vmem:[%s3 + $0xc] sm:$0xf]
      %v2047 = vld [vmem:[%s3 + $0x10] sm:$0xf]
      %v2048 = vld [vmem:[%s3 + $0x14] sm:$0xf]
      %v2049 = vld [vmem:[%s3 + $0x18] sm:$0xf]
      %v2050 = vld [vmem:[%s3 + $0x1c] sm:$0xf]
      %v2051 = vld [vmem:[%s3 + $0x20] sm:$0xf]
      %v2052 = vld [vmem:[%s3 + $0x24] sm:$0xf]
      %v2053 = vld [vmem:[%s3 + $0x28] sm:$0xf]
      %v2054 = vld [vmem:[%s3 + $0x2c] sm:$0xf]
      %v2055 = vld [vmem:[%s3 + $0x30] sm:$0xf]
      %v2056 = vld [vmem:[%s3 + $0x34] sm:$0xf]
      %v2057 = vld [vmem:[%s3 + $0x38] sm:$0xf]
      %v2058 = vld [vmem:[%s3 + $0x3c] sm:$0xf]
      %v2059 = vld [vmem:[%s3 + $0x40] sm:$0xf]
      %v2060 = vld [vmem:[%s3 + $0x44] sm:$0xf]
      %v2061 = vld [vmem:[%s3 + $0x48] sm:$0xf]
      %v2062 = vld [vmem:[%s3 + $0x4c] sm:$0xf]
      %v2063 = vld [vmem:[%s3 + $0x50] sm:$0xf]
      %v2064 = vld [vmem:[%s3 + $0x54] sm:$0xf]
      %v2065 = vld [vmem:[%s3 + $0x58] sm:$0xf]
      %v2066 = vld [vmem:[%s3 + $0x5c] sm:$0xf]
      %v2067 = vld [vmem:[%s3 + $0x60] sm:$0xf]
      %v2068 = vld [vmem:[%s3 + $0x64] sm:$0xf]
      %v2069 = vld [vmem:[%s3 + $0x68] sm:$0xf]
      %v2070 = vld [vmem:[%s3 + $0x6c] sm:$0xf]
      %v2071 = vld [vmem:[%s3 + $0x70] sm:$0xf]
      %v2072 = vld [vmem:[%s3 + $0x74] sm:$0xf]
      %v2073 = vld [vmem:[%s3 + $0x78] sm:$0xf]
      %v2074 = vld [vmem:[%s3 + $0x7c] sm:$0xf]
      %v2081 = vunpack.c.l.b16 %v2037
      %v2082 = vunpack.c.h.b16 %v2037
      %v2083 = vunpack.c.l.b16 %v2038
      %v2084 = vunpack.c.h.b16 %v2038
      %v2085 = vunpack.c.l.b16 %v2039
      %v2086 = vunpack.c.h.b16 %v2039
      %v2087 = vunpack.c.l.b16 %v2040
      %v2088 = vunpack.c.h.b16 %v2040
      %v2089 = vunpack.c.l.b16 %v2041
      %v2090 = vunpack.c.h.b16 %v2041
      %v2091 = vunpack.c.l.b16 %v2042
      %v2092 = vunpack.c.h.b16 %v2042
      %v2093 = vpack.c.b16 %v2083, %v2081
      %v2094 = vpack.c.b16 %v2084, %v2082
      %v2095 = vpack.c.b16 %v2087, %v2085
      %v2096 = vpack.c.b16 %v2088, %v2086
      %v2097 = vpack.c.b16 %v2091, %v2089
      %v2098 = vpack.c.b16 %v2092, %v2090
      %v2137 = vunpack.c.l.b16 %v2043
      %v2138 = vunpack.c.l.b16 %v2044
      %v2139 = vunpack.c.l.b16 %v2045
      %v2140 = vunpack.c.l.b16 %v2046
      %v2141 = vunpack.c.l.b16 %v2047
      %v2142 = vunpack.c.l.b16 %v2048
      %v2143 = vunpack.c.l.b16 %v2049
      %v2144 = vunpack.c.l.b16 %v2050
      %v2145 = vunpack.c.l.b16 %v2051
      %v2146 = vunpack.c.l.b16 %v2052
      %v2147 = vunpack.c.l.b16 %v2053
      %v2148 = vunpack.c.l.b16 %v2054
      %v2149 = vunpack.c.l.b16 %v2055
      %v2150 = vunpack.c.l.b16 %v2056
      %v2151 = vunpack.c.l.b16 %v2057
      %v2152 = vunpack.c.l.b16 %v2058
      %v2153 = vunpack.c.l.b16 %v2059
      %v2154 = vunpack.c.l.b16 %v2060
      %v2155 = vunpack.c.l.b16 %v2061
      %v2156 = vunpack.c.l.b16 %v2062
      %v2157 = vunpack.c.l.b16 %v2063
      %v2158 = vunpack.c.l.b16 %v2064
      %v2159 = vunpack.c.l.b16 %v2065
      %v2160 = vunpack.c.l.b16 %v2066
      %v2161 = vunpack.c.l.b16 %v2067
      %v2162 = vunpack.c.l.b16 %v2068
      %v2163 = vunpack.c.l.b16 %v2069
      %v2164 = vunpack.c.l.b16 %v2070
      %v2165 = vunpack.c.l.b16 %v2071
      %v2166 = vunpack.c.l.b16 %v2072
      %v2167 = vunpack.c.l.b16 %v2073
      %v2168 = vunpack.c.l.b16 %v2074
      %v2169 = vpack.c.b16 %v2138, %v2137
      %v2170 = vpack.c.b16 %v2140, %v2139
      %v2171 = vpack.c.b16 %v2142, %v2141
      %v2172 = vpack.c.b16 %v2144, %v2143
      %v2173 = vpack.c.b16 %v2146, %v2145
      %v2174 = vpack.c.b16 %v2148, %v2147
      %v2175 = vpack.c.b16 %v2150, %v2149
      %v2176 = vpack.c.b16 %v2152, %v2151
      %v2177 = vpack.c.b16 %v2154, %v2153
      %v2178 = vpack.c.b16 %v2156, %v2155
      %v2179 = vpack.c.b16 %v2158, %v2157
      %v2180 = vpack.c.b16 %v2160, %v2159
      %v2181 = vpack.c.b16 %v2162, %v2161
      %v2182 = vpack.c.b16 %v2164, %v2163
      %v2183 = vpack.c.b16 %v2166, %v2165
      %v2184 = vpack.c.b16 %v2168, %v2167
      %2201 = vmatprep.subr.bf16.mxu0 0
      %2202 = vmatpush1.bf16.msra.mxu0 %v2169
      %2203 = vmatprep.subr.bf16.mxu0 0
      %2204 = vmatpush1.bf16.msra.mxu0 %v2170
      %2205 = vmatprep.subr.bf16.mxu0 0
      %2206 = vmatpush1.bf16.msra.mxu0 %v2171
      %2207 = vmatprep.subr.bf16.mxu0 0
      %2208 = vmatpush1.bf16.msra.mxu0 %v2172
      %2209 = vmatprep.subr.bf16.mxu0 0
      %2210 = vmatpush1.bf16.msra.mxu0 %v2173
      %2211 = vmatprep.subr.bf16.mxu0 0
      %2212 = vmatpush1.bf16.msra.mxu0 %v2174
      %2213 = vmatprep.subr.bf16.mxu0 0
      %2214 = vmatpush1.bf16.msra.mxu0 %v2175
      %2215 = vmatprep.subr.bf16.mxu0 0
      %2216 = vmatpush1.bf16.msra.mxu0 %v2176
      %2217 = vmatprep.subr.bf16.mxu0 0
      %2218 = vmatpush1.bf16.msra.mxu0 %v2177
      %2219 = vmatprep.subr.bf16.mxu0 0
      %2220 = vmatpush1.bf16.msra.mxu0 %v2178
      %2221 = vmatprep.subr.bf16.mxu0 0
      %2222 = vmatpush1.bf16.msra.mxu0 %v2179
      %2223 = vmatprep.subr.bf16.mxu0 0
      %2224 = vmatpush1.bf16.msra.mxu0 %v2180
      %2225 = vmatprep.subr.bf16.mxu0 0
      %2226 = vmatpush1.bf16.msra.mxu0 %v2181
      %2227 = vmatprep.subr.bf16.mxu0 0
      %2228 = vmatpush1.bf16.msra.mxu0 %v2182
      %2229 = vmatprep.subr.bf16.mxu0 0
      %2230 = vmatpush1.bf16.msra.mxu0 %v2183
      %2231 = vmatprep.subr.bf16.mxu0 0
      %2232 = vmatpush1.bf16.msra.mxu0 %v2184
      %2233 = vmatprep.mubr.bf16.mxu0 %v2094
      %2234 = vmatmul.mubr.bf16.gmra.mrb[0].mxu0 %v2093
      %v2235 = vpop.f32.mrb[0].mxu0
      %v2236 = vadd.f32 0.0, %v2235
      %v2237 = vpop.f32.mrb[0].mxu0
      %v2238 = vpop.f32.mrb[0].mxu0
      %v2239 = vadd.f32 0.0, %v2238
      %v2240 = vpop.f32.mrb[0].mxu0
      %2241 = vmatprep.mubr.bf16.mxu0 %v2096
      %2242 = vmatmul.mubr.bf16.gmra.mrb[0].mxu0 %v2095
      %v2243 = vpop.f32.mrb[0].mxu0
      %v2244 = vadd.f32 0.0, %v2243
      %v2245 = vpop.f32.mrb[0].mxu0
      %v2246 = vpop.f32.mrb[0].mxu0
      %v2247 = vadd.f32 0.0, %v2246
      %v2248 = vpop.f32.mrb[0].mxu0
      %2249 = vmatprep.mubr.bf16.mxu0 %v2098
      %2250 = vmatmul.mubr.bf16.gmra.mrb[0].mxu0 %v2097
      %v2251 = vpop.f32.mrb[0].mxu0
      %v2252 = vadd.f32 0.0, %v2251
      %v2253 = vpop.f32.mrb[0].mxu0
      %v2254 = vpop.f32.mrb[0].mxu0
      %v2255 = vadd.f32 0.0, %v2254
      %v2256 = vpop.f32.mrb[0].mxu0
      %2257 = vdwg.mxu0
      %2258 = vst.msk [vmem:[#allocation6] sm:$0xff] %vm1897, %v2236
      %2259 = vst.msk [vmem:[#allocation6 + $0x8] sm:$0xff] %vm1897, %v2239
      %2260 = vst.msk [vmem:[#allocation6 + $0x10] sm:$0xff] %vm1897, %v2244
      %2261 = vst.msk [vmem:[#allocation6 + $0x18] sm:$0xff] %vm1897, %v2247
      %2262 = vst.msk [vmem:[#allocation6 + $0x20] sm:$0xff] %vm1897, %v2252
      %vm2263 = vcmask 517120
      %2264 = vst.msk [vmem:[#allocation6 + $0x28] sm:$0x3] %vm2263, %v2255
      %v2265 = vld [vmem:[#allocation5] sm:$0xc]
      %v2266 = vld [vmem:[#allocation5 + $0x4] sm:$0xf]
      %v2267 = vld [vmem:[#allocation5 + $0x8] sm:$0xf]
      %v2268 = vld [vmem:[#allocation5 + $0xc] sm:$0xf]
      %v2269 = vld [vmem:[#allocation5 + $0x10] sm:$0xf]
      %v2270 = vld [vmem:[#allocation5 + $0x14] sm:$0x7]
      %v2271 = vld [vmem:[#allocation5 + $0x14] sm:$0xf]
      %v2278 = vunpack.c.l.b16 %v2265
      %v2279 = vunpack.c.l.b16 %v2266
      %v2280 = vunpack.c.l.b16 %v2267
      %v2281 = vunpack.c.l.b16 %v2268
      %v2282 = vunpack.c.l.b16 %v2269
      %v2283 = vunpack.c.l.b16 %v2270
      %v2284 = vpack.c.b16 %v2279, %v2278
      %v2285 = vpack.c.b16 %v2281, %v2280
      %v2286 = vpack.c.b16 %v2283, %v2282
      %v2288 = vunpack.c.l.b16 %v2271
      %v2289 = vpack.c.b16 %v2288, %v2282
      %v2291 = vshrl.u32 %v2284, 16
      %v2293 = vshll.u32 %v2284, 16
      %v2295 = vrot.slane %v2293, 1
      %v2296 = vor.u32 %v2291, %v2295
      %v2298 = vshll.u32 %v2285, 16
      %v2300 = vrot.slane %v2298, 1
      %v2301 = vsel %vm1867, %v2296, %v2300
      %v2302 = vshrl.u32 %v2285, 16
      %v2304 = vor.u32 %v2302, %v2300
      %v2306 = vshll.u32 %v2289, 16
      %v2308 = vrot.slane %v2306, 1
      %v2309 = vsel %vm1867, %v2304, %v2308
      %v2310 = vshrl.u32 %v2289, 16
      %v2312 = vor.u32 %v2310, %v2308
      %2313 = vrot.lane.b32.xlu0 %v2301, 64
      %v2314 = vpop.permute.xlu0 %2313
      %2315 = vrot.lane.b32.xlu0 %v2309, 64
      %v2316 = vpop.permute.xlu0 %2315
      %2317 = vrot.lane.b32.xlu0 %v2312, 64
      %v2318 = vpop.permute.xlu0 %2317
      %v2320 = vsel %vm1897, %v2284, %v2314
      %v2322 = vsel %vm1897, %v2285, %v2316
      %v2325 = vsel %vm1897, %v2286, %v2318
      %v2329 = vunpack.c.l.b16 %v2320
      %v2330 = vunpack.c.h.b16 %v2320
      %v2331 = vunpack.c.l.b16 %v2322
      %v2332 = vunpack.c.h.b16 %v2322
      %v2333 = vunpack.c.l.b16 %v2325
      %v2334 = vunpack.c.h.b16 %v2325
      %v2335 = vpack.c.b16 %v2329, %v2329
      %v2336 = vpack.c.b16 %v2330, %v2330
      %v2337 = vpack.c.b16 %v2331, %v2331
      %v2338 = vpack.c.b16 %v2332, %v2332
      %v2339 = vpack.c.b16 %v2333, %v2333
      %v2340 = vpack.c.b16 %v2334, %v2334
      %v2341 = vrot.slane %v2335, 6
      %v2342 = vrot.slane %v2341, 4
      %v2343 = vrot.slane %v2336, 6
      %v2344 = vsel %vm748, %v2342, %v2343
      %v2345 = vrot.slane %v2343, 4
      %v2346 = vrot.slane %v2337, 6
      %v2347 = vsel %vm748, %v2345, %v2346
      %v2348 = vrot.slane %v2346, 4
      %v2349 = vrot.slane %v2338, 6
      %v2350 = vsel %vm748, %v2348, %v2349
      %v2351 = vrot.slane %v2349, 4
      %v2352 = vrot.slane %v2339, 6
      %v2353 = vsel %vm748, %v2351, %v2352
      %v2354 = vrot.slane %v2352, 4
      %v2355 = vrot.slane %v2340, 6
      %v2356 = vsel %vm748, %v2354, %v2355
      %v2357 = vrot.slane %v2355, 4
      %2364 = vst [vmem:[#allocation3] sm:$0xf] %v2344
      %2365 = vst [vmem:[#allocation3 + $0x8] sm:$0xf] %v2347
      %2366 = vst [vmem:[#allocation3 + $0x10] sm:$0xf] %v2350
      %2367 = vst [vmem:[#allocation3 + $0x18] sm:$0xf] %v2353
      %2368 = vst [vmem:[#allocation3 + $0x20] sm:$0xf] %v2356
      %2369 = vst [vmem:[#allocation3 + $0x28] sm:$0x1] %v2357
      %v2370 = vld [vmem:[#allocation5] sm:$0x8]
      %v2371 = vld [vmem:[#allocation5 + $0x4] sm:$0xf]
      %v2372 = vld [vmem:[#allocation5 + $0x8] sm:$0xf]
      %v2373 = vld [vmem:[#allocation5 + $0xc] sm:$0xf]
      %v2374 = vld [vmem:[#allocation5 + $0x10] sm:$0xf]
      %v2375 = vld [vmem:[#allocation5 + $0x14] sm:$0xf]
      %v2376 = vld [vmem:[#allocation5 + $0x18] sm:$0x1]
      %v2383 = vunpack.c.l.b16 %v2370
      %v2384 = vunpack.c.l.b16 %v2371
      %v2385 = vunpack.c.l.b16 %v2372
      %v2386 = vunpack.c.l.b16 %v2373
      %v2387 = vunpack.c.l.b16 %v2374
      %v2388 = vunpack.c.l.b16 %v2375
      %v2389 = vpack.c.b16 %v2384, %v2383
      %v2390 = vpack.c.b16 %v2386, %v2385
      %v2391 = vpack.c.b16 %v2388, %v2387
      %v2393 = vunpack.c.l.b16 %v2376
      %v2394 = vpack.c.b16 %v2393, %v2393
      %v2396 = vshrl.u32 %v2389, 16
      %v2398 = vshll.u32 %v2389, 16
      %v2400 = vrot.slane %v2398, 1
      %v2401 = vor.u32 %v2396, %v2400
      %v2403 = vshll.u32 %v2390, 16
      %v2405 = vrot.slane %v2403, 1
      %v2406 = vsel %vm1867, %v2401, %v2405
      %v2407 = vshrl.u32 %v2390, 16
      %v2409 = vor.u32 %v2407, %v2405
      %v2411 = vshll.u32 %v2391, 16
      %v2413 = vrot.slane %v2411, 1
      %v2414 = vsel %vm1867, %v2409, %v2413
      %v2415 = vshrl.u32 %v2391, 16
      %v2417 = vor.u32 %v2415, %v2413
      %v2419 = vshll.u32 %v2394, 16
      %v2421 = vrot.slane %v2419, 1
      %v2422 = vsel %vm1867, %v2417, %v2421
      %2423 = vrot.lane.b32.xlu0 %v2406, 64
      %v2424 = vpop.permute.xlu0 %2423
      %2425 = vrot.lane.b32.xlu0 %v2414, 64
      %v2426 = vpop.permute.xlu0 %2425
      %2427 = vrot.lane.b32.xlu0 %v2422, 64
      %v2428 = vpop.permute.xlu0 %2427
      %v2430 = vsel %vm1897, %v2389, %v2424
      %v2432 = vsel %vm1897, %v2390, %v2426
      %v2434 = vsel %vm1897, %v2391, %v2428
      %v2438 = vunpack.c.l.b16 %v2430
      %v2439 = vunpack.c.h.b16 %v2430
      %v2440 = vunpack.c.l.b16 %v2432
      %v2441 = vunpack.c.h.b16 %v2432
      %v2442 = vunpack.c.l.b16 %v2434
      %v2443 = vunpack.c.h.b16 %v2434
      %v2444 = vpack.c.b16 %v2438, %v2438
      %v2445 = vpack.c.b16 %v2439, %v2439
      %v2446 = vpack.c.b16 %v2440, %v2440
      %v2447 = vpack.c.b16 %v2441, %v2441
      %v2448 = vpack.c.b16 %v2442, %v2442
      %v2449 = vpack.c.b16 %v2443, %v2443
      %v2450 = vrot.slane %v2444, 7
      %v2451 = vrot.slane %v2450, 4
      %v2452 = vrot.slane %v2445, 7
      %v2453 = vsel %vm968, %v2451, %v2452
      %v2454 = vrot.slane %v2452, 4
      %v2455 = vrot.slane %v2446, 7
      %v2456 = vsel %vm968, %v2454, %v2455
      %v2457 = vrot.slane %v2455, 4
      %v2458 = vrot.slane %v2447, 7
      %v2459 = vsel %vm968, %v2457, %v2458
      %v2460 = vrot.slane %v2458, 4
      %v2461 = vrot.slane %v2448, 7
      %v2462 = vsel %vm968, %v2460, %v2461
      %v2463 = vrot.slane %v2461, 4
      %v2464 = vrot.slane %v2449, 7
      %v2465 = vsel %vm968, %v2463, %v2464
      %v2466 = vrot.slane %v2464, 4
      %2473 = vst [vmem:[#allocation3 + $0x4] sm:$0xf] %v2453
      %2474 = vst [vmem:[#allocation3 + $0xc] sm:$0xf] %v2456
      %2475 = vst [vmem:[#allocation3 + $0x14] sm:$0xf] %v2459
      %2476 = vst [vmem:[#allocation3 + $0x1c] sm:$0xf] %v2462
      %2477 = vst [vmem:[#allocation3 + $0x24] sm:$0xf] %v2465
      %2478 = vst [vmem:[#allocation3 + $0x2c] sm:$0x1] %v2466
      %v2479 = vld [vmem:[#allocation3] sm:$0xff]
      %v2480 = vld [vmem:[#allocation3 + $0x8] sm:$0xff]
      %v2481 = vld [vmem:[#allocation3 + $0x10] sm:$0xff]
      %v2482 = vld [vmem:[#allocation3 + $0x18] sm:$0xff]
      %v2483 = vld [vmem:[#allocation3 + $0x20] sm:$0xff]
      %v2484 = vld [vmem:[#allocation3 + $0x28] sm:$0x11]
      %v2485 = vld [vmem:[%s3 + $0x80] sm:$0xf]
      %v2486 = vld [vmem:[%s3 + $0x84] sm:$0xf]
      %v2487 = vld [vmem:[%s3 + $0x88] sm:$0xf]
      %v2488 = vld [vmem:[%s3 + $0x8c] sm:$0xf]
      %v2489 = vld [vmem:[%s3 + $0x90] sm:$0xf]
      %v2490 = vld [vmem:[%s3 + $0x94] sm:$0xf]
      %v2491 = vld [vmem:[%s3 + $0x98] sm:$0xf]
      %v2492 = vld [vmem:[%s3 + $0x9c] sm:$0xf]
      %v2493 = vld [vmem:[%s3 + $0xa0] sm:$0xf]
      %v2494 = vld [vmem:[%s3 + $0xa4] sm:$0xf]
      %v2495 = vld [vmem:[%s3 + $0xa8] sm:$0xf]
      %v2496 = vld [vmem:[%s3 + $0xac] sm:$0xf]
      %v2497 = vld [vmem:[%s3 + $0xb0] sm:$0xf]
      %v2498 = vld [vmem:[%s3 + $0xb4] sm:$0xf]
      %v2499 = vld [vmem:[%s3 + $0xb8] sm:$0xf]
      %v2500 = vld [vmem:[%s3 + $0xbc] sm:$0xf]
      %v2501 = vld [vmem:[%s3 + $0xc0] sm:$0xf]
      %v2502 = vld [vmem:[%s3 + $0xc4] sm:$0xf]
      %v2503 = vld [vmem:[%s3 + $0xc8] sm:$0xf]
      %v2504 = vld [vmem:[%s3 + $0xcc] sm:$0xf]
      %v2505 = vld [vmem:[%s3 + $0xd0] sm:$0xf]
      %v2506 = vld [vmem:[%s3 + $0xd4] sm:$0xf]
      %v2507 = vld [vmem:[%s3 + $0xd8] sm:$0xf]
      %v2508 = vld [vmem:[%s3 + $0xdc] sm:$0xf]
      %v2509 = vld [vmem:[%s3 + $0xe0] sm:$0xf]
      %v2510 = vld [vmem:[%s3 + $0xe4] sm:$0xf]
      %v2511 = vld [vmem:[%s3 + $0xe8] sm:$0xf]
      %v2512 = vld [vmem:[%s3 + $0xec] sm:$0xf]
      %v2513 = vld [vmem:[%s3 + $0xf0] sm:$0xf]
      %v2514 = vld [vmem:[%s3 + $0xf4] sm:$0xf]
      %v2515 = vld [vmem:[%s3 + $0xf8] sm:$0xf]
      %v2516 = vld [vmem:[%s3 + $0xfc] sm:$0xf]
      %v2523 = vunpack.c.l.b16 %v2479
      %v2524 = vunpack.c.h.b16 %v2479
      %v2525 = vunpack.c.l.b16 %v2480
      %v2526 = vunpack.c.h.b16 %v2480
      %v2527 = vunpack.c.l.b16 %v2481
      %v2528 = vunpack.c.h.b16 %v2481
      %v2529 = vunpack.c.l.b16 %v2482
      %v2530 = vunpack.c.h.b16 %v2482
      %v2531 = vunpack.c.l.b16 %v2483
      %v2532 = vunpack.c.h.b16 %v2483
      %v2533 = vunpack.c.l.b16 %v2484
      %v2534 = vunpack.c.h.b16 %v2484
      %v2535 = vpack.c.b16 %v2525, %v2523
      %v2536 = vpack.c.b16 %v2526, %v2524
      %v2537 = vpack.c.b16 %v2529, %v2527
      %v2538 = vpack.c.b16 %v2530, %v2528
      %v2539 = vpack.c.b16 %v2533, %v2531
      %v2540 = vpack.c.b16 %v2534, %v2532
      %v2579 = vunpack.c.l.b16 %v2485
      %v2580 = vunpack.c.l.b16 %v2486
      %v2581 = vunpack.c.l.b16 %v2487
      %v2582 = vunpack.c.l.b16 %v2488
      %v2583 = vunpack.c.l.b16 %v2489
      %v2584 = vunpack.c.l.b16 %v2490
      %v2585 = vunpack.c.l.b16 %v2491
      %v2586 = vunpack.c.l.b16 %v2492
      %v2587 = vunpack.c.l.b16 %v2493
      %v2588 = vunpack.c.l.b16 %v2494
      %v2589 = vunpack.c.l.b16 %v2495
      %v2590 = vunpack.c.l.b16 %v2496
      %v2591 = vunpack.c.l.b16 %v2497
      %v2592 = vunpack.c.l.b16 %v2498
      %v2593 = vunpack.c.l.b16 %v2499
      %v2594 = vunpack.c.l.b16 %v2500
      %v2595 = vunpack.c.l.b16 %v2501
      %v2596 = vunpack.c.l.b16 %v2502
      %v2597 = vunpack.c.l.b16 %v2503
      %v2598 = vunpack.c.l.b16 %v2504
      %v2599 = vunpack.c.l.b16 %v2505
      %v2600 = vunpack.c.l.b16 %v2506
      %v2601 = vunpack.c.l.b16 %v2507
      %v2602 = vunpack.c.l.b16 %v2508
      %v2603 = vunpack.c.l.b16 %v2509
      %v2604 = vunpack.c.l.b16 %v2510
      %v2605 = vunpack.c.l.b16 %v2511
      %v2606 = vunpack.c.l.b16 %v2512
      %v2607 = vunpack.c.l.b16 %v2513
      %v2608 = vunpack.c.l.b16 %v2514
      %v2609 = vunpack.c.l.b16 %v2515
      %v2610 = vunpack.c.l.b16 %v2516
      %v2611 = vpack.c.b16 %v2580, %v2579
      %v2612 = vpack.c.b16 %v2582, %v2581
      %v2613 = vpack.c.b16 %v2584, %v2583
      %v2614 = vpack.c.b16 %v2586, %v2585
      %v2615 = vpack.c.b16 %v2588, %v2587
      %v2616 = vpack.c.b16 %v2590, %v2589
      %v2617 = vpack.c.b16 %v2592, %v2591
      %v2618 = vpack.c.b16 %v2594, %v2593
      %v2619 = vpack.c.b16 %v2596, %v2595
      %v2620 = vpack.c.b16 %v2598, %v2597
      %v2621 = vpack.c.b16 %v2600, %v2599
      %v2622 = vpack.c.b16 %v2602, %v2601
      %v2623 = vpack.c.b16 %v2604, %v2603
      %v2624 = vpack.c.b16 %v2606, %v2605
      %v2625 = vpack.c.b16 %v2608, %v2607
      %v2626 = vpack.c.b16 %v2610, %v2609
      %2643 = vmatprep.subr.bf16.mxu0 0
      %2644 = vmatpush1.bf16.msra.mxu0 %v2611
      %2645 = vmatprep.subr.bf16.mxu0 0
      %2646 = vmatpush1.bf16.msra.mxu0 %v2612
      %2647 = vmatprep.subr.bf16.mxu0 0
      %2648 = vmatpush1.bf16.msra.mxu0 %v2613
      %2649 = vmatprep.subr.bf16.mxu0 0
      %2650 = vmatpush1.bf16.msra.mxu0 %v2614
      %2651 = vmatprep.subr.bf16.mxu0 0
      %2652 = vmatpush1.bf16.msra.mxu0 %v2615
      %2653 = vmatprep.subr.bf16.mxu0 0
      %2654 = vmatpush1.bf16.msra.mxu0 %v2616
      %2655 = vmatprep.subr.bf16.mxu0 0
      %2656 = vmatpush1.bf16.msra.mxu0 %v2617
      %2657 = vmatprep.subr.bf16.mxu0 0
      %2658 = vmatpush1.bf16.msra.mxu0 %v2618
      %2659 = vmatprep.subr.bf16.mxu0 0
      %2660 = vmatpush1.bf16.msra.mxu0 %v2619
      %2661 = vmatprep.subr.bf16.mxu0 0
      %2662 = vmatpush1.bf16.msra.mxu0 %v2620
      %2663 = vmatprep.subr.bf16.mxu0 0
      %2664 = vmatpush1.bf16.msra.mxu0 %v2621
      %2665 = vmatprep.subr.bf16.mxu0 0
      %2666 = vmatpush1.bf16.msra.mxu0 %v2622
      %2667 = vmatprep.subr.bf16.mxu0 0
      %2668 = vmatpush1.bf16.msra.mxu0 %v2623
      %2669 = vmatprep.subr.bf16.mxu0 0
      %2670 = vmatpush1.bf16.msra.mxu0 %v2624
      %2671 = vmatprep.subr.bf16.mxu0 0
      %2672 = vmatpush1.bf16.msra.mxu0 %v2625
      %2673 = vmatprep.subr.bf16.mxu0 0
      %2674 = vmatpush1.bf16.msra.mxu0 %v2626
      %2675 = vmatprep.mubr.bf16.mxu0 %v2536
      %2676 = vmatmul.mubr.bf16.gmra.mrb[0].mxu0 %v2535
      %v2677 = vpop.f32.mrb[0].mxu0
      %v2678 = vadd.f32 0.0, %v2677
      %v2679 = vpop.f32.mrb[0].mxu0
      %v2680 = vpop.f32.mrb[0].mxu0
      %v2681 = vadd.f32 0.0, %v2680
      %v2682 = vpop.f32.mrb[0].mxu0
      %2683 = vmatprep.mubr.bf16.mxu0 %v2538
      %2684 = vmatmul.mubr.bf16.gmra.mrb[0].mxu0 %v2537
      %v2685 = vpop.f32.mrb[0].mxu0
      %v2686 = vadd.f32 0.0, %v2685
      %v2687 = vpop.f32.mrb[0].mxu0
      %v2688 = vpop.f32.mrb[0].mxu0
      %v2689 = vadd.f32 0.0, %v2688
      %v2690 = vpop.f32.mrb[0].mxu0
      %2691 = vmatprep.mubr.bf16.mxu0 %v2540
      %2692 = vmatmul.mubr.bf16.gmra.mrb[0].mxu0 %v2539
      %v2693 = vpop.f32.mrb[0].mxu0
      %v2694 = vadd.f32 0.0, %v2693
      %v2695 = vpop.f32.mrb[0].mxu0
      %v2696 = vpop.f32.mrb[0].mxu0
      %v2697 = vadd.f32 0.0, %v2696
      %v2698 = vpop.f32.mrb[0].mxu0
      %2699 = vdwg.mxu0
      %v2700 = vld [vmem:[#allocation6] sm:$0xff]
      %v2701 = vld [vmem:[#allocation6 + $0x8] sm:$0xff]
      %v2702 = vld [vmem:[#allocation6 + $0x10] sm:$0xff]
      %v2703 = vld [vmem:[#allocation6 + $0x18] sm:$0xff]
      %v2704 = vld [vmem:[#allocation6 + $0x20] sm:$0xff]
      %v2705 = vld [vmem:[#allocation6 + $0x28] sm:$0x3]
      %v2706 = vadd.f32 %v2700, %v2678
      %v2707 = vadd.f32 %v2701, %v2681
      %v2708 = vadd.f32 %v2702, %v2686
      %v2709 = vadd.f32 %v2703, %v2689
      %v2710 = vadd.f32 %v2704, %v2694
      %v2711 = vadd.f32 %v2705, %v2697
      %2712 = vst.msk [vmem:[#allocation6] sm:$0xff] %vm1897, %v2706
      %2713 = vst.msk [vmem:[#allocation6 + $0x8] sm:$0xff] %vm1897, %v2707
      %2714 = vst.msk [vmem:[#allocation6 + $0x10] sm:$0xff] %vm1897, %v2708
      %2715 = vst.msk [vmem:[#allocation6 + $0x18] sm:$0xff] %vm1897, %v2709
      %2716 = vst.msk [vmem:[#allocation6 + $0x20] sm:$0xff] %vm1897, %v2710
      %2717 = vst.msk [vmem:[#allocation6 + $0x28] sm:$0x3] %vm2263, %v2711
      %v2718 = vld [vmem:[#allocation5 + $0x4] sm:$0xf]
      %v2719 = vld [vmem:[#allocation5 + $0x8] sm:$0xf]
      %v2720 = vld [vmem:[#allocation5 + $0xc] sm:$0xf]
      %v2721 = vld [vmem:[#allocation5 + $0x10] sm:$0xf]
      %v2722 = vld [vmem:[#allocation5 + $0x14] sm:$0xf]
      %v2723 = vld [vmem:[#allocation5 + $0x18] sm:$0x1]
      %v2724 = vld [vmem:[#allocation5 + $0x18] sm:$0x3]
      %v2731 = vunpack.c.l.b16 %v2718
      %v2732 = vunpack.c.l.b16 %v2719
      %v2733 = vunpack.c.l.b16 %v2720
      %v2734 = vunpack.c.l.b16 %v2721
      %v2735 = vunpack.c.l.b16 %v2722
      %v2736 = vunpack.c.l.b16 %v2723
      %v2737 = vpack.c.b16 %v2732, %v2731
      %v2738 = vpack.c.b16 %v2734, %v2733
      %v2739 = vpack.c.b16 %v2736, %v2735
      %v2741 = vunpack.c.l.b16 %v2724
      %v2742 = vpack.c.b16 %v2741, %v2735
      %v2744 = vshrl.u32 %v2737, 16
      %v2746 = vshll.u32 %v2737, 16
      %v2748 = vrot.slane %v2746, 1
      %v2749 = vor.u32 %v2744, %v2748
      %v2751 = vshll.u32 %v2738, 16
      %v2753 = vrot.slane %v2751, 1
      %v2754 = vsel %vm1867, %v2749, %v2753
      %v2755 = vshrl.u32 %v2738, 16
      %v2757 = vor.u32 %v2755, %v2753
      %v2759 = vshll.u32 %v2742, 16
      %v2761 = vrot.slane %v2759, 1
      %v2762 = vsel %vm1867, %v2757, %v2761
      %v2763 = vshrl.u32 %v2742, 16
      %v2765 = vor.u32 %v2763, %v2761
      %2766 = vrot.lane.b32.xlu0 %v2754, 64
      %v2767 = vpop.permute.xlu0 %2766
      %2768 = vrot.lane.b32.xlu0 %v2762, 64
      %v2769 = vpop.permute.xlu0 %2768
      %2770 = vrot.lane.b32.xlu0 %v2765, 64
      %v2771 = vpop.permute.xlu0 %2770
      %v2773 = vsel %vm1897, %v2737, %v2767
      %v2775 = vsel %vm1897, %v2738, %v2769
      %v2778 = vsel %vm1897, %v2739, %v2771
      %v2782 = vunpack.c.l.b16 %v2773
      %v2783 = vunpack.c.h.b16 %v2773
      %v2784 = vunpack.c.l.b16 %v2775
      %v2785 = vunpack.c.h.b16 %v2775
      %v2786 = vunpack.c.l.b16 %v2778
      %v2787 = vunpack.c.h.b16 %v2778
      %v2788 = vpack.c.b16 %v2782, %v2782
      %v2789 = vpack.c.b16 %v2783, %v2783
      %v2790 = vpack.c.b16 %v2784, %v2784
      %v2791 = vpack.c.b16 %v2785, %v2785
      %v2792 = vpack.c.b16 %v2786, %v2786
      %v2793 = vpack.c.b16 %v2787, %v2787
      %2800 = vst [vmem:[#allocation3] sm:$0xf] %v2788
      %2801 = vst [vmem:[#allocation3 + $0x8] sm:$0xf] %v2789
      %2802 = vst [vmem:[#allocation3 + $0x10] sm:$0xf] %v2790
      %2803 = vst [vmem:[#allocation3 + $0x18] sm:$0xf] %v2791
      %2804 = vst [vmem:[#allocation3 + $0x20] sm:$0xf] %v2792
      %2805 = vst [vmem:[#allocation3 + $0x28] sm:$0x1] %v2793
      %v2806 = vld [vmem:[#allocation5 + $0x4] sm:$0xe]
      %v2807 = vld [vmem:[#allocation5 + $0x8] sm:$0xf]
      %v2808 = vld [vmem:[#allocation5 + $0xc] sm:$0xf]
      %v2809 = vld [vmem:[#allocation5 + $0x10] sm:$0xf]
      %v2810 = vld [vmem:[#allocation5 + $0x14] sm:$0xf]
      %v2811 = vld [vmem:[#allocation5 + $0x18] sm:$0x3]
      %v2812 = vld [vmem:[#allocation5 + $0x18] sm:$0x7]
      %v2819 = vunpack.c.l.b16 %v2806
      %v2820 = vunpack.c.l.b16 %v2807
      %v2821 = vunpack.c.l.b16 %v2808
      %v2822 = vunpack.c.l.b16 %v2809
      %v2823 = vunpack.c.l.b16 %v2810
      %v2824 = vunpack.c.l.b16 %v2811
      %v2825 = vpack.c.b16 %v2820, %v2819
      %v2826 = vpack.c.b16 %v2822, %v2821
      %v2827 = vpack.c.b16 %v2824, %v2823
      %v2829 = vunpack.c.l.b16 %v2812
      %v2830 = vpack.c.b16 %v2829, %v2823
      %v2832 = vshrl.u32 %v2825, 16
      %v2834 = vshll.u32 %v2825, 16
      %v2836 = vrot.slane %v2834, 1
      %v2837 = vor.u32 %v2832, %v2836
      %v2839 = vshll.u32 %v2826, 16
      %v2841 = vrot.slane %v2839, 1
      %v2842 = vsel %vm1867, %v2837, %v2841
      %v2843 = vshrl.u32 %v2826, 16
      %v2845 = vor.u32 %v2843, %v2841
      %v2847 = vshll.u32 %v2830, 16
      %v2849 = vrot.slane %v2847, 1
      %v2850 = vsel %vm1867, %v2845, %v2849
      %v2851 = vshrl.u32 %v2830, 16
      %v2853 = vor.u32 %v2851, %v2849
      %2854 = vrot.lane.b32.xlu0 %v2842, 64
      %v2855 = vpop.permute.xlu0 %2854
      %2856 = vrot.lane.b32.xlu0 %v2850, 64
      %v2857 = vpop.permute.xlu0 %2856
      %2858 = vrot.lane.b32.xlu0 %v2853, 64
      %v2859 = vpop.permute.xlu0 %2858
      %v2861 = vsel %vm1897, %v2825, %v2855
      %v2863 = vsel %vm1897, %v2826, %v2857
      %v2866 = vsel %vm1897, %v2827, %v2859
      %v2870 = vunpack.c.l.b16 %v2861
      %v2871 = vunpack.c.h.b16 %v2861
      %v2872 = vunpack.c.l.b16 %v2863
      %v2873 = vunpack.c.h.b16 %v2863
      %v2874 = vunpack.c.l.b16 %v2866
      %v2875 = vunpack.c.h.b16 %v2866
      %v2876 = vpack.c.b16 %v2870, %v2870
      %v2877 = vpack.c.b16 %v2871, %v2871
      %v2878 = vpack.c.b16 %v2872, %v2872
      %v2879 = vpack.c.b16 %v2873, %v2873
      %v2880 = vpack.c.b16 %v2874, %v2874
      %v2881 = vpack.c.b16 %v2875, %v2875
      %v2882 = vrot.slane %v2876, 5
      %v2883 = vrot.slane %v2882, 4
      %v2884 = vrot.slane %v2877, 5
      %v2885 = vsel %vm542, %v2883, %v2884
      %v2886 = vrot.slane %v2884, 4
      %v2887 = vrot.slane %v2878, 5
      %v2888 = vsel %vm542, %v2886, %v2887
      %v2889 = vrot.slane %v2887, 4
      %v2890 = vrot.slane %v2879, 5
      %v2891 = vsel %vm542, %v2889, %v2890
      %v2892 = vrot.slane %v2890, 4
      %v2893 = vrot.slane %v2880, 5
      %v2894 = vsel %vm542, %v2892, %v2893
      %v2895 = vrot.slane %v2893, 4
      %v2896 = vrot.slane %v2881, 5
      %v2897 = vsel %vm542, %v2895, %v2896
      %v2898 = vrot.slane %v2896, 4
      %2905 = vst [vmem:[#allocation3 + $0x4] sm:$0xf] %v2885
      %2906 = vst [vmem:[#allocation3 + $0xc] sm:$0xf] %v2888
      %2907 = vst [vmem:[#allocation3 + $0x14] sm:$0xf] %v2891
      %2908 = vst [vmem:[#allocation3 + $0x1c] sm:$0xf] %v2894
      %2909 = vst [vmem:[#allocation3 + $0x24] sm:$0xf] %v2897
      %2910 = vst [vmem:[#allocation3 + $0x2c] sm:$0x1] %v2898
      %v2911 = vld [vmem:[#allocation3] sm:$0xff]
      %v2912 = vld [vmem:[#allocation3 + $0x8] sm:$0xff]
      %v2913 = vld [vmem:[#allocation3 + $0x10] sm:$0xff]
      %v2914 = vld [vmem:[#allocation3 + $0x18] sm:$0xff]
      %v2915 = vld [vmem:[#allocation3 + $0x20] sm:$0xff]
      %v2916 = vld [vmem:[#allocation3 + $0x28] sm:$0x11]
      %v2917 = vld [vmem:[%s3 + $0x100] sm:$0xf]
      %v2918 = vld [vmem:[%s3 + $0x104] sm:$0xf]
      %v2919 = vld [vmem:[%s3 + $0x108] sm:$0xf]
      %v2920 = vld [vmem:[%s3 + $0x10c] sm:$0xf]
      %v2921 = vld [vmem:[%s3 + $0x110] sm:$0xf]
      %v2922 = vld [vmem:[%s3 + $0x114] sm:$0xf]
      %v2923 = vld [vmem:[%s3 + $0x118] sm:$0xf]
      %v2924 = vld [vmem:[%s3 + $0x11c] sm:$0xf]
      %v2925 = vld [vmem:[%s3 + $0x120] sm:$0xf]
      %v2926 = vld [vmem:[%s3 + $0x124] sm:$0xf]
      %v2927 = vld [vmem:[%s3 + $0x128] sm:$0xf]
      %v2928 = vld [vmem:[%s3 + $0x12c] sm:$0xf]
      %v2929 = vld [vmem:[%s3 + $0x130] sm:$0xf]
      %v2930 = vld [vmem:[%s3 + $0x134] sm:$0xf]
      %v2931 = vld [vmem:[%s3 + $0x138] sm:$0xf]
      %v2932 = vld [vmem:[%s3 + $0x13c] sm:$0xf]
      %v2933 = vld [vmem:[%s3 + $0x140] sm:$0xf]
      %v2934 = vld [vmem:[%s3 + $0x144] sm:$0xf]
      %v2935 = vld [vmem:[%s3 + $0x148] sm:$0xf]
      %v2936 = vld [vmem:[%s3 + $0x14c] sm:$0xf]
      %v2937 = vld [vmem:[%s3 + $0x150] sm:$0xf]
      %v2938 = vld [vmem:[%s3 + $0x154] sm:$0xf]
      %v2939 = vld [vmem:[%s3 + $0x158] sm:$0xf]
      %v2940 = vld [vmem:[%s3 + $0x15c] sm:$0xf]
      %v2941 = vld [vmem:[%s3 + $0x160] sm:$0xf]
      %v2942 = vld [vmem:[%s3 + $0x164] sm:$0xf]
      %v2943 = vld [vmem:[%s3 + $0x168] sm:$0xf]
      %v2944 = vld [vmem:[%s3 + $0x16c] sm:$0xf]
      %v2945 = vld [vmem:[%s3 + $0x170] sm:$0xf]
      %v2946 = vld [vmem:[%s3 + $0x174] sm:$0xf]
      %v2947 = vld [vmem:[%s3 + $0x178] sm:$0xf]
      %v2948 = vld [vmem:[%s3 + $0x17c] sm:$0xf]
      %v2955 = vunpack.c.l.b16 %v2911
      %v2956 = vunpack.c.h.b16 %v2911
      %v2957 = vunpack.c.l.b16 %v2912
      %v2958 = vunpack.c.h.b16 %v2912
      %v2959 = vunpack.c.l.b16 %v2913
      %v2960 = vunpack.c.h.b16 %v2913
      %v2961 = vunpack.c.l.b16 %v2914
      %v2962 = vunpack.c.h.b16 %v2914
      %v2963 = vunpack.c.l.b16 %v2915
      %v2964 = vunpack.c.h.b16 %v2915
      %v2965 = vunpack.c.l.b16 %v2916
      %v2966 = vunpack.c.h.b16 %v2916
      %v2967 = vpack.c.b16 %v2957, %v2955
      %v2968 = vpack.c.b16 %v2958, %v2956
      %v2969 = vpack.c.b16 %v2961, %v2959
      %v2970 = vpack.c.b16 %v2962, %v2960
      %v2971 = vpack.c.b16 %v2965, %v2963
      %v2972 = vpack.c.b16 %v2966, %v2964
      %v3011 = vunpack.c.l.b16 %v2917
      %v3012 = vunpack.c.l.b16 %v2918
      %v3013 = vunpack.c.l.b16 %v2919
      %v3014 = vunpack.c.l.b16 %v2920
      %v3015 = vunpack.c.l.b16 %v2921
      %v3016 = vunpack.c.l.b16 %v2922
      %v3017 = vunpack.c.l.b16 %v2923
      %v3018 = vunpack.c.l.b16 %v2924
      %v3019 = vunpack.c.l.b16 %v2925
      %v3020 = vunpack.c.l.b16 %v2926
      %v3021 = vunpack.c.l.b16 %v2927
      %v3022 = vunpack.c.l.b16 %v2928
      %v3023 = vunpack.c.l.b16 %v2929
      %v3024 = vunpack.c.l.b16 %v2930
      %v3025 = vunpack.c.l.b16 %v2931
      %v3026 = vunpack.c.l.b16 %v2932
      %v3027 = vunpack.c.l.b16 %v2933
      %v3028 = vunpack.c.l.b16 %v2934
      %v3029 = vunpack.c.l.b16 %v2935
      %v3030 = vunpack.c.l.b16 %v2936
      %v3031 = vunpack.c.l.b16 %v2937
      %v3032 = vunpack.c.l.b16 %v2938
      %v3033 = vunpack.c.l.b16 %v2939
      %v3034 = vunpack.c.l.b16 %v2940
      %v3035 = vunpack.c.l.b16 %v2941
      %v3036 = vunpack.c.l.b16 %v2942
      %v3037 = vunpack.c.l.b16 %v2943
      %v3038 = vunpack.c.l.b16 %v2944
      %v3039 = vunpack.c.l.b16 %v2945
      %v3040 = vunpack.c.l.b16 %v2946
      %v3041 = vunpack.c.l.b16 %v2947
      %v3042 = vunpack.c.l.b16 %v2948
      %v3043 = vpack.c.b16 %v3012, %v3011
      %v3044 = vpack.c.b16 %v3014, %v3013
      %v3045 = vpack.c.b16 %v3016, %v3015
      %v3046 = vpack.c.b16 %v3018, %v3017
      %v3047 = vpack.c.b16 %v3020, %v3019
      %v3048 = vpack.c.b16 %v3022, %v3021
      %v3049 = vpack.c.b16 %v3024, %v3023
      %v3050 = vpack.c.b16 %v3026, %v3025
      %v3051 = vpack.c.b16 %v3028, %v3027
      %v3052 = vpack.c.b16 %v3030, %v3029
      %v3053 = vpack.c.b16 %v3032, %v3031
      %v3054 = vpack.c.b16 %v3034, %v3033
      %v3055 = vpack.c.b16 %v3036, %v3035
      %v3056 = vpack.c.b16 %v3038, %v3037
      %v3057 = vpack.c.b16 %v3040, %v3039
      %v3058 = vpack.c.b16 %v3042, %v3041
      %3075 = vmatprep.subr.bf16.mxu0 0
      %3076 = vmatpush1.bf16.msra.mxu0 %v3043
      %3077 = vmatprep.subr.bf16.mxu0 0
      %3078 = vmatpush1.bf16.msra.mxu0 %v3044
      %3079 = vmatprep.subr.bf16.mxu0 0
      %3080 = vmatpush1.bf16.msra.mxu0 %v3045
      %3081 = vmatprep.subr.bf16.mxu0 0
      %3082 = vmatpush1.bf16.msra.mxu0 %v3046
      %3083 = vmatprep.subr.bf16.mxu0 0
      %3084 = vmatpush1.bf16.msra.mxu0 %v3047
      %3085 = vmatprep.subr.bf16.mxu0 0
      %3086 = vmatpush1.bf16.msra.mxu0 %v3048
      %3087 = vmatprep.subr.bf16.mxu0 0
      %3088 = vmatpush1.bf16.msra.mxu0 %v3049
      %3089 = vmatprep.subr.bf16.mxu0 0
      %3090 = vmatpush1.bf16.msra.mxu0 %v3050
      %3091 = vmatprep.subr.bf16.mxu0 0
      %3092 = vmatpush1.bf16.msra.mxu0 %v3051
      %3093 = vmatprep.subr.bf16.mxu0 0
      %3094 = vmatpush1.bf16.msra.mxu0 %v3052
      %3095 = vmatprep.subr.bf16.mxu0 0
      %3096 = vmatpush1.bf16.msra.mxu0 %v3053
      %3097 = vmatprep.subr.bf16.mxu0 0
      %3098 = vmatpush1.bf16.msra.mxu0 %v3054
      %3099 = vmatprep.subr.bf16.mxu0 0
      %3100 = vmatpush1.bf16.msra.mxu0 %v3055
      %3101 = vmatprep.subr.bf16.mxu0 0
      %3102 = vmatpush1.bf16.msra.mxu0 %v3056
      %3103 = vmatprep.subr.bf16.mxu0 0
      %3104 = vmatpush1.bf16.msra.mxu0 %v3057
      %3105 = vmatprep.subr.bf16.mxu0 0
      %3106 = vmatpush1.bf16.msra.mxu0 %v3058
      %3107 = vmatprep.mubr.bf16.mxu0 %v2968
      %3108 = vmatmul.mubr.bf16.gmra.mrb[0].mxu0 %v2967
      %v3109 = vpop.f32.mrb[0].mxu0
      %v3110 = vadd.f32 0.0, %v3109
      %v3111 = vpop.f32.mrb[0].mxu0
      %v3112 = vpop.f32.mrb[0].mxu0
      %v3113 = vadd.f32 0.0, %v3112
      %v3114 = vpop.f32.mrb[0].mxu0
      %3115 = vmatprep.mubr.bf16.mxu0 %v2970
      %3116 = vmatmul.mubr.bf16.gmra.mrb[0].mxu0 %v2969
      %v3117 = vpop.f32.mrb[0].mxu0
      %v3118 = vadd.f32 0.0, %v3117
      %v3119 = vpop.f32.mrb[0].mxu0
      %v3120 = vpop.f32.mrb[0].mxu0
      %v3121 = vadd.f32 0.0, %v3120
      %v3122 = vpop.f32.mrb[0].mxu0
      %3123 = vmatprep.mubr.bf16.mxu0 %v2972
      %3124 = vmatmul.mubr.bf16.gmra.mrb[0].mxu0 %v2971
      %v3125 = vpop.f32.mrb[0].mxu0
      %v3126 = vadd.f32 0.0, %v3125
      %v3127 = vpop.f32.mrb[0].mxu0
      %v3128 = vpop.f32.mrb[0].mxu0
      %v3129 = vadd.f32 0.0, %v3128
      %v3130 = vpop.f32.mrb[0].mxu0
      %3131 = vdwg.mxu0
      %v3132 = vld [vmem:[#allocation6] sm:$0xff]
      %v3133 = vld [vmem:[#allocation6 + $0x8] sm:$0xff]
      %v3134 = vld [vmem:[#allocation6 + $0x10] sm:$0xff]
      %v3135 = vld [vmem:[#allocation6 + $0x18] sm:$0xff]
      %v3136 = vld [vmem:[#allocation6 + $0x20] sm:$0xff]
      %v3137 = vld [vmem:[#allocation6 + $0x28] sm:$0x3]
      %v3138 = vadd.f32 %v3132, %v3110
      %v3139 = vadd.f32 %v3133, %v3113
      %v3140 = vadd.f32 %v3134, %v3118
      %v3141 = vadd.f32 %v3135, %v3121
      %v3142 = vadd.f32 %v3136, %v3126
      %v3143 = vadd.f32 %v3137, %v3129
      %3144 = vst.msk [vmem:[#allocation6] sm:$0xff] %vm1897, %v3138
      %3145 = vst.msk [vmem:[#allocation6 + $0x8] sm:$0xff] %vm1897, %v3139
      %3146 = vst.msk [vmem:[#allocation6 + $0x10] sm:$0xff] %vm1897, %v3140
      %3147 = vst.msk [vmem:[#allocation6 + $0x18] sm:$0xff] %vm1897, %v3141
      %3148 = vst.msk [vmem:[#allocation6 + $0x20] sm:$0xff] %vm1897, %v3142
      %3149 = vst.msk [vmem:[#allocation6 + $0x28] sm:$0x3] %vm2263, %v3143
      %v3150 = vld [vmem:[#allocation6] sm:$0xff]
      %v3151 = vld [vmem:[#allocation6 + $0x8] sm:$0xff]
      %v3152 = vld [vmem:[#allocation6 + $0x10] sm:$0xff]
      %v3153 = vld [vmem:[#allocation6 + $0x18] sm:$0xff]
      %v3154 = vld [vmem:[#allocation6 + $0x20] sm:$0xff]
      %v3155 = vld [vmem:[#allocation6 + $0x28] sm:$0x3]
      %v3156 = vld [vmem:[%s4] sm:$0x1]
      %v3158 = vlaneseq
      %v3159 = vshrl.u32 %v3158, 7
      %v3160 = vsub.s32 0, %v3159
      %v3161 = vrot.slane %v3156, %v3160
      %v3163 = vadd.f32 %v3150, %v3161
      %v3164 = vadd.f32 %v3151, %v3161
      %v3165 = vadd.f32 %v3152, %v3161
      %v3166 = vadd.f32 %v3153, %v3161
      %v3167 = vadd.f32 %v3154, %v3161
      %v3168 = vadd.f32 %v3155, %v3161
      %v3169 = vmax.f32 %v3163, 0.0
      %v3170 = vmax.f32 %v3164, 0.0
      %v3171 = vmax.f32 %v3165, 0.0
      %v3172 = vmax.f32 %v3166, 0.0
      %v3173 = vmax.f32 %v3167, 0.0
      %v3174 = vmax.f32 %v3168, 0.0
      %3175 = vst.msk [vmem:[#allocation6] sm:$0xff] %vm1897, %v3169
      %3176 = vst.msk [vmem:[#allocation6 + $0x8] sm:$0xff] %vm1897, %v3170
      %3177 = vst.msk [vmem:[#allocation6 + $0x10] sm:$0xff] %vm1897, %v3171
      %3178 = vst.msk [vmem:[#allocation6 + $0x18] sm:$0xff] %vm1897, %v3172
      %3179 = vst.msk [vmem:[#allocation6 + $0x20] sm:$0xff] %vm1897, %v3173
      %3180 = vst.msk [vmem:[#allocation6 + $0x28] sm:$0x3] %vm2263, %v3174
      %v3181 = vld [vmem:[#allocation6] ss:$3 sm:$0xff]
      %s3182 = scalar_lea.vmem [#allocation6], 24
      %v3183 = vld [vmem:[%s3182] ss:$3 sm:$0x3f]
      %s3184 = scalar_lea.vmem [#allocation6], 1
      %v3185 = vld [vmem:[%s3184] ss:$3 sm:$0xff]
      %s3186 = scalar_lea.vmem [#allocation6], 25
      %v3187 = vld [vmem:[%s3186] ss:$3 sm:$0x3f]
      %v3188 = vmax.f32 %v3181, %v3185
      %v3189 = vmax.f32 %v3183, %v3187
      %s3190 = scalar_lea.vmem [#allocation6], 2
      %v3191 = vld [vmem:[%s3190] ss:$3 sm:$0xff]
      %s3192 = scalar_lea.vmem [#allocation6], 26
      %v3193 = vld [vmem:[%s3192] ss:$3 sm:$0x3f]
      %v3194 = vmax.f32 %v3188, %v3191
      %v3195 = vmax.f32 %v3189, %v3193
      %v3196 = vpack.c.bf16 %v3195, %v3194
      %v3198 = vunpack.c.l.b16 %v3196
      %v3199 = vunpack.c.h.b16 %v3196
      %v3200 = vpack.c.b16 %v3198, %v3198
      %v3201 = vpack.c.b16 %v3199, %v3199
      %3204 = vst.msk [vmem:[#allocation7] sm:$0xf] %vm1830, %v3200
      %vm3205 = vcmask 518144
      %3206 = vst.msk [vmem:[#allocation7 + $0x4] sm:$0x7] %vm3205, %v3201
      %v3207 = vld [vmem:[#allocation7] sm:$0xf]
      %v3208 = vld [vmem:[#allocation7 + $0x4] sm:$0x3]
      %v3209 = vld [vmem:[#allocation7 + $0x4] sm:$0x7]
      %v3212 = vunpack.c.l.b16 %v3207
      %v3213 = vunpack.c.l.b16 %v3208
      %v3214 = vpack.c.b16 %v3213, %v3212
      %v3216 = vunpack.c.l.b16 %v3209
      %v3217 = vpack.c.b16 %v3216, %v3212
      %v3219 = vshrl.u32 %v3217, 16
      %v3221 = vshll.u32 %v3217, 16
      %v3223 = vrot.slane %v3221, 1
      %v3224 = vor.u32 %v3219, %v3223
      %3225 = vrot.lane.b32.xlu0 %v3224, 64
      %v3226 = vpop.permute.xlu0 %3225
      %v3229 = vsel %vm1897, %v3214, %v3226
      %v3231 = vunpack.c.l.b16 %v3229
      %v3232 = vunpack.c.h.b16 %v3229
      %v3233 = vpack.c.b16 %v3231, %v3231
      %v3234 = vpack.c.b16 %v3232, %v3232
      %3237 = vst [vmem:[#allocation3] sm:$0xf] %v3233
      %3238 = vst [vmem:[#allocation3 + $0x8] sm:$0x3] %v3234
      %v3239 = vld [vmem:[#allocation7] sm:$0xe]
      %v3240 = vld [vmem:[#allocation7 + $0x4] sm:$0x7]
      %v3243 = vrot.slane %v3239, 5
      %v3244 = vrot.slane %v3243, 4
      %v3245 = vrot.slane %v3240, 5
      %v3246 = vsel %vm542, %v3244, %v3245
      %v3247 = vrot.slane %v3245, 4
      %3250 = vst.msk [vmem:[#allocation3 + $0x4] sm:$0xf] %vm1830, %v3246
      %3251 = vst.msk [vmem:[#allocation3 + $0xc] sm:$0x3] %vm2263, %v3247
      %v3252 = vld [vmem:[#allocation3] sm:$0xff]
      %v3253 = vld [vmem:[#allocation3 + $0x8] sm:$0x33]
      %v3254 = vld [vmem:[%s5] sm:$0xf]
      %v3255 = vld [vmem:[%s5 + $0x4] sm:$0xf]
      %v3256 = vld [vmem:[%s5 + $0x8] sm:$0xf]
      %v3257 = vld [vmem:[%s5 + $0xc] sm:$0xf]
      %v3258 = vld [vmem:[%s5 + $0x10] sm:$0xf]
      %v3259 = vld [vmem:[%s5 + $0x14] sm:$0xf]
      %v3260 = vld [vmem:[%s5 + $0x18] sm:$0xf]
      %v3261 = vld [vmem:[%s5 + $0x1c] sm:$0xf]
      %v3262 = vld [vmem:[%s5 + $0x20] sm:$0xf]
      %v3263 = vld [vmem:[%s5 + $0x24] sm:$0xf]
      %v3264 = vld [vmem:[%s5 + $0x28] sm:$0xf]
      %v3265 = vld [vmem:[%s5 + $0x2c] sm:$0xf]
      %v3266 = vld [vmem:[%s5 + $0x30] sm:$0xf]
      %v3267 = vld [vmem:[%s5 + $0x34] sm:$0xf]
      %v3268 = vld [vmem:[%s5 + $0x38] sm:$0xf]
      %v3269 = vld [vmem:[%s5 + $0x3c] sm:$0xf]
      %v3270 = vld [vmem:[%s5 + $0x40] sm:$0xf]
      %v3271 = vld [vmem:[%s5 + $0x44] sm:$0xf]
      %v3272 = vld [vmem:[%s5 + $0x48] sm:$0xf]
      %v3273 = vld [vmem:[%s5 + $0x4c] sm:$0xf]
      %v3274 = vld [vmem:[%s5 + $0x50] sm:$0xf]
      %v3275 = vld [vmem:[%s5 + $0x54] sm:$0xf]
      %v3276 = vld [vmem:[%s5 + $0x58] sm:$0xf]
      %v3277 = vld [vmem:[%s5 + $0x5c] sm:$0xf]
      %v3278 = vld [vmem:[%s6] sm:$0x1]
      %v3280 = vlaneseq
      %v3281 = vshrl.u32 %v3280, 7
      %v3282 = vsub.s32 0, %v3281
      %v3283 = vrot.slane %v3278, %v3282
      %v3287 = vunpack.c.l.b16 %v3252
      %v3288 = vunpack.c.h.b16 %v3252
      %v3289 = vunpack.c.l.b16 %v3253
      %v3290 = vunpack.c.h.b16 %v3253
      %v3291 = vpack.c.b16 %v3289, %v3287
      %v3292 = vpack.c.b16 %v3290, %v3288
      %v3318 = vunpack.c.l.b16 %v3254
      %v3319 = vunpack.c.l.b16 %v3255
      %v3320 = vunpack.c.l.b16 %v3256
      %v3321 = vunpack.c.l.b16 %v3257
      %v3322 = vunpack.c.l.b16 %v3258
      %v3323 = vunpack.c.l.b16 %v3259
      %v3324 = vunpack.c.l.b16 %v3260
      %v3325 = vunpack.c.l.b16 %v3261
      %v3326 = vunpack.c.l.b16 %v3262
      %v3327 = vunpack.c.l.b16 %v3263
      %v3328 = vunpack.c.l.b16 %v3264
      %v3329 = vunpack.c.l.b16 %v3265
      %v3330 = vunpack.c.l.b16 %v3266
      %v3331 = vunpack.c.l.b16 %v3267
      %v3332 = vunpack.c.l.b16 %v3268
      %v3333 = vunpack.c.l.b16 %v3269
      %v3334 = vunpack.c.l.b16 %v3270
      %v3335 = vunpack.c.l.b16 %v3271
      %v3336 = vunpack.c.l.b16 %v3272
      %v3337 = vunpack.c.l.b16 %v3273
      %v3338 = vunpack.c.l.b16 %v3274
      %v3339 = vunpack.c.l.b16 %v3275
      %v3340 = vunpack.c.l.b16 %v3276
      %v3341 = vunpack.c.l.b16 %v3277
      %v3342 = vpack.c.b16 %v3319, %v3318
      %v3343 = vpack.c.b16 %v3321, %v3320
      %v3344 = vpack.c.b16 %v3323, %v3322
      %v3345 = vpack.c.b16 %v3325, %v3324
      %v3346 = vpack.c.b16 %v3327, %v3326
      %v3347 = vpack.c.b16 %v3329, %v3328
      %v3348 = vpack.c.b16 %v3331, %v3330
      %v3349 = vpack.c.b16 %v3333, %v3332
      %v3350 = vpack.c.b16 %v3335, %v3334
      %v3351 = vpack.c.b16 %v3337, %v3336
      %v3352 = vpack.c.b16 %v3339, %v3338
      %v3353 = vpack.c.b16 %v3341, %v3340
      %v3367 = vsel %vm1897, %v3292, 0
      %3369 = vmatprep.subr.bf16.mxu0 0
      %3370 = vmatpush1.bf16.msra.mxu0 %v3342
      %3371 = vmatprep.subr.bf16.mxu0 0
      %3372 = vmatpush1.bf16.msra.mxu0 %v3343
      %3373 = vmatprep.subr.bf16.mxu0 0
      %3374 = vmatpush1.bf16.msra.mxu0 %v3344
      %3375 = vmatprep.subr.bf16.mxu0 0
      %3376 = vmatpush1.bf16.msra.mxu0 %v3345
      %3377 = vmatprep.subr.bf16.mxu0 0
      %3378 = vmatpush1.bf16.msra.mxu0 %v3346
      %3379 = vmatprep.subr.bf16.mxu0 0
      %3380 = vmatpush1.bf16.msra.mxu0 %v3347
      %3381 = vmatprep.subr.bf16.mxu0 0
      %3382 = vmatpush1.bf16.msra.mxu0 %v3348
      %3383 = vmatprep.subr.bf16.mxu0 0
      %3384 = vmatpush1.bf16.msra.mxu0 %v3349
      %3385 = vmatprep.subr.bf16.mxu0 0
      %3386 = vmatpush1.bf16.msra.mxu0 %v3350
      %3387 = vmatprep.subr.bf16.mxu0 0
      %3388 = vmatpush1.bf16.msra.mxu0 %v3351
      %3389 = vmatprep.subr.bf16.mxu0 0
      %3390 = vmatpush1.bf16.msra.mxu0 %v3352
      %3391 = vmatprep.subr.bf16.mxu0 0
      %3392 = vmatpush1.bf16.msra.mxu0 %v3353
      %3393 = vmatprep.subr.bf16.mxu0 0
      %3394 = vmatpush1.bf16.msra.mxu0 0
      %3395 = vmatprep.subr.bf16.mxu0 0
      %3396 = vmatpush1.bf16.msra.mxu0 0
      %3397 = vmatprep.subr.bf16.mxu0 0
      %3398 = vmatpush1.bf16.msra.mxu0 0
      %3399 = vmatprep.subr.bf16.mxu0 0
      %3400 = vmatpush1.bf16.msra.mxu0 0
      %3401 = vmatprep.mubr.bf16.mxu0 %v3367
      %3402 = vmatmul.mubr.bf16.gmra.mrb[0].mxu0 %v3291
      %v3403 = vpop.f32.mrb[0].mxu0
      %v3404 = vadd.f32 %v3283, %v3403
      %v3405 = vpop.f32.mrb[0].mxu0
      %v3406 = vpop.f32.mrb[0].mxu0
      %v3407 = vadd.f32 %v3283, %v3406
      %v3408 = vpop.f32.mrb[0].mxu0
      %3409 = vdwg.mxu0
      %v3410 = vmax.f32 %v3404, 0.0
      %v3411 = vmax.f32 %v3407, 0.0
      %v3412 = vpack.c.bf16 %v3411, %v3410
      %v3414 = vunpack.c.l.b16 %v3412
      %v3415 = vunpack.c.h.b16 %v3412
      %v3416 = vpack.c.b16 %v3414, %v3414
      %v3417 = vpack.c.b16 %v3415, %v3415
      %vm3420 = vcmask 257024
      %3421 = vst.msk [vmem:[#allocation8] sm:$0xf] %vm3420, %v3416
      %vm3422 = vcmask 254976
      %3423 = vst.msk [vmem:[#allocation8 + $0x4] sm:$0x3] %vm3422, %v3417
      %v3424 = vld [vmem:[#allocation8] sm:$0xf]
      %v3425 = vld [vmem:[#allocation8 + $0x4] sm:$0x1]
      %v3426 = vld [vmem:[#allocation8 + $0x4] sm:$0x3]
      %v3427 = vld [vmem:[#allocation8] sm:$0xe]
      %v3430 = vunpack.c.l.b16 %v3424
      %v3431 = vunpack.c.l.b16 %v3425
      %v3432 = vpack.c.b16 %v3431, %v3430
      %v3434 = vunpack.c.l.b16 %v3426
      %v3435 = vpack.c.b16 %v3434, %v3430
      %v3437 = vshrl.u32 %v3435, 16
      %v3439 = vshll.u32 %v3435, 16
      %v3441 = vrot.slane %v3439, 1
      %v3442 = vor.u32 %v3437, %v3441
      %3443 = vrot.lane.b32.xlu0 %v3442, 32
      %v3444 = vpop.permute.xlu0 %3443
      %v3446 = vunpack.c.l.b16 %v3427
      %v3447 = vpack.c.b16 %v3434, %v3446
      %v3448 = vrot.slane %v3447, 1
      %3449 = vrot.lane.b32.xlu0 %v3448, 64
      %v3450 = vpop.permute.xlu0 %3449
      %vm3451 = vcmask 261120
      %v3454 = vsel %vm3451, %v3432, %v3444
      %v3456 = vsel %vm1897, %v3454, %v3450
      %v3458 = vunpack.c.l.b16 %v3456
      %v3459 = vunpack.c.h.b16 %v3456
      %v3460 = vpack.c.b16 %v3458, %v3458
      %v3461 = vpack.c.b16 %v3459, %v3459
      %vm3464 = vcmask 781312
      %3465 = vst.msk [vmem:[#allocation3] sm:$0xf] %vm3464, %v3460
      %vm3466 = vcmask 778240
      %3467 = vst.msk [vmem:[#allocation3 + $0x8] sm:$0x1] %vm3466, %v3461
      %v3468 = vld [vmem:[#allocation3] sm:$0xf]
      %v3469 = vld [vmem:[#allocation3 + $0x8] sm:$0x1]
      %v3470 = vld [vmem:[%s7] sm:$0xf]
      %v3471 = vld [vmem:[%s7 + $0x4] sm:$0xf]
      %v3472 = vld [vmem:[%s7 + $0x8] sm:$0xf]
      %v3473 = vld [vmem:[%s7 + $0xc] sm:$0xf]
      %v3474 = vld [vmem:[%s7 + $0x10] sm:$0xf]
      %v3475 = vld [vmem:[%s7 + $0x14] sm:$0xf]
      %v3476 = vld [vmem:[%s7 + $0x18] sm:$0xf]
      %v3477 = vld [vmem:[%s7 + $0x1c] sm:$0xf]
      %v3478 = vld [vmem:[%s7 + $0x20] sm:$0xf]
      %v3479 = vld [vmem:[%s7 + $0x24] sm:$0xf]
      %v3480 = vld [vmem:[%s7 + $0x28] sm:$0xf]
      %v3481 = vld [vmem:[%s7 + $0x2c] sm:$0xf]
      %v3482 = vld [vmem:[%s8] sm:$0x1]
      %v3484 = vlaneseq
      %v3485 = vshrl.u32 %v3484, 7
      %v3486 = vsub.s32 0, %v3485
      %v3487 = vrot.slane %v3482, %v3486
      %v3491 = vunpack.c.l.b16 %v3468
      %v3492 = vunpack.c.l.b16 %v3469
      %v3493 = vpack.c.b16 %v3492, %v3491
      %v3506 = vunpack.c.l.b16 %v3470
      %v3507 = vunpack.c.l.b16 %v3471
      %v3508 = vunpack.c.l.b16 %v3472
      %v3509 = vunpack.c.l.b16 %v3473
      %v3510 = vunpack.c.l.b16 %v3474
      %v3511 = vunpack.c.l.b16 %v3475
      %v3512 = vunpack.c.l.b16 %v3476
      %v3513 = vunpack.c.l.b16 %v3477
      %v3514 = vunpack.c.l.b16 %v3478
      %v3515 = vunpack.c.l.b16 %v3479
      %v3516 = vunpack.c.l.b16 %v3480
      %v3517 = vunpack.c.l.b16 %v3481
      %v3518 = vpack.c.b16 %v3507, %v3506
      %v3519 = vpack.c.b16 %v3509, %v3508
      %v3520 = vpack.c.b16 %v3511, %v3510
      %v3521 = vpack.c.b16 %v3513, %v3512
      %v3522 = vpack.c.b16 %v3515, %v3514
      %v3523 = vpack.c.b16 %v3517, %v3516
      %vm3530 = vcmask 785408
      %v3532 = vsel %vm3530, %v3493, 0
      %3534 = vmatprep.subr.bf16.mxu0 0
      %3535 = vmatpush1.bf16.msra.mxu0 %v3518
      %3536 = vmatprep.subr.bf16.mxu0 0
      %3537 = vmatpush1.bf16.msra.mxu0 %v3519
      %3538 = vmatprep.subr.bf16.mxu0 0
      %3539 = vmatpush1.bf16.msra.mxu0 %v3520
      %3540 = vmatprep.subr.bf16.mxu0 0
      %3541 = vmatpush1.bf16.msra.mxu0 %v3521
      %3542 = vmatprep.subr.bf16.mxu0 0
      %3543 = vmatpush1.bf16.msra.mxu0 %v3522
      %3544 = vmatprep.subr.bf16.mxu0 0
      %3545 = vmatpush1.bf16.msra.mxu0 %v3523
      %3546 = vmatprep.subr.bf16.mxu0 0
      %3547 = vmatpush1.bf16.msra.mxu0 0
      %3548 = vmatprep.subr.bf16.mxu0 0
      %3549 = vmatpush1.bf16.msra.mxu0 0
      %3550 = vmatprep.subr.bf16.mxu0 0
      %3551 = vmatpush1.bf16.msra.mxu0 0
      %3552 = vmatprep.subr.bf16.mxu0 0
      %3553 = vmatpush1.bf16.msra.mxu0 0
      %3554 = vmatprep.subr.bf16.mxu0 0
      %3555 = vmatpush1.bf16.msra.mxu0 0
      %3556 = vmatprep.subr.bf16.mxu0 0
      %3557 = vmatpush1.bf16.msra.mxu0 0
      %3558 = vmatprep.subr.bf16.mxu0 0
      %3559 = vmatpush1.bf16.msra.mxu0 0
      %3560 = vmatprep.subr.bf16.mxu0 0
      %3561 = vmatpush1.bf16.msra.mxu0 0
      %3562 = vmatprep.subr.bf16.mxu0 0
      %3563 = vmatpush1.bf16.msra.mxu0 0
      %3564 = vmatprep.subr.bf16.mxu0 0
      %3565 = vmatpush1.bf16.msra.mxu0 0
      %3566 = vmatprep.mubr.bf16.mxu0 0
      %3567 = vmatmul.mubr.bf16.gmra.mrb[0].mxu0 %v3532
      %v3568 = vpop.f32.mrb[0].mxu0
      %v3569 = vadd.f32 %v3487, %v3568
      %v3570 = vpop.f32.mrb[0].mxu0
      %v3571 = vpop.f32.mrb[0].mxu0
      %v3572 = vadd.f32 %v3487, %v3571
      %v3573 = vpop.f32.mrb[0].mxu0
      %3574 = vdwg.mxu0
      %v3575 = vmax.f32 %v3569, 0.0
      %v3576 = vmax.f32 %v3572, 0.0
      %3577 = vst.msk [vmem:[#allocation9] sm:$0xff] %vm3451, %v3575
      %3578 = vst.msk [vmem:[#allocation9 + $0x8] sm:$0x3] %vm3422, %v3576
      %v3579 = vld [vmem:[#allocation9] ss:$3 sm:$0x7]
      %s3580 = scalar_lea.vmem [#allocation9], 1
      %v3581 = vld [vmem:[%s3580] ss:$3 sm:$0x7]
      %v3582 = vmax.f32 %v3579, %v3581
      %s3583 = scalar_lea.vmem [#allocation9], 2
      %v3584 = vld [vmem:[%s3583] ss:$3 sm:$0x7]
      %v3585 = vmax.f32 %v3582, %v3584
      %v3586 = vpack.c.bf16 %v3585, %v3585
      %vm3587 = vcmask 254976
      %vm3588 = vmand %vm3587, %vm828
      %v3589 = vld [vmem:[%s330] sm:$0x3]
      %v3590 = vsel %vm3588, %v3586, %v3589
      %3591 = vst [vmem:[%s330] sm:$0x3] %v3590
      %p3592 = scmp.lt.s32.totalorder %s20, 1
      %s3593 = scalar_select %p3592, %s20, 1
      %s3594 = smul.addr %s3593, 2
      %s3595 = scalar_lea.vmem %s9, %s3594
      // Predicated region
      $region57: #{cnn_forward.2} parent=55 // pred_check
        %p3596 = pneg %p232
      $region58: #{cnn_forward.2} parent=55 // pred_check_branch
        %3598 = sbr.rel (%p3596) target = $region60
      $region59: #{cnn_forward.2} parent=55 // pred_region
        _
      $region60: #{cnn_forward.2} parent=55 // pred_fallthru
        _
    $region56: #{cnn_forward.2} parent=5 // pred_fallthru
      _
    %p3599 = scmp.le.s32.totalorder 2, %s15
    // Predicated region
    $region61: #{cnn_forward.2} parent=5 // pred_check
      %p3600 = pneg %p3599
    $region62: #{cnn_forward.2} parent=5 // pred_check_branch
      %3602 = sbr.rel (%p3600) target = $region64
    $region63: #{cnn_forward.2} parent=5 // pred_region
      %s3603 = ssub.s32 %s15, 2
      // Predicated region
      $region65: #{cnn_forward.2} parent=63 // pred_check
        %p3604 = pneg %p238
      $region66: #{cnn_forward.2} parent=63 // pred_check_branch
        %3606 = sbr.rel (%p3604) target = $region68
      $region67: #{cnn_forward.2} parent=63 // pred_region
        %p3607 = scmp.lt.s32.totalorder %s21, 1
        %s3608 = scalar_select %p3607, %s21, 1
        %s3609 = smul.addr %s3608, 2
        %s3610 = scalar_lea.vmem %s9, %s3609
      $region68: #{cnn_forward.2} parent=63 // pred_fallthru
        _
    $region64: #{cnn_forward.2} parent=5 // pred_fallthru
      _
  $region6: #{cnn_forward.2} parent=0 // loop_footer
    %s19 = sadd.s32 1, %s15
  $region7: #{cnn_forward.2} parent=0 // loop_footer_branch
    %14 = sbr.rel target = $region3
  $region8: #{cnn_forward.2} parent=0 // loop_exit
    _

</llo_original>
